<compile_context>
chip_gen: v5e
topology: v5e:2x2
jax: 0.10.0
libtpu: 0.0.40
codegen_flags: <defaults>
</compile_context>

<pallas_src>
import functools

import numpy as np
import jax
import jax.numpy as jnp
from jax.experimental import pallas as pl
from jax.experimental.pallas import tpu as pltpu

EPS = 1e-5


# ---------------------------------------------------------------------------
# helpers (plain JAX / host-side glue)
# ---------------------------------------------------------------------------
def fold_bn(gamma, beta, mean, var):
    scale = gamma / jnp.sqrt(var + EPS)
    shift = beta - mean * scale
    return scale, shift


def expand_grouped(w_pt, groups):
    """PyTorch grouped conv weight (cout, cin/groups, 3, 3) -> dense per-tap
    (9, cin, cout) block-diagonal weights.  Used only by the pure-JAX reference."""
    w_pt = np.asarray(w_pt)
    cout, gin, kh, kw = w_pt.shape
    cin = gin * groups
    gout = cout // groups
    dense = np.zeros((kh * kw, cin, cout), np.float32)
    for co in range(cout):
        g = co // gout
        for t in range(kh * kw):
            dense[t, g * gin:(g + 1) * gin, co] = w_pt[co, :, t // kw, t % kw]
    return jnp.asarray(dense)


def _pack_factor(M, cin, cout):
    """Row-packing factor k: view (M,cin)x(cin,cout) as (M/k,k*cin)x(k*cin,k*cout)
    with a block-diagonal weight so the output lane dim (k*cout) is a multiple of
    128 (unmasked vector stores); the reshapes in the wrapper are free (row-major)."""
    for k in (1, 2, 4, 8):
        if M % k == 0 and (k * cout) % 128 == 0 and (k * cin) % 128 == 0:
            return k
    for k in (1, 2, 4, 8):
        if M % k == 0 and (k * cout) % 128 == 0:
            return k
    return 1


def _block_diag(w, k):
    if k == 1:
        return w
    cin, cout = w.shape
    eye = jnp.eye(k, dtype=w.dtype)
    return (eye[:, None, :, None] * w[None, :, None, :]).reshape(k * cin, k * cout)


def _tile_vec(v, k):
    return jnp.tile(v.reshape(1, -1), (1, k))


def _row_tile(m):
    """Largest row tile <= 512 dividing m, preferring >= 2 grid steps so both
    TensorCores get work on v7x; whole array as a last resort."""
    for cand in (512, 256, 128, 64, 32, 16, 8):
        if m % cand == 0 and m // cand >= 2:
            return cand
    for cand in (512, 256, 128, 64, 32, 16, 8):
        if m % cand == 0:
            return cand
    return m


# ---------------------------------------------------------------------------
# Kernel 1: 1x1 conv (lane-dense packed matmul) + folded BN (+ ReLU)
# ---------------------------------------------------------------------------
def _conv_bn_kernel(x_ref, w_ref, s_ref, b_ref, o_ref, *, relu):
    y = jnp.dot(x_ref[...], w_ref[...], preferred_element_type=jnp.float32)
    y = y * s_ref[...] + b_ref[...]
    if relu:
        y = jnp.maximum(y, 0.0)
    o_ref[...] = y.astype(o_ref.dtype)


def conv1x1_bn(x_flat, w, scale, shift, *, relu):
    M, cin = x_flat.shape
    cout = w.shape[1]
    k = _pack_factor(M, cin, cout)
    me, ke, ne = M // k, cin * k, cout * k
    xk = x_flat.reshape(me, ke)                 # free row-major reshape
    wk = _block_diag(w, k)
    sk_ = _tile_vec(scale, k)
    bk = _tile_vec(shift, k)
    tm = _row_tile(me)
    # TODO(synk): also tile the N/K dims once channel counts grow past a few
    #             hundred; not needed at these sizes (and re-derive for 64 MiB
    #             VMEM on v7x).
    out = pl.pallas_call(
        functools.partial(_conv_bn_kernel, relu=relu),
        out_shape=jax.ShapeDtypeStruct((me, ne), x_flat.dtype),
        grid=(me // tm,),
        in_specs=[
            pl.BlockSpec((tm, ke), lambda i: (i, 0)),
            pl.BlockSpec((ke, ne), lambda i: (0, 0)),
            pl.BlockSpec((1, ne), lambda i: (0, 0)),
            pl.BlockSpec((1, ne), lambda i: (0, 0)),
        ],
        out_specs=pl.BlockSpec((tm, ne), lambda i: (i, 0)),
        compiler_params=pltpu.CompilerParams(dimension_semantics=("parallel",)),
    )(xk, wk, sk_, bk)
    return out.reshape(M, cout)


# ---------------------------------------------------------------------------
# Kernel 2: fused SKModule (both depthwise branches + attention) + bn2 + ReLU
# ---------------------------------------------------------------------------
def _sk_fused_kernel(o1_ref, taps_ref, bnv_ref, wt_ref, ts_ref, tb_ref,
                     wa1_ref, ba1_ref, wa2_ref, ba2_ref, out_ref, o1p_ref,
                     *, H, W, C, pad):
    WC = W * C

    # Build the shared padded halo (pad=2, covers both dilations) in VMEM.
    # Re-zeroed every grid step so the halo is always valid on every core
    # (megacore-safe); the zero + interior copy is ~80 KB of VPU stores.
    o1p_ref[...] = jnp.zeros_like(o1p_ref)
    o1p_ref[pad:pad + H, pad * C:pad * C + WC] = o1_ref[0]

    def branch(tap0, bn0, dil):
        # branch padding equals its dilation; shared input halo is `pad`
        base = pad - dil
        acc = None
        for kh in range(3):
            r0 = base + kh * dil
            for kw in range(3):
                c0 = (base + kw * dil) * C
                xs = o1p_ref[r0:r0 + H, c0:c0 + WC]                     # (H, W*C)
                t = tap0 + kh * 3 + kw
                term = xs * taps_ref[t:t + 1, :]                        # depthwise MAC (VPU)
                acc = term if acc is None else acc + term
        scale = bnv_ref[bn0:bn0 + 1, :]
        shift = bnv_ref[bn0 + 1:bn0 + 2, :]
        return jnp.maximum(acc * scale + shift, 0.0)                    # BN + ReLU

    br1 = branch(0, 0, 1)        # 3x3, dilation 1, padding 1
    br2 = branch(9, 2, 2)        # 3x3, dilation 2, padding 2

    # global average pool over (H, W) -> (1, C)
    col = jnp.sum(br1 + br2, axis=0, keepdims=True)                     # (1, W*C)
    pooled = col[:, 0:C]
    for j in range(1, W):
        pooled = pooled + col[:, j * C:(j + 1) * C]
    pooled = pooled * (1.0 / (H * W))

    # transform (Linear + folded BN1d + ReLU) and the two attention heads
    z = jnp.dot(pooled, wt_ref[...], preferred_element_type=jnp.float32)
    z = jnp.maximum(z * ts_ref[...] + tb_ref[...], 0.0)                 # (1, d)
    l1 = jnp.dot(z, wa1_ref[...], preferred_element_type=jnp.float32) + ba1_ref[...]
    l2 = jnp.dot(z, wa2_ref[...], preferred_element_type=jnp.float32) + ba2_ref[...]

    # 2-way softmax (EUP reciprocal)
    m = jnp.maximum(l1, l2)
    e1 = jnp.exp(l1 - m)
    e2 = jnp.exp(l2 - m)
    inv = pl.reciprocal(e1 + e2, approx=True)
    a1 = jnp.concatenate([e1 * inv] * W, axis=1)                        # (1, W*C)
    a2 = jnp.concatenate([e2 * inv] * W, axis=1)

    # weighted branch sum, then the outer bn2 + ReLU; lane-dense (H, W*C) store
    y = br1 * a1 + br2 * a2
    y = jnp.maximum(y * bnv_ref[4:5, :] + bnv_ref[5:6, :], 0.0)
    out_ref[0] = y.astype(out_ref.dtype)


def sk_module_bn2_relu(o1, w1_taps, sb1, bb1, w2_taps, sb2, bb2,
                       t_w, t_scale, t_bias, a1_w, a1_b, a2_w, a2_b, s2, b2):
    B, H, W, C = o1.shape
    d = t_w.shape[1]
    WC = W * C
    pad = 2                                      # shared halo (max branch padding)
    Hp, Wp = H + 2 * pad, W + 2 * pad

    # o1 goes in unpadded & lane-dense; the halo is built in-kernel (VMEM only).
    o1r = o1.reshape(B, H, WC)

    tile_c = lambda v: jnp.tile(v.reshape(1, C), (1, W))                # (C,) -> (1, W*C)
    taps = jnp.concatenate([jnp.tile(w1_taps, (1, W)),
                            jnp.tile(w2_taps, (1, W))], axis=0)         # (18, W*C)
    bnv = jnp.concatenate([tile_c(sb1), tile_c(bb1),
                           tile_c(sb2), tile_c(bb2),
                           tile_c(s2), tile_c(b2)], axis=0)             # (6, W*C)

    kern = functools.partial(_sk_fused_kernel, H=H, W=W, C=C, pad=pad)
    out = pl.pallas_call(
        kern,
        out_shape=jax.ShapeDtypeStruct((B, H, WC), o1.dtype),
        grid=(B,),
        in_specs=[
            pl.BlockSpec((1, H, WC), lambda b: (b, 0, 0)),
            pl.BlockSpec((18, WC), lambda b: (0, 0)),
            pl.BlockSpec((6, WC), lambda b: (0, 0)),
            pl.BlockSpec((C, d), lambda b: (0, 0)),
            pl.BlockSpec((1, d), lambda b: (0, 0)),
            pl.BlockSpec((1, d), lambda b: (0, 0)),
            pl.BlockSpec((d, C), lambda b: (0, 0)),
            pl.BlockSpec((1, C), lambda b: (0, 0)),
            pl.BlockSpec((d, C), lambda b: (0, 0)),
            pl.BlockSpec((1, C), lambda b: (0, 0)),
        ],
        out_specs=pl.BlockSpec((1, H, WC), lambda b: (b, 0, 0)),
        scratch_shapes=[pltpu.VMEM((Hp, Wp * C), jnp.float32)],
        compiler_params=pltpu.CompilerParams(dimension_semantics=("parallel",)),
    )(o1r, taps, bnv, t_w, t_scale.reshape(1, d), t_bias.reshape(1, d),
      a1_w, a1_b.reshape(1, C), a2_w, a2_b.reshape(1, C))
    # (B, H, W*C) is row-major-identical to (B, H, W, C)
    return out


# ---------------------------------------------------------------------------
# Kernel 3: conv3 + bn3 + ReLU, fused with the skip path + residual add
# ---------------------------------------------------------------------------
def _conv_bn_skipproj_kernel(x2_ref, w3_ref, s3_ref, b3_ref,
                             xs_ref, ws_ref, ss_ref, bs_ref, o_ref):
    y = jnp.dot(x2_ref[...], w3_ref[...], preferred_element_type=jnp.float32)
    y = jnp.maximum(y * s3_ref[...] + b3_ref[...], 0.0)
    r = jnp.dot(xs_ref[...], ws_ref[...], preferred_element_type=jnp.float32)
    r = r * ss_ref[...] + bs_ref[...]
    o_ref[...] = (y + r).astype(o_ref.dtype)


def _conv_bn_skipid_kernel(x2_ref, w3_ref, s3_ref, b3_ref, r_ref, o_ref):
    y = jnp.dot(x2_ref[...], w3_ref[...], preferred_element_type=jnp.float32)
    y = jnp.maximum(y * s3_ref[...] + b3_ref[...], 0.0)
    o_ref[...] = (y + r_ref[...].astype(jnp.float32)).astype(o_ref.dtype)


def conv3_bn_skip(o2_flat, w3, s3, b3, x_flat,
                  skip_w=None, skip_scale=None, skip_shift=None):
    M, rch = o2_flat.shape
    cout = w3.shape[1]
    k = _pack_factor(M, rch, cout)
    me, ne = M // k, cout * k
    o2k = o2_flat.reshape(me, rch * k)
    w3k = _block_diag(w3, k)
    s3k = _tile_vec(s3, k)
    b3k = _tile_vec(b3, k)
    tm = _row_tile(me)
    cp = pltpu.CompilerParams(dimension_semantics=("parallel",))
    if skip_w is not None:
        cin = x_flat.shape[1]
        xk = x_flat.reshape(me, cin * k)
        wsk = _block_diag(skip_w, k)
        ssk = _tile_vec(skip_scale, k)
        bsk = _tile_vec(skip_shift, k)
        out = pl.pallas_call(
            _conv_bn_skipproj_kernel,
            out_shape=jax.ShapeDtypeStruct((me, ne), o2_flat.dtype),
            grid=(me // tm,),
            in_specs=[
                pl.BlockSpec((tm, rch * k), lambda i: (i, 0)),
                pl.BlockSpec((rch * k, ne), lambda i: (0, 0)),
                pl.BlockSpec((1, ne), lambda i: (0, 0)),
                pl.BlockSpec((1, ne), lambda i: (0, 0)),
                pl.BlockSpec((tm, cin * k), lambda i: (i, 0)),
                pl.BlockSpec((cin * k, ne), lambda i: (0, 0)),
                pl.BlockSpec((1, ne), lambda i: (0, 0)),
                pl.BlockSpec((1, ne), lambda i: (0, 0)),
            ],
            out_specs=pl.BlockSpec((tm, ne), lambda i: (i, 0)),
            compiler_params=cp,
        )(o2k, w3k, s3k, b3k, xk, wsk, ssk, bsk)
    else:
        rk = x_flat.reshape(me, ne)               # identity skip (cin == cout)
        out = pl.pallas_call(
            _conv_bn_skipid_kernel,
            out_shape=jax.ShapeDtypeStruct((me, ne), o2_flat.dtype),
            grid=(me // tm,),
            in_specs=[
                pl.BlockSpec((tm, rch * k), lambda i: (i, 0)),
                pl.BlockSpec((rch * k, ne), lambda i: (0, 0)),
                pl.BlockSpec((1, ne), lambda i: (0, 0)),
                pl.BlockSpec((1, ne), lambda i: (0, 0)),
                pl.BlockSpec((tm, ne), lambda i: (i, 0)),
            ],
            out_specs=pl.BlockSpec((tm, ne), lambda i: (i, 0)),
            compiler_params=cp,
        )(o2k, w3k, s3k, b3k, rk)
    return out.reshape(M, cout)


# ---------------------------------------------------------------------------
# Full SKBottleneck forward
# ---------------------------------------------------------------------------
def sk_bottleneck_forward(x, p):
    B, H, W, in_c = x.shape
    r = p["conv1_w"].shape[1]
    out_c = p["conv3_w"].shape[1]
    M = B * H * W
    x_flat = x.reshape(M, in_c)

    # conv1 + bn1 + relu
    s1, b1 = fold_bn(**p["bn1"])
    o1 = conv1x1_bn(x_flat, p["conv1_w"], s1, b1, relu=True).reshape(B, H, W, r)

    # SKModule (both branches + attention) fused with the outer bn2 + relu
    gin = p["branch1_w"].shape[1]
    if gin != 1:
        # TODO(synk): grouped conv with >1 channel per group (r_channel > 32) and
        #             stride > 1 are not implemented in the fused depthwise kernel.
        raise NotImplementedError("fused SK kernel supports depthwise branches only")
    w1_taps = p["branch1_w"][:, 0].reshape(r, 9).T        # (9, r): per-tap diag weights
    w2_taps = p["branch2_w"][:, 0].reshape(r, 9).T
    sb1, bb1 = fold_bn(**p["bn_b1"])
    sb2, bb2 = fold_bn(**p["bn_b2"])
    st, sht = fold_bn(**p["bn_t"])
    t_scale = st
    t_bias = p["t_b"] * st + sht                          # Linear bias folded through BN1d
    s2, b2 = fold_bn(**p["bn2"])
    o2 = sk_module_bn2_relu(o1, w1_taps, sb1, bb1, w2_taps, sb2, bb2,
                            p["t_w"], t_scale, t_bias,
                            p["a1_w"], p["a1_b"], p["a2_w"], p["a2_b"], s2, b2)
    o2_flat = o2.reshape(M, r)

    # conv3 + bn3 + relu, fused with the (projected or identity) skip add
    s3, b3 = fold_bn(**p["bn3"])
    if "skip_w" in p:
        ss, bs = fold_bn(**p["bn_skip"])
        out_flat = conv3_bn_skip(o2_flat, p["conv3_w"], s3, b3, x_flat,
                                 skip_w=p["skip_w"], skip_scale=ss, skip_shift=bs)
    else:
        out_flat = conv3_bn_skip(o2_flat, p["conv3_w"], s3, b3, x_flat)
    return out_flat.reshape(B, H, W, out_c)


# ---------------------------------------------------------------------------
# deterministic synthetic parameters (shapes follow the PyTorch __init__)
# ---------------------------------------------------------------------------
def init_params(key, in_c, out_c):
    r = out_c // 2
    d = max(r // 16, 32)
    assert r % 32 == 0, "grouped conv (groups=32) requires r_channel % 32 == 0"
    keys = iter(jax.random.split(key, 64))

    def nrm(shape, s=0.1):
        return s * jax.random.normal(next(keys), shape, jnp.float32)

    def bn_params(c):
        return dict(gamma=1.0 + nrm((c,)),
                    beta=nrm((c,)),
                    mean=nrm((c,)),
                    var=1.0 + 0.1 * jax.random.uniform(next(keys), (c,), jnp.float32))

    gin = r // 32
    p = {}
    p["conv1_w"] = nrm((in_c, r))                          # pt: (r, in_c, 1, 1)
    p["bn1"] = bn_params(r)
    p["branch1_w"] = nrm((r, gin, 3, 3))                   # pt grouped conv weight
    p["bn_b1"] = bn_params(r)
    p["branch2_w"] = nrm((r, gin, 3, 3))
    p["bn_b2"] = bn_params(r)
    p["t_w"] = nrm((r, d))                                 # pt Linear(r, d).weight.T
    p["t_b"] = nrm((d,))
    p["bn_t"] = bn_params(d)
    p["a1_w"] = nrm((d, r))
    p["a1_b"] = nrm((r,))
    p["a2_w"] = nrm((d, r))
    p["a2_b"] = nrm((r,))
    p["bn2"] = bn_params(r)
    p["conv3_w"] = nrm((r, out_c))                         # pt: (out_c, r, 1, 1)
    p["bn3"] = bn_params(out_c)
    if in_c != out_c:
        p["skip_w"] = nrm((in_c, out_c))
        p["bn_skip"] = bn_params(out_c)
    return p


# ---------------------------------------------------------------------------
# pure-JAX reference (high precision, for correctness check)
# ---------------------------------------------------------------------------
def ref_forward(x, p):
    relu = lambda v: jnp.maximum(v, 0.0)
    hp = jax.lax.Precision.HIGHEST

    def bn(y, bnp):
        s, b = fold_bn(**bnp)
        return y * s + b

    def conv1x1(y, w):
        return jnp.einsum("bhwc,cd->bhwd", y, w, precision=hp)

    def gconv(y, w_pt, dil, pad):
        w_taps = expand_grouped(w_pt, 32)
        B, H, W, C = y.shape
        yp = jnp.pad(y, ((0, 0), (pad, pad), (pad, pad), (0, 0)))
        out = jnp.zeros((B, H, W, C), jnp.float32)
        for kh in range(3):
            for kw in range(3):
                xs = yp[:, kh * dil:kh * dil + H, kw * dil:kw * dil + W, :]
                out = out + jnp.einsum("bhwc,cd->bhwd", xs, w_taps[kh * 3 + kw],
                                       precision=hp)
        return out

    o1 = relu(bn(conv1x1(x, p["conv1_w"]), p["bn1"]))
    b1 = relu(bn(gconv(o1, p["branch1_w"], 1, 1), p["bn_b1"]))
    b2 = relu(bn(gconv(o1, p["branch2_w"], 2, 2), p["bn_b2"]))
    pooled = jnp.mean(b1 + b2, axis=(1, 2))
    st, sht = fold_bn(**p["bn_t"])
    z = relu((jnp.dot(pooled, p["t_w"], precision=hp) + p["t_b"]) * st + sht)
    l1 = jnp.dot(z, p["a1_w"], precision=hp) + p["a1_b"]
    l2 = jnp.dot(z, p["a2_w"], precision=hp) + p["a2_b"]
    a = jax.nn.softmax(jnp.stack([l1, l2], -1), axis=-1)
    y = b1 * a[..., 0][:, None, None, :] + b2 * a[..., 1][:, None, None, :]
    o2 = relu(bn(y, p["bn2"]))
    o3 = relu(bn(conv1x1(o2, p["conv3_w"]), p["bn3"]))
    skip = bn(conv1x1(x, p["skip_w"]), p["bn_skip"]) if "skip_w" in p else x
    return o3 + skip


if __name__ == "__main__":
    key = jax.random.PRNGKey(0)
    kx, kp = jax.random.split(key)

    B, H, W = 2, 16, 16
    in_c, out_c = 32, 64          # r_channel = 32 (groups=32 -> depthwise), d = 32
    # layout: NHWC here; equivalent PyTorch NCHW input shape is (2, 32, 16, 16).
    x = jax.random.normal(kx, (B, H, W, in_c), jnp.float32)
    params = init_params(kp, in_c, out_c)

    fwd = jax.jit(sk_bottleneck_forward)
    out = jax.block_until_ready(fwd(x, params))
    assert out.shape == (B, H, W, out_c)

    ref = jax.block_until_ready(ref_forward(x, params))
    # tolerance covers MXU input rounding + the approximate EUP reciprocal in
    # the 2-way softmax (only approximations vs the HIGHEST-precision reference)
    np.testing.assert_allclose(np.asarray(out), np.asarray(ref), rtol=5e-3, atol=5e-3)

    print("KERNEL_OK")
</pallas_src>

<mosaic_0001>
module attributes {stable_mosaic.version = 11 : i64} {
  func.func @_conv_bn_kernel(%arg0: i32, %arg1: memref<64x128xf32, #tpu.memory_space<vmem>>, %arg2: memref<128x128xf32, #tpu.memory_space<vmem>>, %arg3: memref<1x128xf32, #tpu.memory_space<vmem>>, %arg4: memref<1x128xf32, #tpu.memory_space<vmem>>, %arg5: memref<64x128xf32, #tpu.memory_space<vmem>>) attributes {dimension_semantics = [#tpu.dimension_semantics<parallel>], iteration_bounds = array<i64: 2>, scalar_prefetch = 0 : i64, scratch_operands = 0 : i64, tpu.core_type = #tpu.core_type<tc>, window_params = [{transform_indices = @transform_0, window_bounds = array<i64: 64, 128>}, {pipeline_mode = #tpu.pipeline_mode<synchronous>, transform_indices = @transform_1, window_bounds = array<i64: 128, 128>}, {pipeline_mode = #tpu.pipeline_mode<synchronous>, transform_indices = @transform_2, window_bounds = array<i64: 1, 128>}, {pipeline_mode = #tpu.pipeline_mode<synchronous>, transform_indices = @transform_3, window_bounds = array<i64: 1, 128>}, {transform_indices = @transform_4, window_bounds = array<i64: 64, 128>}]} {
    %c0 = arith.constant 0 : index
    %c0_0 = arith.constant 0 : index
    %0 = vector.load %arg1[%c0, %c0_0] : memref<64x128xf32, #tpu.memory_space<vmem>>, vector<64x128xf32>
    %c0_1 = arith.constant 0 : index
    %c0_2 = arith.constant 0 : index
    %1 = vector.load %arg2[%c0_1, %c0_2] : memref<128x128xf32, #tpu.memory_space<vmem>>, vector<128x128xf32>
    %cst = arith.constant dense<0.000000e+00> : vector<64x128xf32>
    %2 = tpu.matmul %0, %1, %cst {dimension_numbers = #tpu.dot_dimension_numbers<[1], [0], [0], [1], [0, 0, 1, 1], [], []>} : vector<64x128xf32>, vector<128x128xf32>, vector<64x128xf32> -> vector<64x128xf32>
    %c0_3 = arith.constant 0 : index
    %c0_4 = arith.constant 0 : index
    %3 = vector.load %arg3[%c0_3, %c0_4] : memref<1x128xf32, #tpu.memory_space<vmem>>, vector<1x128xf32>
    %4 = vector.broadcast %3 : vector<1x128xf32> to vector<64x128xf32>
    %5 = arith.mulf %2, %4 : vector<64x128xf32>
    %c0_5 = arith.constant 0 : index
    %c0_6 = arith.constant 0 : index
    %6 = vector.load %arg4[%c0_5, %c0_6] : memref<1x128xf32, #tpu.memory_space<vmem>>, vector<1x128xf32>
    %7 = vector.broadcast %6 : vector<1x128xf32> to vector<64x128xf32>
    %8 = arith.addf %5, %7 : vector<64x128xf32>
    %cst_7 = arith.constant 0.000000e+00 : f32
    %9 = vector.broadcast %cst_7 : f32 to vector<64x128xf32>
    %10 = arith.maximumf %8, %9 : vector<64x128xf32>
    %c0_8 = arith.constant 0 : index
    %c0_9 = arith.constant 0 : index
    %11 = vector.load %arg5[%c0_8, %c0_9] : memref<64x128xf32, #tpu.memory_space<vmem>>, vector<64x128xf32>
    tpu.vector_store %arg5[%c0_8, %c0_9], %10 {strides = array<i32>} : memref<64x128xf32, #tpu.memory_space<vmem>>, vector<64x128xf32>,
    return
  }
  func.func @transform_0(%arg0: i32) -> (i32, i32) {
    %c0_i32 = arith.constant 0 : i32
    %c0_i32_0 = arith.constant 0 : i32
    return %arg0, %c0_i32 : i32, i32
  }
  func.func @transform_1(%arg0: i32) -> (i32, i32) {
    %c0_i32 = arith.constant 0 : i32
    %c0_i32_0 = arith.constant 0 : i32
    %c0_i32_1 = arith.constant 0 : i32
    return %c0_i32, %c0_i32_0 : i32, i32
  }
  func.func @transform_2(%arg0: i32) -> (i32, i32) {
    %c0_i32 = arith.constant 0 : i32
    %c0_i32_0 = arith.constant 0 : i32
    %c0_i32_1 = arith.constant 0 : i32
    return %c0_i32, %c0_i32_0 : i32, i32
  }
  func.func @transform_3(%arg0: i32) -> (i32, i32) {
    %c0_i32 = arith.constant 0 : i32
    %c0_i32_0 = arith.constant 0 : i32
    %c0_i32_1 = arith.constant 0 : i32
    return %c0_i32, %c0_i32_0 : i32, i32
  }
  func.func @transform_4(%arg0: i32) -> (i32, i32) {
    %c0_i32 = arith.constant 0 : i32
    %c0_i32_0 = arith.constant 0 : i32
    return %arg0, %c0_i32 : i32, i32
  }
}

module attributes {stable_mosaic.version = 11 : i64} {
  func.func @_sk_fused_kernel(%arg0: i32, %arg1: memref<1x16x512xf32, #tpu.memory_space<vmem>>, %arg2: memref<18x512xf32, #tpu.memory_space<vmem>>, %arg3: memref<6x512xf32, #tpu.memory_space<vmem>>, %arg4: memref<32x32xf32, #tpu.memory_space<vmem>>, %arg5: memref<1x32xf32, #tpu.memory_space<vmem>>, %arg6: memref<1x32xf32, #tpu.memory_space<vmem>>, %arg7: memref<32x32xf32, #tpu.memory_space<vmem>>, %arg8: memref<1x32xf32, #tpu.memory_space<vmem>>, %arg9: memref<32x32xf32, #tpu.memory_space<vmem>>, %arg10: memref<1x32xf32, #tpu.memory_space<vmem>>, %arg11: memref<1x16x512xf32, #tpu.memory_space<vmem>>, %arg12: memref<20x640xf32, #tpu.memory_space<vmem>>) attributes {dimension_semantics = [#tpu.dimension_semantics<parallel>], iteration_bounds = array<i64: 2>, scalar_prefetch = 0 : i64, scratch_operands = 1 : i64, tpu.core_type = #tpu.core_type<tc>, window_params = [{transform_indices = @transform_0, window_bounds = array<i64: 1, 16, 512>}, {pipeline_mode = #tpu.pipeline_mode<synchronous>, transform_indices = @transform_1, window_bounds = array<i64: 18, 512>}, {pipeline_mode = #tpu.pipeline_mode<synchronous>, transform_indices = @transform_2, window_bounds = array<i64: 6, 512>}, {pipeline_mode = #tpu.pipeline_mode<synchronous>, transform_indices = @transform_3, window_bounds = array<i64: 32, 32>}, {pipeline_mode = #tpu.pipeline_mode<synchronous>, transform_indices = @transform_4, window_bounds = array<i64: 1, 32>}, {pipeline_mode = #tpu.pipeline_mode<synchronous>, transform_indices = @transform_5, window_bounds = array<i64: 1, 32>}, {pipeline_mode = #tpu.pipeline_mode<synchronous>, transform_indices = @transform_6, window_bounds = array<i64: 32, 32>}, {pipeline_mode = #tpu.pipeline_mode<synchronous>, transform_indices = @transform_7, window_bounds = array<i64: 1, 32>}, {pipeline_mode = #tpu.pipeline_mode<synchronous>, transform_indices = @transform_8, window_bounds = array<i64: 32, 32>}, {pipeline_mode = #tpu.pipeline_mode<synchronous>, transform_indices = @transform_9, window_bounds = array<i64: 1, 32>}, {transform_indices = @transform_10, window_bounds = array<i64: 1, 16, 512>}]} {
    %cst = arith.constant 0.000000e+00 : f32
    %0 = vector.broadcast %cst : f32 to vector<20x640xf32>
    %c0 = arith.constant 0 : index
    %c0_0 = arith.constant 0 : index
    %1 = vector.load %arg12[%c0, %c0_0] : memref<20x640xf32, #tpu.memory_space<vmem>>, vector<20x640xf32>
    tpu.vector_store %arg12[%c0, %c0_0], %0 {strides = array<i32>} : memref<20x640xf32, #tpu.memory_space<vmem>>, vector<20x640xf32>,
    %c0_1 = arith.constant 0 : index
    %c0_2 = arith.constant 0 : index
    %c0_3 = arith.constant 0 : index
    %2 = vector.load %arg1[%c0_1, %c0_2, %c0_3] : memref<1x16x512xf32, #tpu.memory_space<vmem>>, vector<1x16x512xf32>
    %3 = vector.shape_cast %2 : vector<1x16x512xf32> to vector<16x512xf32>
    %c2 = arith.constant 2 : index
    %c64 = arith.constant 64 : index
    %4 = vector.load %arg12[%c2, %c64] : memref<20x640xf32, #tpu.memory_space<vmem>>, vector<16x512xf32>
    tpu.vector_store %arg12[%c2, %c64], %3 {strides = array<i32>} : memref<20x640xf32, #tpu.memory_space<vmem>>, vector<16x512xf32>,
    %c1 = arith.constant 1 : index
    %c32 = arith.constant 32 : index
    %5 = vector.load %arg12[%c1, %c32] : memref<20x640xf32, #tpu.memory_space<vmem>>, vector<16x512xf32>
    %c0_4 = arith.constant 0 : index
    %c0_5 = arith.constant 0 : index
    %6 = vector.load %arg2[%c0_4, %c0_5] : memref<18x512xf32, #tpu.memory_space<vmem>>, vector<1x512xf32>
    %7 = vector.broadcast %6 : vector<1x512xf32> to vector<16x512xf32>
    %8 = arith.mulf %5, %7 : vector<16x512xf32>
    %c1_6 = arith.constant 1 : index
    %c64_7 = arith.constant 64 : index
    %9 = vector.load %arg12[%c1_6, %c64_7] : memref<20x640xf32, #tpu.memory_space<vmem>>, vector<16x512xf32>
    %c1_8 = arith.constant 1 : index
    %c0_9 = arith.constant 0 : index
    %10 = vector.load %arg2[%c1_8, %c0_9] : memref<18x512xf32, #tpu.memory_space<vmem>>, vector<1x512xf32>
    %11 = vector.broadcast %10 : vector<1x512xf32> to vector<16x512xf32>
    %12 = arith.mulf %9, %11 : vector<16x512xf32>
    %13 = arith.addf %8, %12 : vector<16x512xf32>
    %c1_10 = arith.constant 1 : index
    %c96 = arith.constant 96 : index
    %14 = vector.load %arg12[%c1_10, %c96] : memref<20x640xf32, #tpu.memory_space<vmem>>, vector<16x512xf32>
    %c2_11 = arith.constant 2 : index
    %c0_12 = arith.constant 0 : index
    %15 = vector.load %arg2[%c2_11, %c0_12] : memref<18x512xf32, #tpu.memory_space<vmem>>, vector<1x512xf32>
    %16 = vector.broadcast %15 : vector<1x512xf32> to vector<16x512xf32>
    %17 = arith.mulf %14, %16 : vector<16x512xf32>
    %18 = arith.addf %13, %17 : vector<16x512xf32>
    %c2_13 = arith.constant 2 : index
    %c32_14 = arith.constant 32 : index
    %19 = vector.load %arg12[%c2_13, %c32_14] : memref<20x640xf32, #tpu.memory_space<vmem>>, vector<16x512xf32>
    %c3 = arith.constant 3 : index
    %c0_15 = arith.constant 0 : index
    %20 = vector.load %arg2[%c3, %c0_15] : memref<18x512xf32, #tpu.memory_space<vmem>>, vector<1x512xf32>
    %21 = vector.broadcast %20 : vector<1x512xf32> to vector<16x512xf32>
    %22 = arith.mulf %19, %21 : vector<16x512xf32>
    %23 = arith.addf %18, %22 : vector<16x512xf32>
    %c2_16 = arith.constant 2 : index
    %c64_17 = arith.constant 64 : index
    %24 = vector.load %arg12[%c2_16, %c64_17] : memref<20x640xf32, #tpu.memory_space<vmem>>, vector<16x512xf32>
    %c4 = arith.constant 4 : index
    %c0_18 = arith.constant 0 : index
    %25 = vector.load %arg2[%c4, %c0_18] : memref<18x512xf32, #tpu.memory_space<vmem>>, vector<1x512xf32>
    %26 = vector.broadcast %25 : vector<1x512xf32> to vector<16x512xf32>
    %27 = arith.mulf %24, %26 : vector<16x512xf32>
    %28 = arith.addf %23, %27 : vector<16x512xf32>
    %c2_19 = arith.constant 2 : index
    %c96_20 = arith.constant 96 : index
    %29 = vector.load %arg12[%c2_19, %c96_20] : memref<20x640xf32, #tpu.memory_space<vmem>>, vector<16x512xf32>
    %c5 = arith.constant 5 : index
    %c0_21 = arith.constant 0 : index
    %30 = vector.load %arg2[%c5, %c0_21] : memref<18x512xf32, #tpu.memory_space<vmem>>, vector<1x512xf32>
    %31 = vector.broadcast %30 : vector<1x512xf32> to vector<16x512xf32>
    %32 = arith.mulf %29, %31 : vector<16x512xf32>
    %33 = arith.addf %28, %32 : vector<16x512xf32>
    %c3_22 = arith.constant 3 : index
    %c32_23 = arith.constant 32 : index
    %34 = vector.load %arg12[%c3_22, %c32_23] : memref<20x640xf32, #tpu.memory_space<vmem>>, vector<16x512xf32>
    %c6 = arith.constant 6 : index
    %c0_24 = arith.constant 0 : index
    %35 = vector.load %arg2[%c6, %c0_24] : memref<18x512xf32, #tpu.memory_space<vmem>>, vector<1x512xf32>
    %36 = vector.broadcast %35 : vector<1x512xf32> to vector<16x512xf32>
    %37 = arith.mulf %34, %36 : vector<16x512xf32>
    %38 = arith.addf %33, %37 : vector<16x512xf32>
    %c3_25 = arith.constant 3 : index
    %c64_26 = arith.constant 64 : index
    %39 = vector.load %arg12[%c3_25, %c64_26] : memref<20x640xf32, #tpu.memory_space<vmem>>, vector<16x512xf32>
    %c7 = arith.constant 7 : index
    %c0_27 = arith.constant 0 : index
    %40 = vector.load %arg2[%c7, %c0_27] : memref<18x512xf32, #tpu.memory_space<vmem>>, vector<1x512xf32>
    %41 = vector.broadcast %40 : vector<1x512xf32> to vector<16x512xf32>
    %42 = arith.mulf %39, %41 : vector<16x512xf32>
    %43 = arith.addf %38, %42 : vector<16x512xf32>
    %c3_28 = arith.constant 3 : index
    %c96_29 = arith.constant 96 : index
    %44 = vector.load %arg12[%c3_28, %c96_29] : memref<20x640xf32, #tpu.memory_space<vmem>>, vector<16x512xf32>
    %c8 = arith.constant 8 : index
    %c0_30 = arith.constant 0 : index
    %45 = vector.load %arg2[%c8, %c0_30] : memref<18x512xf32, #tpu.memory_space<vmem>>, vector<1x512xf32>
    %46 = vector.broadcast %45 : vector<1x512xf32> to vector<16x512xf32>
    %47 = arith.mulf %44, %46 : vector<16x512xf32>
    %48 = arith.addf %43, %47 : vector<16x512xf32>
    %c0_31 = arith.constant 0 : index
    %c0_32 = arith.constant 0 : index
    %49 = vector.load %arg3[%c0_31, %c0_32] : memref<6x512xf32, #tpu.memory_space<vmem>>, vector<1x512xf32>
    %c1_33 = arith.constant 1 : index
    %c0_34 = arith.constant 0 : index
    %50 = vector.load %arg3[%c1_33, %c0_34] : memref<6x512xf32, #tpu.memory_space<vmem>>, vector<1x512xf32>
    %51 = vector.broadcast %49 : vector<1x512xf32> to vector<16x512xf32>
    %52 = arith.mulf %48, %51 : vector<16x512xf32>
    %53 = vector.broadcast %50 : vector<1x512xf32> to vector<16x512xf32>
    %54 = arith.addf %52, %53 : vector<16x512xf32>
    %cst_35 = arith.constant 0.000000e+00 : f32
    %55 = vector.broadcast %cst_35 : f32 to vector<16x512xf32>
    %56 = arith.maximumf %54, %55 : vector<16x512xf32>
    %c0_36 = arith.constant 0 : index
    %c0_37 = arith.constant 0 : index
    %57 = vector.load %arg12[%c0_36, %c0_37] : memref<20x640xf32, #tpu.memory_space<vmem>>, vector<16x512xf32>
    %c9 = arith.constant 9 : index
    %c0_38 = arith.constant 0 : index
    %58 = vector.load %arg2[%c9, %c0_38] : memref<18x512xf32, #tpu.memory_space<vmem>>, vector<1x512xf32>
    %59 = vector.broadcast %58 : vector<1x512xf32> to vector<16x512xf32>
    %60 = arith.mulf %57, %59 : vector<16x512xf32>
    %c0_39 = arith.constant 0 : index
    %c64_40 = arith.constant 64 : index
    %61 = vector.load %arg12[%c0_39, %c64_40] : memref<20x640xf32, #tpu.memory_space<vmem>>, vector<16x512xf32>
    %c10 = arith.constant 10 : index
    %c0_41 = arith.constant 0 : index
    %62 = vector.load %arg2[%c10, %c0_41] : memref<18x512xf32, #tpu.memory_space<vmem>>, vector<1x512xf32>
    %63 = vector.broadcast %62 : vector<1x512xf32> to vector<16x512xf32>
    %64 = arith.mulf %61, %63 : vector<16x512xf32>
    %65 = arith.addf %60, %64 : vector<16x512xf32>
    %c0_42 = arith.constant 0 : index
    %c128 = arith.constant 128 : index
    %66 = vector.load %arg12[%c0_42, %c128] : memref<20x640xf32, #tpu.memory_space<vmem>>, vector<16x512xf32>
    %c11 = arith.constant 11 : index
    %c0_43 = arith.constant 0 : index
    %67 = vector.load %arg2[%c11, %c0_43] : memref<18x512xf32, #tpu.memory_space<vmem>>, vector<1x512xf32>
    %68 = vector.broadcast %67 : vector<1x512xf32> to vector<16x512xf32>
    %69 = arith.mulf %66, %68 : vector<16x512xf32>
    %70 = arith.addf %65, %69 : vector<16x512xf32>
    %c2_44 = arith.constant 2 : index
    %c0_45 = arith.constant 0 : index
    %71 = vector.load %arg12[%c2_44, %c0_45] : memref<20x640xf32, #tpu.memory_space<vmem>>, vector<16x512xf32>
    %c12 = arith.constant 12 : index
    %c0_46 = arith.constant 0 : index
    %72 = vector.load %arg2[%c12, %c0_46] : memref<18x512xf32, #tpu.memory_space<vmem>>, vector<1x512xf32>
    %73 = vector.broadcast %72 : vector<1x512xf32> to vector<16x512xf32>
    %74 = arith.mulf %71, %73 : vector<16x512xf32>
    %75 = arith.addf %70, %74 : vector<16x512xf32>
    %c2_47 = arith.constant 2 : index
    %c64_48 = arith.constant 64 : index
    %76 = vector.load %arg12[%c2_47, %c64_48] : memref<20x640xf32, #tpu.memory_space<vmem>>, vector<16x512xf32>
    %c13 = arith.constant 13 : index
    %c0_49 = arith.constant 0 : index
    %77 = vector.load %arg2[%c13, %c0_49] : memref<18x512xf32, #tpu.memory_space<vmem>>, vector<1x512xf32>
    %78 = vector.broadcast %77 : vector<1x512xf32> to vector<16x512xf32>
    %79 = arith.mulf %76, %78 : vector<16x512xf32>
    %80 = arith.addf %75, %79 : vector<16x512xf32>
    %c2_50 = arith.constant 2 : index
    %c128_51 = arith.constant 128 : index
    %81 = vector.load %arg12[%c2_50, %c128_51] : memref<20x640xf32, #tpu.memory_space<vmem>>, vector<16x512xf32>
    %c14 = arith.constant 14 : index
    %c0_52 = arith.constant 0 : index
    %82 = vector.load %arg2[%c14, %c0_52] : memref<18x512xf32, #tpu.memory_space<vmem>>, vector<1x512xf32>
    %83 = vector.broadcast %82 : vector<1x512xf32> to vector<16x512xf32>
    %84 = arith.mulf %81, %83 : vector<16x512xf32>
    %85 = arith.addf %80, %84 : vector<16x512xf32>
    %c4_53 = arith.constant 4 : index
    %c0_54 = arith.constant 0 : index
    %86 = vector.load %arg12[%c4_53, %c0_54] : memref<20x640xf32, #tpu.memory_space<vmem>>, vector<16x512xf32>
    %c15 = arith.constant 15 : index
    %c0_55 = arith.constant 0 : index
    %87 = vector.load %arg2[%c15, %c0_55] : memref<18x512xf32, #tpu.memory_space<vmem>>, vector<1x512xf32>
    %88 = vector.broadcast %87 : vector<1x512xf32> to vector<16x512xf32>
    %89 = arith.mulf %86, %88 : vector<16x512xf32>
    %90 = arith.addf %85, %89 : vector<16x512xf32>
    %c4_56 = arith.constant 4 : index
    %c64_57 = arith.constant 64 : index
    %91 = vector.load %arg12[%c4_56, %c64_57] : memref<20x640xf32, #tpu.memory_space<vmem>>, vector<16x512xf32>
    %c16 = arith.constant 16 : index
    %c0_58 = arith.constant 0 : index
    %92 = vector.load %arg2[%c16, %c0_58] : memref<18x512xf32, #tpu.memory_space<vmem>>, vector<1x512xf32>
    %93 = vector.broadcast %92 : vector<1x512xf32> to vector<16x512xf32>
    %94 = arith.mulf %91, %93 : vector<16x512xf32>
    %95 = arith.addf %90, %94 : vector<16x512xf32>
    %c4_59 = arith.constant 4 : index
    %c128_60 = arith.constant 128 : index
    %96 = vector.load %arg12[%c4_59, %c128_60] : memref<20x640xf32, #tpu.memory_space<vmem>>, vector<16x512xf32>
    %c17 = arith.constant 17 : index
    %c0_61 = arith.constant 0 : index
    %97 = vector.load %arg2[%c17, %c0_61] : memref<18x512xf32, #tpu.memory_space<vmem>>, vector<1x512xf32>
    %98 = vector.broadcast %97 : vector<1x512xf32> to vector<16x512xf32>
    %99 = arith.mulf %96, %98 : vector<16x512xf32>
    %100 = arith.addf %95, %99 : vector<16x512xf32>
    %c2_62 = arith.constant 2 : index
    %c0_63 = arith.constant 0 : index
    %101 = vector.load %arg3[%c2_62, %c0_63] : memref<6x512xf32, #tpu.memory_space<vmem>>, vector<1x512xf32>
    %c3_64 = arith.constant 3 : index
    %c0_65 = arith.constant 0 : index
    %102 = vector.load %arg3[%c3_64, %c0_65] : memref<6x512xf32, #tpu.memory_space<vmem>>, vector<1x512xf32>
    %103 = vector.broadcast %101 : vector<1x512xf32> to vector<16x512xf32>
    %104 = arith.mulf %100, %103 : vector<16x512xf32>
    %105 = vector.broadcast %102 : vector<1x512xf32> to vector<16x512xf32>
    %106 = arith.addf %104, %105 : vector<16x512xf32>
    %cst_66 = arith.constant 0.000000e+00 : f32
    %107 = vector.broadcast %cst_66 : f32 to vector<16x512xf32>
    %108 = arith.maximumf %106, %107 : vector<16x512xf32>
    %109 = arith.addf %56, %108 : vector<16x512xf32>
    %cst_67 = arith.constant dense<0.000000e+00> : vector<512xf32>
    %110 = vector.multi_reduction <add>, %109, %cst_67 [0] : vector<16x512xf32> to vector<512xf32>
    %111 = vector.shape_cast %110 : vector<512xf32> to vector<1x512xf32>
    %112 = vector.extract_strided_slice %111 {offsets = [0, 0], sizes = [1, 32], strides = [1, 1]} : vector<1x512xf32> to vector<1x32xf32>
    %113 = vector.extract_strided_slice %111 {offsets = [0, 32], sizes = [1, 32], strides = [1, 1]} : vector<1x512xf32> to vector<1x32xf32>
    %114 = arith.addf %112, %113 : vector<1x32xf32>
    %115 = vector.extract_strided_slice %111 {offsets = [0, 64], sizes = [1, 32], strides = [1, 1]} : vector<1x512xf32> to vector<1x32xf32>
    %116 = arith.addf %114, %115 : vector<1x32xf32>
    %117 = vector.extract_strided_slice %111 {offsets = [0, 96], sizes = [1, 32], strides = [1, 1]} : vector<1x512xf32> to vector<1x32xf32>
    %118 = arith.addf %116, %117 : vector<1x32xf32>
    %119 = vector.extract_strided_slice %111 {offsets = [0, 128], sizes = [1, 32], strides = [1, 1]} : vector<1x512xf32> to vector<1x32xf32>
    %120 = arith.addf %118, %119 : vector<1x32xf32>
    %121 = vector.extract_strided_slice %111 {offsets = [0, 160], sizes = [1, 32], strides = [1, 1]} : vector<1x512xf32> to vector<1x32xf32>
    %122 = arith.addf %120, %121 : vector<1x32xf32>
    %123 = vector.extract_strided_slice %111 {offsets = [0, 192], sizes = [1, 32], strides = [1, 1]} : vector<1x512xf32> to vector<1x32xf32>
    %124 = arith.addf %122, %123 : vector<1x32xf32>
    %125 = vector.extract_strided_slice %111 {offsets = [0, 224], sizes = [1, 32], strides = [1, 1]} : vector<1x512xf32> to vector<1x32xf32>
    %126 = arith.addf %124, %125 : vector<1x32xf32>
    %127 = vector.extract_strided_slice %111 {offsets = [0, 256], sizes = [1, 32], strides = [1, 1]} : vector<1x512xf32> to vector<1x32xf32>
    %128 = arith.addf %126, %127 : vector<1x32xf32>
    %129 = vector.extract_strided_slice %111 {offsets = [0, 288], sizes = [1, 32], strides = [1, 1]} : vector<1x512xf32> to vector<1x32xf32>
    %130 = arith.addf %128, %129 : vector<1x32xf32>
    %131 = vector.extract_strided_slice %111 {offsets = [0, 320], sizes = [1, 32], strides = [1, 1]} : vector<1x512xf32> to vector<1x32xf32>
    %132 = arith.addf %130, %131 : vector<1x32xf32>
    %133 = vector.extract_strided_slice %111 {offsets = [0, 352], sizes = [1, 32], strides = [1, 1]} : vector<1x512xf32> to vector<1x32xf32>
    %134 = arith.addf %132, %133 : vector<1x32xf32>
    %135 = vector.extract_strided_slice %111 {offsets = [0, 384], sizes = [1, 32], strides = [1, 1]} : vector<1x512xf32> to vector<1x32xf32>
    %136 = arith.addf %134, %135 : vector<1x32xf32>
    %137 = vector.extract_strided_slice %111 {offsets = [0, 416], sizes = [1, 32], strides = [1, 1]} : vector<1x512xf32> to vector<1x32xf32>
    %138 = arith.addf %136, %137 : vector<1x32xf32>
    %139 = vector.extract_strided_slice %111 {offsets = [0, 448], sizes = [1, 32], strides = [1, 1]} : vector<1x512xf32> to vector<1x32xf32>
    %140 = arith.addf %138, %139 : vector<1x32xf32>
    %141 = vector.extract_strided_slice %111 {offsets = [0, 480], sizes = [1, 32], strides = [1, 1]} : vector<1x512xf32> to vector<1x32xf32>
    %142 = arith.addf %140, %141 : vector<1x32xf32>
    %cst_68 = arith.constant 3.906250e-03 : f32
    %143 = vector.broadcast %cst_68 : f32 to vector<1x32xf32>
    %144 = arith.mulf %142, %143 : vector<1x32xf32>
    %c0_69 = arith.constant 0 : index
    %c0_70 = arith.constant 0 : index
    %145 = vector.load %arg4[%c0_69, %c0_70] : memref<32x32xf32, #tpu.memory_space<vmem>>, vector<32x32xf32>
    %cst_71 = arith.constant dense<0.000000e+00> : vector<1x32xf32>
    %146 = tpu.matmul %144, %145, %cst_71 {dimension_numbers = #tpu.dot_dimension_numbers<[1], [0], [0], [1], [0, 0, 1, 1], [], []>} : vector<1x32xf32>, vector<32x32xf32>, vector<1x32xf32> -> vector<1x32xf32>
    %c0_72 = arith.constant 0 : index
    %c0_73 = arith.constant 0 : index
    %147 = vector.load %arg5[%c0_72, %c0_73] : memref<1x32xf32, #tpu.memory_space<vmem>>, vector<1x32xf32>
    %148 = arith.mulf %146, %147 : vector<1x32xf32>
    %c0_74 = arith.constant 0 : index
    %c0_75 = arith.constant 0 : index
    %149 = vector.load %arg6[%c0_74, %c0_75] : memref<1x32xf32, #tpu.memory_space<vmem>>, vector<1x32xf32>
    %150 = arith.addf %148, %149 : vector<1x32xf32>
    %cst_76 = arith.constant 0.000000e+00 : f32
    %151 = vector.broadcast %cst_76 : f32 to vector<1x32xf32>
    %152 = arith.maximumf %150, %151 : vector<1x32xf32>
    %c0_77 = arith.constant 0 : index
    %c0_78 = arith.constant 0 : index
    %153 = vector.load %arg7[%c0_77, %c0_78] : memref<32x32xf32, #tpu.memory_space<vmem>>, vector<32x32xf32>
    %cst_79 = arith.constant dense<0.000000e+00> : vector<1x32xf32>
    %154 = tpu.matmul %152, %153, %cst_79 {dimension_numbers = #tpu.dot_dimension_numbers<[1], [0], [0], [1], [0, 0, 1, 1], [], []>} : vector<1x32xf32>, vector<32x32xf32>, vector<1x32xf32> -> vector<1x32xf32>
    %c0_80 = arith.constant 0 : index
    %c0_81 = arith.constant 0 : index
    %155 = vector.load %arg8[%c0_80, %c0_81] : memref<1x32xf32, #tpu.memory_space<vmem>>, vector<1x32xf32>
    %156 = arith.addf %154, %155 : vector<1x32xf32>
    %c0_82 = arith.constant 0 : index
    %c0_83 = arith.constant 0 : index
    %157 = vector.load %arg9[%c0_82, %c0_83] : memref<32x32xf32, #tpu.memory_space<vmem>>, vector<32x32xf32>
    %cst_84 = arith.constant dense<0.000000e+00> : vector<1x32xf32>
    %158 = tpu.matmul %152, %157, %cst_84 {dimension_numbers = #tpu.dot_dimension_numbers<[1], [0], [0], [1], [0, 0, 1, 1], [], []>} : vector<1x32xf32>, vector<32x32xf32>, vector<1x32xf32> -> vector<1x32xf32>
    %c0_85 = arith.constant 0 : index
    %c0_86 = arith.constant 0 : index
    %159 = vector.load %arg10[%c0_85, %c0_86] : memref<1x32xf32, #tpu.memory_space<vmem>>, vector<1x32xf32>
    %160 = arith.addf %158, %159 : vector<1x32xf32>
    %161 = arith.maximumf %156, %160 : vector<1x32xf32>
    %162 = arith.subf %156, %161 : vector<1x32xf32>
    %163 = math.exp %162 : vector<1x32xf32>
    %164 = arith.subf %160, %161 : vector<1x32xf32>
    %165 = math.exp %164 : vector<1x32xf32>
    %166 = arith.addf %163, %165 : vector<1x32xf32>
    %167 = tpu.reciprocal %166 {approx = true} : vector<1x32xf32> -> vector<1x32xf32>
    %168 = arith.mulf %163, %167 : vector<1x32xf32>
    %169 = tpu.concatenate %168, %168, %168, %168, %168, %168, %168, %168, %168, %168, %168, %168, %168, %168, %168, %168 in 1 : vector<1x32xf32>, vector<1x32xf32>, vector<1x32xf32>, vector<1x32xf32>, vector<1x32xf32>, vector<1x32xf32>, vector<1x32xf32>, vector<1x32xf32>, vector<1x32xf32>, vector<1x32xf32>, vector<1x32xf32>, vector<1x32xf32>, vector<1x32xf32>, vector<1x32xf32>, vector<1x32xf32>, vector<1x32xf32> -> vector<1x512xf32>
    %170 = arith.mulf %165, %167 : vector<1x32xf32>
    %171 = tpu.concatenate %170, %170, %170, %170, %170, %170, %170, %170, %170, %170, %170, %170, %170, %170, %170, %170 in 1 : vector<1x32xf32>, vector<1x32xf32>, vector<1x32xf32>, vector<1x32xf32>, vector<1x32xf32>, vector<1x32xf32>, vector<1x32xf32>, vector<1x32xf32>, vector<1x32xf32>, vector<1x32xf32>, vector<1x32xf32>, vector<1x32xf32>, vector<1x32xf32>, vector<1x32xf32>, vector<1x32xf32>, vector<1x32xf32> -> vector<1x512xf32>
    %172 = vector.broadcast %169 : vector<1x512xf32> to vector<16x512xf32>
    %173 = arith.mulf %56, %172 : vector<16x512xf32>
    %174 = vector.broadcast %171 : vector<1x512xf32> to vector<16x512xf32>
    %175 = arith.mulf %108, %174 : vector<16x512xf32>
    %176 = arith.addf %173, %175 : vector<16x512xf32>
    %c4_87 = arith.constant 4 : index
    %c0_88 = arith.constant 0 : index
    %177 = vector.load %arg3[%c4_87, %c0_88] : memref<6x512xf32, #tpu.memory_space<vmem>>, vector<1x512xf32>
    %178 = vector.broadcast %177 : vector<1x512xf32> to vector<16x512xf32>
    %179 = arith.mulf %176, %178 : vector<16x512xf32>
    %c5_89 = arith.constant 5 : index
    %c0_90 = arith.constant 0 : index
    %180 = vector.load %arg3[%c5_89, %c0_90] : memref<6x512xf32, #tpu.memory_space<vmem>>, vector<1x512xf32>
    %181 = vector.broadcast %180 : vector<1x512xf32> to vector<16x512xf32>
    %182 = arith.addf %179, %181 : vector<16x512xf32>
    %cst_91 = arith.constant 0.000000e+00 : f32
    %183 = vector.broadcast %cst_91 : f32 to vector<16x512xf32>
    %184 = arith.maximumf %182, %183 : vector<16x512xf32>
    %c0_92 = arith.constant 0 : index
    %c0_93 = arith.constant 0 : index
    %c0_94 = arith.constant 0 : index
    %185 = vector.load %arg11[%c0_92, %c0_93, %c0_94] : memref<1x16x512xf32, #tpu.memory_space<vmem>>, vector<1x16x512xf32>
    %186 = vector.shape_cast %185 : vector<1x16x512xf32> to vector<16x512xf32>
    %187 = vector.shape_cast %184 : vector<16x512xf32> to vector<1x16x512xf32>
    tpu.vector_store %arg11[%c0_92, %c0_93, %c0_94], %187 {strides = array<i32>} : memref<1x16x512xf32, #tpu.memory_space<vmem>>, vector<1x16x512xf32>,
    return
  }
  func.func @transform_0(%arg0: i32) -> (i32, i32, i32) {
    %c0_i32 = arith.constant 0 : i32
    %c0_i32_0 = arith.constant 0 : i32
    %c0_i32_1 = arith.constant 0 : i32
    return %arg0, %c0_i32, %c0_i32_0 : i32, i32, i32
  }
  func.func @transform_1(%arg0: i32) -> (i32, i32) {
    %c0_i32 = arith.constant 0 : i32
    %c0_i32_0 = arith.constant 0 : i32
    %c0_i32_1 = arith.constant 0 : i32
    return %c0_i32, %c0_i32_0 : i32, i32
  }
  func.func @transform_2(%arg0: i32) -> (i32, i32) {
    %c0_i32 = arith.constant 0 : i32
    %c0_i32_0 = arith.constant 0 : i32
    %c0_i32_1 = arith.constant 0 : i32
    return %c0_i32, %c0_i32_0 : i32, i32
  }
  func.func @transform_3(%arg0: i32) -> (i32, i32) {
    %c0_i32 = arith.constant 0 : i32
    %c0_i32_0 = arith.constant 0 : i32
    %c0_i32_1 = arith.constant 0 : i32
    return %c0_i32, %c0_i32_0 : i32, i32
  }
  func.func @transform_4(%arg0: i32) -> (i32, i32) {
    %c0_i32 = arith.constant 0 : i32
    %c0_i32_0 = arith.constant 0 : i32
    %c0_i32_1 = arith.constant 0 : i32
    return %c0_i32, %c0_i32_0 : i32, i32
  }
  func.func @transform_5(%arg0: i32) -> (i32, i32) {
    %c0_i32 = arith.constant 0 : i32
    %c0_i32_0 = arith.constant 0 : i32
    %c0_i32_1 = arith.constant 0 : i32
    return %c0_i32, %c0_i32_0 : i32, i32
  }
  func.func @transform_6(%arg0: i32) -> (i32, i32) {
    %c0_i32 = arith.constant 0 : i32
    %c0_i32_0 = arith.constant 0 : i32
    %c0_i32_1 = arith.constant 0 : i32
    return %c0_i32, %c0_i32_0 : i32, i32
  }
  func.func @transform_7(%arg0: i32) -> (i32, i32) {
    %c0_i32 = arith.constant 0 : i32
    %c0_i32_0 = arith.constant 0 : i32
    %c0_i32_1 = arith.constant 0 : i32
    return %c0_i32, %c0_i32_0 : i32, i32
  }
  func.func @transform_8(%arg0: i32) -> (i32, i32) {
    %c0_i32 = arith.constant 0 : i32
    %c0_i32_0 = arith.constant 0 : i32
    %c0_i32_1 = arith.constant 0 : i32
    return %c0_i32, %c0_i32_0 : i32, i32
  }
  func.func @transform_9(%arg0: i32) -> (i32, i32) {
    %c0_i32 = arith.constant 0 : i32
    %c0_i32_0 = arith.constant 0 : i32
    %c0_i32_1 = arith.constant 0 : i32
    return %c0_i32, %c0_i32_0 : i32, i32
  }
  func.func @transform_10(%arg0: i32) -> (i32, i32, i32) {
    %c0_i32 = arith.constant 0 : i32
    %c0_i32_0 = arith.constant 0 : i32
    %c0_i32_1 = arith.constant 0 : i32
    return %arg0, %c0_i32, %c0_i32_0 : i32, i32, i32
  }
}

module attributes {stable_mosaic.version = 11 : i64} {
  func.func @_conv_bn_skipproj_kernel(%arg0: i32, %arg1: memref<64x128xf32, #tpu.memory_space<vmem>>, %arg2: memref<128x256xf32, #tpu.memory_space<vmem>>, %arg3: memref<1x256xf32, #tpu.memory_space<vmem>>, %arg4: memref<1x256xf32, #tpu.memory_space<vmem>>, %arg5: memref<64x128xf32, #tpu.memory_space<vmem>>, %arg6: memref<128x256xf32, #tpu.memory_space<vmem>>, %arg7: memref<1x256xf32, #tpu.memory_space<vmem>>, %arg8: memref<1x256xf32, #tpu.memory_space<vmem>>, %arg9: memref<64x256xf32, #tpu.memory_space<vmem>>) attributes {dimension_semantics = [#tpu.dimension_semantics<parallel>], iteration_bounds = array<i64: 2>, scalar_prefetch = 0 : i64, scratch_operands = 0 : i64, tpu.core_type = #tpu.core_type<tc>, window_params = [{transform_indices = @transform_0, window_bounds = array<i64: 64, 128>}, {pipeline_mode = #tpu.pipeline_mode<synchronous>, transform_indices = @transform_1, window_bounds = array<i64: 128, 256>}, {pipeline_mode = #tpu.pipeline_mode<synchronous>, transform_indices = @transform_2, window_bounds = array<i64: 1, 256>}, {pipeline_mode = #tpu.pipeline_mode<synchronous>, transform_indices = @transform_3, window_bounds = array<i64: 1, 256>}, {transform_indices = @transform_4, window_bounds = array<i64: 64, 128>}, {pipeline_mode = #tpu.pipeline_mode<synchronous>, transform_indices = @transform_5, window_bounds = array<i64: 128, 256>}, {pipeline_mode = #tpu.pipeline_mode<synchronous>, transform_indices = @transform_6, window_bounds = array<i64: 1, 256>}, {pipeline_mode = #tpu.pipeline_mode<synchronous>, transform_indices = @transform_7, window_bounds = array<i64: 1, 256>}, {transform_indices = @transform_8, window_bounds = array<i64: 64, 256>}]} {
    %c0 = arith.constant 0 : index
    %c0_0 = arith.constant 0 : index
    %0 = vector.load %arg1[%c0, %c0_0] : memref<64x128xf32, #tpu.memory_space<vmem>>, vector<64x128xf32>
    %c0_1 = arith.constant 0 : index
    %c0_2 = arith.constant 0 : index
    %1 = vector.load %arg2[%c0_1, %c0_2] : memref<128x256xf32, #tpu.memory_space<vmem>>, vector<128x256xf32>
    %cst = arith.constant dense<0.000000e+00> : vector<64x256xf32>
    %2 = tpu.matmul %0, %1, %cst {dimension_numbers = #tpu.dot_dimension_numbers<[1], [0], [0], [1], [0, 0, 1, 1], [], []>} : vector<64x128xf32>, vector<128x256xf32>, vector<64x256xf32> -> vector<64x256xf32>
    %c0_3 = arith.constant 0 : index
    %c0_4 = arith.constant 0 : index
    %3 = vector.load %arg3[%c0_3, %c0_4] : memref<1x256xf32, #tpu.memory_space<vmem>>, vector<1x256xf32>
    %4 = vector.broadcast %3 : vector<1x256xf32> to vector<64x256xf32>
    %5 = arith.mulf %2, %4 : vector<64x256xf32>
    %c0_5 = arith.constant 0 : index
    %c0_6 = arith.constant 0 : index
    %6 = vector.load %arg4[%c0_5, %c0_6] : memref<1x256xf32, #tpu.memory_space<vmem>>, vector<1x256xf32>
    %7 = vector.broadcast %6 : vector<1x256xf32> to vector<64x256xf32>
    %8 = arith.addf %5, %7 : vector<64x256xf32>
    %cst_7 = arith.constant 0.000000e+00 : f32
    %9 = vector.broadcast %cst_7 : f32 to vector<64x256xf32>
    %10 = arith.maximumf %8, %9 : vector<64x256xf32>
    %c0_8 = arith.constant 0 : index
    %c0_9 = arith.constant 0 : index
    %11 = vector.load %arg5[%c0_8, %c0_9] : memref<64x128xf32, #tpu.memory_space<vmem>>, vector<64x128xf32>
    %c0_10 = arith.constant 0 : index
    %c0_11 = arith.constant 0 : index
    %12 = vector.load %arg6[%c0_10, %c0_11] : memref<128x256xf32, #tpu.memory_space<vmem>>, vector<128x256xf32>
    %cst_12 = arith.constant dense<0.000000e+00> : vector<64x256xf32>
    %13 = tpu.matmul %11, %12, %cst_12 {dimension_numbers = #tpu.dot_dimension_numbers<[1], [0], [0], [1], [0, 0, 1, 1], [], []>} : vector<64x128xf32>, vector<128x256xf32>, vector<64x256xf32> -> vector<64x256xf32>
    %c0_13 = arith.constant 0 : index
    %c0_14 = arith.constant 0 : index
    %14 = vector.load %arg7[%c0_13, %c0_14] : memref<1x256xf32, #tpu.memory_space<vmem>>, vector<1x256xf32>
    %15 = vector.broadcast %14 : vector<1x256xf32> to vector<64x256xf32>
    %16 = arith.mulf %13, %15 : vector<64x256xf32>
    %c0_15 = arith.constant 0 : index
    %c0_16 = arith.constant 0 : index
    %17 = vector.load %arg8[%c0_15, %c0_16] : memref<1x256xf32, #tpu.memory_space<vmem>>, vector<1x256xf32>
    %18 = vector.broadcast %17 : vector<1x256xf32> to vector<64x256xf32>
    %19 = arith.addf %16, %18 : vector<64x256xf32>
    %20 = arith.addf %10, %19 : vector<64x256xf32>
    %c0_17 = arith.constant 0 : index
    %c0_18 = arith.constant 0 : index
    %21 = vector.load %arg9[%c0_17, %c0_18] : memref<64x256xf32, #tpu.memory_space<vmem>>, vector<64x256xf32>
    tpu.vector_store %arg9[%c0_17, %c0_18], %20 {strides = array<i32>} : memref<64x256xf32, #tpu.memory_space<vmem>>, vector<64x256xf32>,
    return
  }
  func.func @transform_0(%arg0: i32) -> (i32, i32) {
    %c0_i32 = arith.constant 0 : i32
    %c0_i32_0 = arith.constant 0 : i32
    return %arg0, %c0_i32 : i32, i32
  }
  func.func @transform_1(%arg0: i32) -> (i32, i32) {
    %c0_i32 = arith.constant 0 : i32
    %c0_i32_0 = arith.constant 0 : i32
    %c0_i32_1 = arith.constant 0 : i32
    return %c0_i32, %c0_i32_0 : i32, i32
  }
  func.func @transform_2(%arg0: i32) -> (i32, i32) {
    %c0_i32 = arith.constant 0 : i32
    %c0_i32_0 = arith.constant 0 : i32
    %c0_i32_1 = arith.constant 0 : i32
    return %c0_i32, %c0_i32_0 : i32, i32
  }
  func.func @transform_3(%arg0: i32) -> (i32, i32) {
    %c0_i32 = arith.constant 0 : i32
    %c0_i32_0 = arith.constant 0 : i32
    %c0_i32_1 = arith.constant 0 : i32
    return %c0_i32, %c0_i32_0 : i32, i32
  }
  func.func @transform_4(%arg0: i32) -> (i32, i32) {
    %c0_i32 = arith.constant 0 : i32
    %c0_i32_0 = arith.constant 0 : i32
    return %arg0, %c0_i32 : i32, i32
  }
  func.func @transform_5(%arg0: i32) -> (i32, i32) {
    %c0_i32 = arith.constant 0 : i32
    %c0_i32_0 = arith.constant 0 : i32
    %c0_i32_1 = arith.constant 0 : i32
    return %c0_i32, %c0_i32_0 : i32, i32
  }
  func.func @transform_6(%arg0: i32) -> (i32, i32) {
    %c0_i32 = arith.constant 0 : i32
    %c0_i32_0 = arith.constant 0 : i32
    %c0_i32_1 = arith.constant 0 : i32
    return %c0_i32, %c0_i32_0 : i32, i32
  }
  func.func @transform_7(%arg0: i32) -> (i32, i32) {
    %c0_i32 = arith.constant 0 : i32
    %c0_i32_0 = arith.constant 0 : i32
    %c0_i32_1 = arith.constant 0 : i32
    return %c0_i32, %c0_i32_0 : i32, i32
  }
  func.func @transform_8(%arg0: i32) -> (i32, i32) {
    %c0_i32 = arith.constant 0 : i32
    %c0_i32_0 = arith.constant 0 : i32
    return %arg0, %c0_i32 : i32, i32
  }
}

</mosaic_0001>

<llo_original>
// kernel: squeeze.2
$region0: #{squeeze.2}
  %s0 = inlined_call_operand.vmem [shape: f32[32,3,3], index: 0, kind: input, shape index: {}]
  %s1 = inlined_call_operand.vmem [shape: f32[32,9], index: 1, kind: output, shape index: {}]
  $region1: #{squeeze.2} parent=0
    #allocation0 [shape = 'u8[12288]{0}', space=vmem, size = 0x3000, scoped, tag = 'scoped mem for input reshape']
    %s3 = ssub.s32 16, 1
    %s4 = scalar_lea.vmem %s0, 8
    %v5 = vld [vmem:[%s4] sm:%s3]
    %s6 = scalar_lea.vmem [#allocation0], 16
    %7 = vst [vmem:[%s6] sm:%s3] %v5
    %s8 = scalar_lea.vmem %s0, 4
    %v9 = vld [vmem:[%s8] sm:%s3]
    %s10 = scalar_lea.vmem [#allocation0], 8
    %11 = vst [vmem:[%s10] sm:%s3] %v9
    %v12 = vld [vmem:[%s0] sm:%s3]
    %13 = vst [vmem:[#allocation0] sm:%s3] %v12
    %v14 = vld [vmem:[#allocation0] sm:$0x7]
    %vm15 = vcmask 261120
    %16 = vst.msk [vmem:[%s1] sm:$0x7] %vm15, %v14
    %s17 = scalar_lea.vmem [#allocation0], 8
    %v18 = vld [vmem:[%s17] sm:$0x7]
    %vm19 = vcmask 261120
    %s20 = scalar_lea.vmem %s1, 3
    %21 = vst.msk [vmem:[%s20] sm:$0x7] %vm19, %v18
    %s22 = scalar_lea.vmem [#allocation0], 16
    %v23 = vld [vmem:[%s22] sm:$0x7]
    %vm24 = vcmask 261120
    %s25 = scalar_lea.vmem %s1, 6
    %26 = vst.msk [vmem:[%s25] sm:$0x7] %vm24, %v23

// kernel: tile.70
$region0: #{tile.70}
  %s0 = inlined_call_operand.vmem [shape: f32[9,16,32], index: 0, kind: input, shape index: {}]
  %s1 = inlined_call_operand.vmem [shape: f32[9,512], index: 1, kind: output, shape index: {}]
  %v2 = vld [vmem:[%s0] ss:$4 sm:$0xff]
  %vm3 = vcmask 261120
  %4 = vst.msk [vmem:[%s1] ss:$8 sm:$0xf] %vm3, %v2
  %s5 = scalar_lea.vmem %s1, 4294967265
  %6 = vst.msk [vmem:[%s5] ss:$8 sm:$0xf0] %vm3, %v2
  %s7 = scalar_lea.vmem %s0, 32
  %v8 = vld [vmem:[%s7] ss:$4 sm:$0xff]
  %vm9 = vcmask 261120
  %s10 = scalar_lea.vmem %s1, 2
  %11 = vst.msk [vmem:[%s10] ss:$8 sm:$0xf] %vm9, %v8
  %s12 = scalar_lea.vmem %s1, 4294967267
  %13 = vst.msk [vmem:[%s12] ss:$8 sm:$0xf0] %vm9, %v8
  %s14 = scalar_lea.vmem %s0, 64
  %v15 = vld [vmem:[%s14] ss:$4 sm:$0xff]
  %vm16 = vcmask 261120
  %s17 = scalar_lea.vmem %s1, 4
  %18 = vst.msk [vmem:[%s17] ss:$8 sm:$0xf] %vm16, %v15
  %s19 = scalar_lea.vmem %s1, 4294967269
  %20 = vst.msk [vmem:[%s19] ss:$8 sm:$0xf0] %vm16, %v15
  %s21 = scalar_lea.vmem %s0, 96
  %v22 = vld [vmem:[%s21] ss:$4 sm:$0xff]
  %vm23 = vcmask 261120
  %s24 = scalar_lea.vmem %s1, 6
  %25 = vst.msk [vmem:[%s24] ss:$8 sm:$0xf] %vm23, %v22
  %s26 = scalar_lea.vmem %s1, 4294967271
  %27 = vst.msk [vmem:[%s26] ss:$8 sm:$0xf0] %vm23, %v22
  %s28 = scalar_lea.vmem %s0, 128
  %v29 = vld [vmem:[%s28] ss:$4 sm:$0xf]
  %vm30 = vcmask 261120
  %s31 = scalar_lea.vmem %s1, 32
  %32 = vst.msk [vmem:[%s31] ss:$8 sm:$0xf] %vm30, %v29
  %s33 = scalar_lea.vmem %s0, 3
  %s34 = smov 3
  %v35 = vld [vmem:[%s33] ss:$16 sm:%s34]
  %s36 = scalar_lea.vmem %s0, 3
  %s37 = smov 12
  %v38 = vld [vmem:[%s36] ss:$16 sm:%s37]
  %vm39 = vcmask 1043458
  %v40 = vsel %vm39, %v38, %v35
  %s41 = scalar_lea.vmem %s0, 3
  %s42 = smov 48
  %v43 = vld [vmem:[%s41] ss:$16 sm:%s42]
  %vm44 = vcmask 1045508
  %v45 = vsel %vm44, %v43, %v40
  %s46 = scalar_lea.vmem %s0, 3
  %s47 = smov 192
  %v48 = vld [vmem:[%s46] ss:$16 sm:%s47]
  %vm49 = vcmask 1047558
  %v50 = vsel %vm49, %v48, %v45
  %51 = vrot.lane.b32.xlu0 %v50, 96
  %v52 = vpop.permute.xlu0 %51
  %vm53 = vcmask 1048320
  %54 = vst.msk [vmem:[%s1] sm:$0xff] %vm53, %v52
  %s55 = scalar_lea.vmem %s0, 131
  %s56 = smov 3
  %v57 = vld [vmem:[%s55] ss:$-124 sm:%s56]
  %s58 = scalar_lea.vmem %s0, 4294967287
  %s59 = smov 12
  %v60 = vld [vmem:[%s58] ss:$16 sm:%s59]
  %vm61 = vcmask 1043458
  %v62 = vsel %vm61, %v60, %v57
  %s63 = scalar_lea.vmem %s0, 4294967287
  %s64 = smov 48
  %v65 = vld [vmem:[%s63] ss:$16 sm:%s64]
  %vm66 = vcmask 1045508
  %v67 = vsel %vm66, %v65, %v62
  %s68 = scalar_lea.vmem %s0, 4294967287
  %s69 = smov 192
  %v70 = vld [vmem:[%s68] ss:$16 sm:%s69]
  %vm71 = vcmask 1047558
  %v72 = vsel %vm71, %v70, %v67
  %73 = vrot.lane.b32.xlu0 %v72, 96
  %v74 = vpop.permute.xlu0 %73
  %vm75 = vcmask 1048320
  %s76 = scalar_lea.vmem %s1, 32
  %77 = vst.msk [vmem:[%s76] ss:$-24 sm:$0x3] %vm75, %v74
  %s78 = scalar_lea.vmem %s1, 7
  %79 = vst.msk [vmem:[%s78] sm:$0xfc] %vm75, %v74
  %s80 = scalar_lea.vmem %s0, 135
  %s81 = smov 3
  %v82 = vld [vmem:[%s80] ss:$-16 sm:%s81]
  %s83 = scalar_lea.vmem %s0, 4294967275
  %s84 = smov 12
  %v85 = vld [vmem:[%s83] ss:$16 sm:%s84]
  %vm86 = vcmask 1043458
  %v87 = vsel %vm86, %v85, %v82
  %s88 = scalar_lea.vmem %s0, 4294967275
  %s89 = smov 48
  %v90 = vld [vmem:[%s88] ss:$16 sm:%s89]
  %vm91 = vcmask 1045508
  %v92 = vsel %vm91, %v90, %v87
  %s93 = scalar_lea.vmem %s0, 4294967275
  %s94 = smov 192
  %v95 = vld [vmem:[%s93] ss:$16 sm:%s94]
  %vm96 = vcmask 1047558
  %v97 = vsel %vm96, %v95, %v92
  %98 = vrot.lane.b32.xlu0 %v97, 96
  %v99 = vpop.permute.xlu0 %98
  %vm100 = vcmask 1048320
  %s101 = scalar_lea.vmem %s1, 40
  %102 = vst.msk [vmem:[%s101] ss:$-25 sm:$0x3] %vm100, %v99
  %s103 = scalar_lea.vmem %s1, 14
  %104 = vst.msk [vmem:[%s103] sm:$0xfc] %vm100, %v99
  %s105 = scalar_lea.vmem %s0, 139
  %v106 = vld [vmem:[%s105] sm:$0x1]
  %s107 = scalar_lea.vmem %s0, 91
  %s108 = smov 6
  %v109 = vld [vmem:[%s107] ss:$16 sm:%s108]
  %vm110 = vcmask 1042433
  %v111 = vsel %vm110, %v109, %v106
  %s112 = scalar_lea.vmem %s0, 4294967263
  %s113 = smov 24
  %v114 = vld [vmem:[%s112] ss:$16 sm:%s113]
  %vm115 = vcmask 1044483
  %v116 = vsel %vm115, %v114, %v111
  %s117 = scalar_lea.vmem %s0, 4294967263
  %s118 = smov 96
  %v119 = vld [vmem:[%s117] ss:$16 sm:%s118]
  %vm120 = vcmask 1046533
  %v121 = vsel %vm120, %v119, %v116
  %s122 = scalar_lea.vmem %s0, 72
  %v123 = vld [vmem:[%s122] sm:$0x80]
  %vm124 = vcmask 1047559
  %v125 = vsel %vm124, %v123, %v121
  %126 = vrot.lane.b32.xlu0 %v125, 96
  %v127 = vpop.permute.xlu0 %126
  %vm128 = vcmask 1048320
  %s129 = scalar_lea.vmem %s1, 48
  %130 = vst.msk [vmem:[%s129] ss:$-26 sm:$0x3] %vm128, %v127
  %s131 = scalar_lea.vmem %s1, 21
  %132 = vst.msk [vmem:[%s131] sm:$0xfc] %vm128, %v127
  %s133 = scalar_lea.vmem %s0, 143
  %s134 = smov 3
  %v135 = vld [vmem:[%s133] ss:$-48 sm:%s134]
  %s136 = scalar_lea.vmem %s0, 79
  %s137 = smov 12
  %v138 = vld [vmem:[%s136] ss:$16 sm:%s137]
  %vm139 = vcmask 1043458
  %v140 = vsel %vm139, %v138, %v135
  %141 = vrot.lane.b32.xlu0 %v140, 96
  %v142 = vpop.permute.xlu0 %141
  %vm143 = vcmask 1048320
  %s144 = scalar_lea.vmem %s1, 56
  %145 = vst.msk [vmem:[%s144] ss:$-27 sm:$0x3] %vm143, %v142
  %s146 = scalar_lea.vmem %s1, 28
  %147 = vst.msk [vmem:[%s146] sm:$0xc] %vm143, %v142
  %s148 = scalar_lea.vmem %s0, 2
  %s149 = smov 3
  %v150 = vld [vmem:[%s148] ss:$16 sm:%s149]
  %s151 = scalar_lea.vmem %s0, 2
  %s152 = smov 12
  %v153 = vld [vmem:[%s151] ss:$16 sm:%s152]
  %vm154 = vcmask 1043458
  %v155 = vsel %vm154, %v153, %v150
  %s156 = scalar_lea.vmem %s0, 2
  %s157 = smov 48
  %v158 = vld [vmem:[%s156] ss:$16 sm:%s157]
  %vm159 = vcmask 1045508
  %v160 = vsel %vm159, %v158, %v155
  %s161 = scalar_lea.vmem %s0, 2
  %s162 = smov 192
  %v163 = vld [vmem:[%s161] ss:$16 sm:%s162]
  %vm164 = vcmask 1047558
  %v165 = vsel %vm164, %v163, %v160
  %166 = vrot.lane.b32.xlu0 %v165, 64
  %v167 = vpop.permute.xlu0 %166
  %vm168 = vcmask 785920
  %169 = vst.msk [vmem:[%s1] sm:$0xff] %vm168, %v167
  %s170 = scalar_lea.vmem %s0, 130
  %s171 = smov 3
  %v172 = vld [vmem:[%s170] ss:$-124 sm:%s171]
  %s173 = scalar_lea.vmem %s0, 4294967286
  %s174 = smov 12
  %v175 = vld [vmem:[%s173] ss:$16 sm:%s174]
  %vm176 = vcmask 1043458
  %v177 = vsel %vm176, %v175, %v172
  %s178 = scalar_lea.vmem %s0, 4294967286
  %s179 = smov 48
  %v180 = vld [vmem:[%s178] ss:$16 sm:%s179]
  %vm181 = vcmask 1045508
  %v182 = vsel %vm181, %v180, %v177
  %s183 = scalar_lea.vmem %s0, 4294967286
  %s184 = smov 192
  %v185 = vld [vmem:[%s183] ss:$16 sm:%s184]
  %vm186 = vcmask 1047558
  %v187 = vsel %vm186, %v185, %v182
  %188 = vrot.lane.b32.xlu0 %v187, 64
  %v189 = vpop.permute.xlu0 %188
  %vm190 = vcmask 785920
  %s191 = scalar_lea.vmem %s1, 32
  %192 = vst.msk [vmem:[%s191] ss:$-24 sm:$0x3] %vm190, %v189
  %s193 = scalar_lea.vmem %s1, 7
  %194 = vst.msk [vmem:[%s193] sm:$0xfc] %vm190, %v189
  %s195 = scalar_lea.vmem %s0, 134
  %s196 = smov 3
  %v197 = vld [vmem:[%s195] ss:$-16 sm:%s196]
  %s198 = scalar_lea.vmem %s0, 4294967274
  %s199 = smov 12
  %v200 = vld [vmem:[%s198] ss:$16 sm:%s199]
  %vm201 = vcmask 1043458
  %v202 = vsel %vm201, %v200, %v197
  %s203 = scalar_lea.vmem %s0, 4294967274
  %s204 = smov 48
  %v205 = vld [vmem:[%s203] ss:$16 sm:%s204]
  %vm206 = vcmask 1045508
  %v207 = vsel %vm206, %v205, %v202
  %s208 = scalar_lea.vmem %s0, 4294967274
  %s209 = smov 192
  %v210 = vld [vmem:[%s208] ss:$16 sm:%s209]
  %vm211 = vcmask 1047558
  %v212 = vsel %vm211, %v210, %v207
  %213 = vrot.lane.b32.xlu0 %v212, 64
  %v214 = vpop.permute.xlu0 %213
  %vm215 = vcmask 785920
  %s216 = scalar_lea.vmem %s1, 40
  %217 = vst.msk [vmem:[%s216] ss:$-25 sm:$0x3] %vm215, %v214
  %s218 = scalar_lea.vmem %s1, 14
  %219 = vst.msk [vmem:[%s218] sm:$0xfc] %vm215, %v214
  %s220 = scalar_lea.vmem %s0, 138
  %v221 = vld [vmem:[%s220] sm:$0x1]
  %s222 = scalar_lea.vmem %s0, 90
  %s223 = smov 6
  %v224 = vld [vmem:[%s222] ss:$16 sm:%s223]
  %vm225 = vcmask 1042433
  %v226 = vsel %vm225, %v224, %v221
  %s227 = scalar_lea.vmem %s0, 4294967262
  %s228 = smov 24
  %v229 = vld [vmem:[%s227] ss:$16 sm:%s228]
  %vm230 = vcmask 1044483
  %v231 = vsel %vm230, %v229, %v226
  %s232 = scalar_lea.vmem %s0, 4294967262
  %s233 = smov 96
  %v234 = vld [vmem:[%s232] ss:$16 sm:%s233]
  %vm235 = vcmask 1046533
  %v236 = vsel %vm235, %v234, %v231
  %s237 = scalar_lea.vmem %s0, 71
  %v238 = vld [vmem:[%s237] sm:$0x80]
  %vm239 = vcmask 1047559
  %v240 = vsel %vm239, %v238, %v236
  %241 = vrot.lane.b32.xlu0 %v240, 64
  %v242 = vpop.permute.xlu0 %241
  %vm243 = vcmask 785920
  %s244 = scalar_lea.vmem %s1, 48
  %245 = vst.msk [vmem:[%s244] ss:$-26 sm:$0x3] %vm243, %v242
  %s246 = scalar_lea.vmem %s1, 21
  %247 = vst.msk [vmem:[%s246] sm:$0xfc] %vm243, %v242
  %s248 = scalar_lea.vmem %s0, 142
  %s249 = smov 3
  %v250 = vld [vmem:[%s248] ss:$-48 sm:%s249]
  %s251 = scalar_lea.vmem %s0, 78
  %s252 = smov 12
  %v253 = vld [vmem:[%s251] ss:$16 sm:%s252]
  %vm254 = vcmask 1043458
  %v255 = vsel %vm254, %v253, %v250
  %256 = vrot.lane.b32.xlu0 %v255, 64
  %v257 = vpop.permute.xlu0 %256
  %vm258 = vcmask 785920
  %s259 = scalar_lea.vmem %s1, 56
  %260 = vst.msk [vmem:[%s259] ss:$-27 sm:$0x3] %vm258, %v257
  %s261 = scalar_lea.vmem %s1, 28
  %262 = vst.msk [vmem:[%s261] sm:$0xc] %vm258, %v257
  %s263 = scalar_lea.vmem %s0, 1
  %s264 = smov 3
  %v265 = vld [vmem:[%s263] ss:$16 sm:%s264]
  %s266 = scalar_lea.vmem %s0, 1
  %s267 = smov 12
  %v268 = vld [vmem:[%s266] ss:$16 sm:%s267]
  %vm269 = vcmask 1043458
  %v270 = vsel %vm269, %v268, %v265
  %s271 = scalar_lea.vmem %s0, 1
  %s272 = smov 48
  %v273 = vld [vmem:[%s271] ss:$16 sm:%s272]
  %vm274 = vcmask 1045508
  %v275 = vsel %vm274, %v273, %v270
  %s276 = scalar_lea.vmem %s0, 1
  %s277 = smov 192
  %v278 = vld [vmem:[%s276] ss:$16 sm:%s277]
  %vm279 = vcmask 1047558
  %v280 = vsel %vm279, %v278, %v275
  %281 = vrot.lane.b32.xlu0 %v280, 32
  %v282 = vpop.permute.xlu0 %281
  %vm283 = vcmask 523520
  %284 = vst.msk [vmem:[%s1] sm:$0xff] %vm283, %v282
  %s285 = scalar_lea.vmem %s0, 129
  %s286 = smov 3
  %v287 = vld [vmem:[%s285] ss:$-124 sm:%s286]
  %s288 = scalar_lea.vmem %s0, 4294967285
  %s289 = smov 12
  %v290 = vld [vmem:[%s288] ss:$16 sm:%s289]
  %vm291 = vcmask 1043458
  %v292 = vsel %vm291, %v290, %v287
  %s293 = scalar_lea.vmem %s0, 4294967285
  %s294 = smov 48
  %v295 = vld [vmem:[%s293] ss:$16 sm:%s294]
  %vm296 = vcmask 1045508
  %v297 = vsel %vm296, %v295, %v292
  %s298 = scalar_lea.vmem %s0, 4294967285
  %s299 = smov 192
  %v300 = vld [vmem:[%s298] ss:$16 sm:%s299]
  %vm301 = vcmask 1047558
  %v302 = vsel %vm301, %v300, %v297
  %303 = vrot.lane.b32.xlu0 %v302, 32
  %v304 = vpop.permute.xlu0 %303
  %vm305 = vcmask 523520
  %s306 = scalar_lea.vmem %s1, 32
  %307 = vst.msk [vmem:[%s306] ss:$-24 sm:$0x3] %vm305, %v304
  %s308 = scalar_lea.vmem %s1, 7
  %309 = vst.msk [vmem:[%s308] sm:$0xfc] %vm305, %v304
  %s310 = scalar_lea.vmem %s0, 133
  %s311 = smov 3
  %v312 = vld [vmem:[%s310] ss:$-16 sm:%s311]
  %s313 = scalar_lea.vmem %s0, 4294967273
  %s314 = smov 12
  %v315 = vld [vmem:[%s313] ss:$16 sm:%s314]
  %vm316 = vcmask 1043458
  %v317 = vsel %vm316, %v315, %v312
  %s318 = scalar_lea.vmem %s0, 4294967273
  %s319 = smov 48
  %v320 = vld [vmem:[%s318] ss:$16 sm:%s319]
  %vm321 = vcmask 1045508
  %v322 = vsel %vm321, %v320, %v317
  %s323 = scalar_lea.vmem %s0, 4294967273
  %s324 = smov 192
  %v325 = vld [vmem:[%s323] ss:$16 sm:%s324]
  %vm326 = vcmask 1047558
  %v327 = vsel %vm326, %v325, %v322
  %328 = vrot.lane.b32.xlu0 %v327, 32
  %v329 = vpop.permute.xlu0 %328
  %vm330 = vcmask 523520
  %s331 = scalar_lea.vmem %s1, 40
  %332 = vst.msk [vmem:[%s331] ss:$-25 sm:$0x3] %vm330, %v329
  %s333 = scalar_lea.vmem %s1, 14
  %334 = vst.msk [vmem:[%s333] sm:$0xfc] %vm330, %v329
  %s335 = scalar_lea.vmem %s0, 137
  %v336 = vld [vmem:[%s335] sm:$0x1]
  %s337 = scalar_lea.vmem %s0, 89
  %s338 = smov 6
  %v339 = vld [vmem:[%s337] ss:$16 sm:%s338]
  %vm340 = vcmask 1042433
  %v341 = vsel %vm340, %v339, %v336
  %s342 = scalar_lea.vmem %s0, 4294967261
  %s343 = smov 24
  %v344 = vld [vmem:[%s342] ss:$16 sm:%s343]
  %vm345 = vcmask 1044483
  %v346 = vsel %vm345, %v344, %v341
  %s347 = scalar_lea.vmem %s0, 4294967261
  %s348 = smov 96
  %v349 = vld [vmem:[%s347] ss:$16 sm:%s348]
  %vm350 = vcmask 1046533
  %v351 = vsel %vm350, %v349, %v346
  %s352 = scalar_lea.vmem %s0, 70
  %v353 = vld [vmem:[%s352] sm:$0x80]
  %vm354 = vcmask 1047559
  %v355 = vsel %vm354, %v353, %v351
  %356 = vrot.lane.b32.xlu0 %v355, 32
  %v357 = vpop.permute.xlu0 %356
  %vm358 = vcmask 523520
  %s359 = scalar_lea.vmem %s1, 48
  %360 = vst.msk [vmem:[%s359] ss:$-26 sm:$0x3] %vm358, %v357
  %s361 = scalar_lea.vmem %s1, 21
  %362 = vst.msk [vmem:[%s361] sm:$0xfc] %vm358, %v357
  %s363 = scalar_lea.vmem %s0, 141
  %s364 = smov 3
  %v365 = vld [vmem:[%s363] ss:$-48 sm:%s364]
  %s366 = scalar_lea.vmem %s0, 77
  %s367 = smov 12
  %v368 = vld [vmem:[%s366] ss:$16 sm:%s367]
  %vm369 = vcmask 1043458
  %v370 = vsel %vm369, %v368, %v365
  %371 = vrot.lane.b32.xlu0 %v370, 32
  %v372 = vpop.permute.xlu0 %371
  %vm373 = vcmask 523520
  %s374 = scalar_lea.vmem %s1, 56
  %375 = vst.msk [vmem:[%s374] ss:$-27 sm:$0x3] %vm373, %v372
  %s376 = scalar_lea.vmem %s1, 28
  %377 = vst.msk [vmem:[%s376] sm:$0xc] %vm373, %v372

// kernel: sk_bottleneck_forward.3
$region0: #{sk_bottleneck_forward.3}
  #allocation0 [shape = 'u32[]', space=smem, size = 0x4, offset = 0x4, fixed_abs, tag = 'smem constant byte address 0x4 - core index']
  #allocation1 [shape = 'u32[72,128]{1,0:T(1,128)}', space=vmem, size = 0x9000, scoped, tag = 'internal scratch']
  %s0 = inlined_call_operand.vmem [shape: f32[128,128], index: 0, kind: input, shape index: {}]
  %s1 = inlined_call_operand.vmem [shape: f32[128,128], index: 1, kind: input, shape index: {}]
  %s2 = inlined_call_operand.vmem [shape: f32[1,128], index: 2, kind: input, shape index: {}]
  %s3 = inlined_call_operand.vmem [shape: f32[1,128], index: 3, kind: input, shape index: {}]
  %s4 = inlined_call_operand.vmem [shape: f32[128,128], index: 4, kind: output, shape index: {}]
  %s5 = sld [smem:[#allocation0]]
  $region49: #{sk_bottleneck_forward.3} parent=0
    _
  %s7 = ssub.s32 1, %s5
  %s8 = scalar_select 0, %s7, %s5
  loop: start=0, step=1, limit=4
  $region2: #{sk_bottleneck_forward.3} parent=0 // loop_pre_header
    _
  $region3: #{sk_bottleneck_forward.3} parent=0 // loop_header
    %s10 = sphi 0, %s14
    %p11 = scmp.ge.s32.totalorder %s10, 4
    %s20 = sphi 0, %s22
    %s23 = sphi 0, %s20
    %s24 = sphi 0, %s23
    %s40 = sphi 0, %s24
    %s44 = sphi 0, %s44
    %s46 = sphi 0, %s44
    %s47 = sphi 0, %s46
    %s61 = sphi 0, %s47
    %s65 = sphi 0, %s65
    %s67 = sphi 0, %s65
    %s68 = sphi 0, %s67
    %s82 = sphi 0, %s68
    %s86 = sphi 0, %s86
    %s88 = sphi 0, %s86
    %s89 = sphi 0, %s88
    %s103 = sphi 0, %s89
    %s109 = sphi 0, %s111
    %s112 = sphi 0, %s109
    %s113 = sphi 0, %s112
    %s129 = sphi 0, %s113
  $region4: #{sk_bottleneck_forward.3} parent=0 // loop_header_branch
    %13 = sbr.rel (%p11) target = $region8
  $region5: #{sk_bottleneck_forward.3} parent=0 // loop_body
    %s15 = ssub.s32 %s10, 1
    %s16 = ssub.s32 %s10, 2
    %s17 = sadd.s32 %s10, 1
    %s18 = ssub.s32 %s10, %s17
    %p19 = scmp.eq.s32.totalorder %s18, 0
    %s21 = sadd.s32 %s20, 1
    %s22 = scalar_select %p19, %s20, %s21
    %p25 = pneg %p19
    %p26 = scmp.eq.s32.totalorder %s10, 1
    %p27 = por %p25, %p26
    %p28 = scmp.ne.s32.totalorder %s20, %s23
    %p29 = scmp.eq.s32.totalorder %s10, 0
    %p30 = por %p28, %p29
    %p31 = scmp.ne.s32.totalorder %s20, %s23
    %p32 = scmp.eq.s32.totalorder %s15, 1
    %p33 = por %p31, %p32
    %p34 = scmp.ne.s32.totalorder %s23, %s24
    %p35 = scmp.eq.s32.totalorder %s15, 0
    %p36 = por %p34, %p35
    %p37 = scmp.ne.s32.totalorder %s23, %s24
    %p38 = scmp.eq.s32.totalorder %s16, 1
    %p39 = por %p37, %p38
    %p41 = scmp.ne.s32.totalorder %s24, %s40
    %p42 = scmp.eq.s32.totalorder %s16, 0
    %p43 = por %p41, %p42
    %s45 = sadd.s32 %s44, 1
    %p48 = scmp.eq.s32.totalorder %s10, 1
    %p49 = scmp.ne.s32.totalorder %s44, %s46
    %p50 = scmp.eq.s32.totalorder %s10, 0
    %p51 = por %p49, %p50
    %p52 = scmp.ne.s32.totalorder %s44, %s46
    %p53 = scmp.eq.s32.totalorder %s15, 1
    %p54 = por %p52, %p53
    %p55 = scmp.ne.s32.totalorder %s46, %s47
    %p56 = scmp.eq.s32.totalorder %s15, 0
    %p57 = por %p55, %p56
    %p58 = scmp.ne.s32.totalorder %s46, %s47
    %p59 = scmp.eq.s32.totalorder %s16, 1
    %p60 = por %p58, %p59
    %p62 = scmp.ne.s32.totalorder %s47, %s61
    %p63 = scmp.eq.s32.totalorder %s16, 0
    %p64 = por %p62, %p63
    %s66 = sadd.s32 %s65, 1
    %p69 = scmp.eq.s32.totalorder %s10, 1
    %p70 = scmp.ne.s32.totalorder %s65, %s67
    %p71 = scmp.eq.s32.totalorder %s10, 0
    %p72 = por %p70, %p71
    %p73 = scmp.ne.s32.totalorder %s65, %s67
    %p74 = scmp.eq.s32.totalorder %s15, 1
    %p75 = por %p73, %p74
    %p76 = scmp.ne.s32.totalorder %s67, %s68
    %p77 = scmp.eq.s32.totalorder %s15, 0
    %p78 = por %p76, %p77
    %p79 = scmp.ne.s32.totalorder %s67, %s68
    %p80 = scmp.eq.s32.totalorder %s16, 1
    %p81 = por %p79, %p80
    %p83 = scmp.ne.s32.totalorder %s68, %s82
    %p84 = scmp.eq.s32.totalorder %s16, 0
    %p85 = por %p83, %p84
    %s87 = sadd.s32 %s86, 1
    %p90 = scmp.eq.s32.totalorder %s10, 1
    %p91 = scmp.ne.s32.totalorder %s86, %s88
    %p92 = scmp.eq.s32.totalorder %s10, 0
    %p93 = por %p91, %p92
    %p94 = scmp.ne.s32.totalorder %s86, %s88
    %p95 = scmp.eq.s32.totalorder %s15, 1
    %p96 = por %p94, %p95
    %p97 = scmp.ne.s32.totalorder %s88, %s89
    %p98 = scmp.eq.s32.totalorder %s15, 0
    %p99 = por %p97, %p98
    %p100 = scmp.ne.s32.totalorder %s88, %s89
    %p101 = scmp.eq.s32.totalorder %s16, 1
    %p102 = por %p100, %p101
    %p104 = scmp.ne.s32.totalorder %s89, %s103
    %p105 = scmp.eq.s32.totalorder %s16, 0
    %p106 = por %p104, %p105
    %s107 = ssub.s32 %s10, %s17
    %p108 = scmp.eq.s32.totalorder %s107, 0
    %s110 = sadd.s32 %s109, 1
    %s111 = scalar_select %p108, %s109, %s110
    %p114 = pneg %p108
    %p115 = scmp.eq.s32.totalorder %s10, 1
    %p116 = por %p114, %p115
    %p117 = scmp.ne.s32.totalorder %s109, %s112
    %p118 = scmp.eq.s32.totalorder %s10, 0
    %p119 = por %p117, %p118
    %p120 = scmp.ne.s32.totalorder %s109, %s112
    %p121 = scmp.eq.s32.totalorder %s15, 1
    %p122 = por %p120, %p121
    %p123 = scmp.ne.s32.totalorder %s112, %s113
    %p124 = scmp.eq.s32.totalorder %s15, 0
    %p125 = por %p123, %p124
    %p126 = scmp.ne.s32.totalorder %s112, %s113
    %p127 = scmp.eq.s32.totalorder %s16, 1
    %p128 = por %p126, %p127
    %p130 = scmp.ne.s32.totalorder %s113, %s129
    %p131 = scmp.eq.s32.totalorder %s16, 0
    %p132 = por %p130, %p131
    %p133 = scmp.le.s32.totalorder 1, %s10
    %p134 = scmp.lt.s32.totalorder %s10, 3
    %p135 = pnand %p133, %p134
    %p136 = pneg %p135
    // Predicated region
    $region9: #{sk_bottleneck_forward.3} parent=5 // pred_check
      _
    $region10: #{sk_bottleneck_forward.3} parent=5 // pred_check_branch
      %138 = sbr.rel (%p135) target = $region12
    $region11: #{sk_bottleneck_forward.3} parent=5 // pred_region
      %s139 = ssub.s32 %s10, 1
      // Predicated region
      $region13: #{sk_bottleneck_forward.3} parent=11 // pred_check
        %p140 = pneg %p57
      $region14: #{sk_bottleneck_forward.3} parent=11 // pred_check_branch
        %142 = sbr.rel (%p140) target = $region16
      $region15: #{sk_bottleneck_forward.3} parent=11 // pred_region
        _
      $region16: #{sk_bottleneck_forward.3} parent=11 // pred_fallthru
        _
      // Predicated region
      $region17: #{sk_bottleneck_forward.3} parent=11 // pred_check
        %p143 = pneg %p78
      $region18: #{sk_bottleneck_forward.3} parent=11 // pred_check_branch
        %145 = sbr.rel (%p143) target = $region20
      $region19: #{sk_bottleneck_forward.3} parent=11 // pred_region
        _
      $region20: #{sk_bottleneck_forward.3} parent=11 // pred_fallthru
        _
      // Predicated region
      $region21: #{sk_bottleneck_forward.3} parent=11 // pred_check
        %p146 = pneg %p99
      $region22: #{sk_bottleneck_forward.3} parent=11 // pred_check_branch
        %148 = sbr.rel (%p146) target = $region24
      $region23: #{sk_bottleneck_forward.3} parent=11 // pred_region
        _
      $region24: #{sk_bottleneck_forward.3} parent=11 // pred_fallthru
        _
    $region12: #{sk_bottleneck_forward.3} parent=5 // pred_fallthru
      _
    %p149 = scmp.lt.s32.totalorder %s10, 2
    // Predicated region
    $region25: #{sk_bottleneck_forward.3} parent=5 // pred_check
      %p150 = pneg %p149
    $region26: #{sk_bottleneck_forward.3} parent=5 // pred_check_branch
      %152 = sbr.rel (%p150) target = $region28
    $region27: #{sk_bottleneck_forward.3} parent=5 // pred_region
      // Predicated region
      $region29: #{sk_bottleneck_forward.3} parent=27 // pred_check
        %p153 = pneg %p30
      $region30: #{sk_bottleneck_forward.3} parent=27 // pred_check_branch
        %155 = sbr.rel (%p153) target = $region32
      $region31: #{sk_bottleneck_forward.3} parent=27 // pred_region
        %s156 = smul.u32 8, %s10
        %p157 = scmp.lt.s32.totalorder %s156, 15
        %s158 = scalar_select %p157, %s156, 15
        %s159 = smul.addr %s158, 8
        %s160 = scalar_lea.vmem %s0, %s159
        %s161 = smul.u32 8, %s10
      $region32: #{sk_bottleneck_forward.3} parent=27 // pred_fallthru
        _
    $region28: #{sk_bottleneck_forward.3} parent=5 // pred_fallthru
      _
    %p162 = scmp.le.s32.totalorder 1, %s10
    %p163 = scmp.lt.s32.totalorder %s10, 3
    %p164 = pnand %p162, %p163
    %p165 = pneg %p164
    // Predicated region
    $region33: #{sk_bottleneck_forward.3} parent=5 // pred_check
      _
    $region34: #{sk_bottleneck_forward.3} parent=5 // pred_check_branch
      %167 = sbr.rel (%p164) target = $region36
    $region35: #{sk_bottleneck_forward.3} parent=5 // pred_region
      %s168 = ssub.s32 %s10, 1
      %s169 = smul.u32 8, %s15
      %p170 = scmp.lt.s32.totalorder %s169, 15
      %s171 = scalar_select %p170, %s169, 15
      %s172 = smul.addr %s171, 8
      %s173 = scalar_lea.vmem %s0, %s172
      %p174 = pneg %p36
      %p175 = pneg %p33
      %p176 = pneg %p57
      %p177 = pneg %p54
      %p178 = pneg %p78
      %p179 = pneg %p75
      %p180 = pneg %p99
      %p181 = pneg %p96
      %p182 = pneg %p125
      %p183 = pneg %p122
      %s184 = smul.u32 8, %s15
      %p185 = scmp.lt.s32.totalorder %s184, 15
      %s186 = scalar_select %p185, %s184, 15
      %s187 = smul.addr %s186, 8
      %s188 = scalar_lea.vmem %s4, %s187
      %s189 = smul.u32 8, %s15
      %p190 = scmp.lt.s32.totalorder %s189, 15
      %s191 = scalar_select %p190, %s189, 15
      %s192 = smul.addr %s191, 8
      %s193 = scalar_lea.vmem %s0, %s192
      %s194 = smul.u32 8, %s15
      %s195 = smul.u32 8, %s15
      %p196 = scmp.lt.s32.totalorder %s195, 15
      %s197 = scalar_select %p196, %s195, 15
      %s198 = smul.addr %s197, 8
      %s199 = scalar_lea.vmem %s4, %s198
      %s200 = smul.u32 8, %s15
      %v201 = vld [vmem:[%s193] sm:$0xff]
      %v202 = vld [vmem:[%s193 + $0x8] sm:$0xff]
      %v203 = vld [vmem:[%s193 + $0x10] sm:$0xff]
      %v204 = vld [vmem:[%s193 + $0x18] sm:$0xff]
      %v205 = vld [vmem:[%s193 + $0x20] sm:$0xff]
      %v206 = vld [vmem:[%s193 + $0x28] sm:$0xff]
      %v207 = vld [vmem:[%s193 + $0x30] sm:$0xff]
      %v208 = vld [vmem:[%s193 + $0x38] sm:$0xff]
      %v209 = vld [vmem:[%s1] sm:$0xff]
      %v210 = vld [vmem:[%s1 + $0x8] sm:$0xff]
      %v211 = vld [vmem:[%s1 + $0x10] sm:$0xff]
      %v212 = vld [vmem:[%s1 + $0x18] sm:$0xff]
      %v213 = vld [vmem:[%s1 + $0x20] sm:$0xff]
      %v214 = vld [vmem:[%s1 + $0x28] sm:$0xff]
      %v215 = vld [vmem:[%s1 + $0x30] sm:$0xff]
      %v216 = vld [vmem:[%s1 + $0x38] sm:$0xff]
      %v217 = vld [vmem:[%s1 + $0x40] sm:$0xff]
      %v218 = vld [vmem:[%s1 + $0x48] sm:$0xff]
      %v219 = vld [vmem:[%s1 + $0x50] sm:$0xff]
      %v220 = vld [vmem:[%s1 + $0x58] sm:$0xff]
      %v221 = vld [vmem:[%s1 + $0x60] sm:$0xff]
      %v222 = vld [vmem:[%s1 + $0x68] sm:$0xff]
      %v223 = vld [vmem:[%s1 + $0x70] sm:$0xff]
      %v224 = vld [vmem:[%s1 + $0x78] sm:$0xff]
      %225 = vmatpush.msra.mxu0 %v224
      %226 = vmatpush.msra.mxu0 %v223
      %227 = vmatpush.msra.mxu0 %v222
      %228 = vmatpush.msra.mxu0 %v221
      %229 = vmatpush.msra.mxu0 %v220
      %230 = vmatpush.msra.mxu0 %v219
      %231 = vmatpush.msra.mxu0 %v218
      %232 = vmatpush.msra.mxu0 %v217
      %233 = vmatpush.msra.mxu0 %v216
      %234 = vmatpush.msra.mxu0 %v215
      %235 = vmatpush.msra.mxu0 %v214
      %236 = vmatpush.msra.mxu0 %v213
      %237 = vmatpush.msra.mxu0 %v212
      %238 = vmatpush.msra.mxu0 %v211
      %239 = vmatpush.msra.mxu0 %v210
      %240 = vmatpush.msra.mxu0 %v209
      %241 = vmatmul.f32.gmra.mxu0 %v201
      %v242 = vpop.f32.mrf.mxu0
      %v243 = vadd.f32 0.0, %v242
      %244 = vmatmul.f32.gmra.mxu0 %v202
      %v245 = vpop.f32.mrf.mxu0
      %v246 = vadd.f32 0.0, %v245
      %247 = vmatmul.f32.gmra.mxu0 %v203
      %v248 = vpop.f32.mrf.mxu0
      %v249 = vadd.f32 0.0, %v248
      %250 = vmatmul.f32.gmra.mxu0 %v204
      %v251 = vpop.f32.mrf.mxu0
      %v252 = vadd.f32 0.0, %v251
      %253 = vmatmul.f32.gmra.mxu0 %v205
      %v254 = vpop.f32.mrf.mxu0
      %v255 = vadd.f32 0.0, %v254
      %256 = vmatmul.f32.gmra.mxu0 %v206
      %v257 = vpop.f32.mrf.mxu0
      %v258 = vadd.f32 0.0, %v257
      %259 = vmatmul.f32.gmra.mxu0 %v207
      %v260 = vpop.f32.mrf.mxu0
      %v261 = vadd.f32 0.0, %v260
      %262 = vmatmul.f32.gmra.mxu0 %v208
      %v263 = vpop.f32.mrf.mxu0
      %v264 = vadd.f32 0.0, %v263
      %265 = vdwg.mxu0
      %v266 = vld [vmem:[%s2] sm:$0x1]
      %v268 = vperm.slane %v266, 0
      %v270 = vmul.f32 %v243, %v268
      %v271 = vmul.f32 %v246, %v268
      %v272 = vmul.f32 %v249, %v268
      %v273 = vmul.f32 %v252, %v268
      %v274 = vmul.f32 %v255, %v268
      %v275 = vmul.f32 %v258, %v268
      %v276 = vmul.f32 %v261, %v268
      %v277 = vmul.f32 %v264, %v268
      %v278 = vld [vmem:[%s3] sm:$0x1]
      %v280 = vperm.slane %v278, 0
      %v282 = vadd.f32 %v270, %v280
      %v283 = vadd.f32 %v271, %v280
      %v284 = vadd.f32 %v272, %v280
      %v285 = vadd.f32 %v273, %v280
      %v286 = vadd.f32 %v274, %v280
      %v287 = vadd.f32 %v275, %v280
      %v288 = vadd.f32 %v276, %v280
      %v289 = vadd.f32 %v277, %v280
      %v290 = vmax.f32 %v282, 0.0
      %v291 = vmax.f32 %v283, 0.0
      %v292 = vmax.f32 %v284, 0.0
      %v293 = vmax.f32 %v285, 0.0
      %v294 = vmax.f32 %v286, 0.0
      %v295 = vmax.f32 %v287, 0.0
      %v296 = vmax.f32 %v288, 0.0
      %v297 = vmax.f32 %v289, 0.0
      %298 = vst [vmem:[%s199] sm:$0xff] %v290
      %299 = vst [vmem:[%s199 + $0x8] sm:$0xff] %v291
      %300 = vst [vmem:[%s199 + $0x10] sm:$0xff] %v292
      %301 = vst [vmem:[%s199 + $0x18] sm:$0xff] %v293
      %302 = vst [vmem:[%s199 + $0x20] sm:$0xff] %v294
      %303 = vst [vmem:[%s199 + $0x28] sm:$0xff] %v295
      %304 = vst [vmem:[%s199 + $0x30] sm:$0xff] %v296
      %305 = vst [vmem:[%s199 + $0x38] sm:$0xff] %v297
      %s306 = smul.u32 8, %s15
      %p307 = scmp.lt.s32.totalorder %s306, 15
      %s308 = scalar_select %p307, %s306, 15
      %s309 = smul.addr %s308, 8
      %s310 = scalar_lea.vmem %s4, %s309
      // Predicated region
      $region37: #{sk_bottleneck_forward.3} parent=35 // pred_check
        %p311 = pneg %p122
      $region38: #{sk_bottleneck_forward.3} parent=35 // pred_check_branch
        %313 = sbr.rel (%p311) target = $region40
      $region39: #{sk_bottleneck_forward.3} parent=35 // pred_region
        %s314 = smul.u32 8, %s15
      $region40: #{sk_bottleneck_forward.3} parent=35 // pred_fallthru
        _
    $region36: #{sk_bottleneck_forward.3} parent=5 // pred_fallthru
      _
    %p315 = scmp.le.s32.totalorder 2, %s10
    // Predicated region
    $region41: #{sk_bottleneck_forward.3} parent=5 // pred_check
      %p316 = pneg %p315
    $region42: #{sk_bottleneck_forward.3} parent=5 // pred_check_branch
      %318 = sbr.rel (%p316) target = $region44
    $region43: #{sk_bottleneck_forward.3} parent=5 // pred_region
      %s319 = ssub.s32 %s10, 2
      // Predicated region
      $region45: #{sk_bottleneck_forward.3} parent=43 // pred_check
        %p320 = pneg %p128
      $region46: #{sk_bottleneck_forward.3} parent=43 // pred_check_branch
        %322 = sbr.rel (%p320) target = $region48
      $region47: #{sk_bottleneck_forward.3} parent=43 // pred_region
        %s323 = smul.u32 8, %s16
        %p324 = scmp.lt.s32.totalorder %s323, 15
        %s325 = scalar_select %p324, %s323, 15
        %s326 = smul.addr %s325, 8
        %s327 = scalar_lea.vmem %s4, %s326
      $region48: #{sk_bottleneck_forward.3} parent=43 // pred_fallthru
        _
    $region44: #{sk_bottleneck_forward.3} parent=5 // pred_fallthru
      _
  $region6: #{sk_bottleneck_forward.3} parent=0 // loop_footer
    %s14 = sadd.s32 1, %s10
  $region7: #{sk_bottleneck_forward.3} parent=0 // loop_footer_branch
    %9 = sbr.rel target = $region3
  $region8: #{sk_bottleneck_forward.3} parent=0 // loop_exit
    _

// kernel: sk_bottleneck_forward.5
$region0: #{sk_bottleneck_forward.5}
  #allocation0 [shape = 'u32[]', space=smem, size = 0x4, offset = 0x4, fixed_abs, tag = 'smem constant byte address 0x4 - core index']
  #allocation1 [shape = 'u32[72,128]{1,0:T(1,128)}', space=vmem, size = 0x9000, scoped, tag = 'internal scratch']
  %s0 = inlined_call_operand.vmem [shape: f32[128,128], index: 0, kind: input, shape index: {}]
  %s1 = inlined_call_operand.vmem [shape: f32[128,256], index: 1, kind: input, shape index: {}]
  %s2 = inlined_call_operand.vmem [shape: f32[1,256], index: 2, kind: input, shape index: {}]
  %s3 = inlined_call_operand.vmem [shape: f32[1,256], index: 3, kind: input, shape index: {}]
  %s4 = inlined_call_operand.vmem [shape: f32[128,128], index: 4, kind: input, shape index: {}]
  %s5 = inlined_call_operand.vmem [shape: f32[128,256], index: 5, kind: input, shape index: {}]
  %s6 = inlined_call_operand.vmem [shape: f32[1,256], index: 6, kind: input, shape index: {}]
  %s7 = inlined_call_operand.vmem [shape: f32[1,256], index: 7, kind: input, shape index: {}]
  %s8 = inlined_call_operand.vmem [shape: f32[128,256], index: 8, kind: output, shape index: {}]
  %s9 = sld [smem:[#allocation0]]
  $region65: #{sk_bottleneck_forward.5} parent=0
    _
  %s11 = ssub.s32 1, %s9
  %s12 = scalar_select 0, %s11, %s9
  loop: start=0, step=1, limit=4
  $region2: #{sk_bottleneck_forward.5} parent=0 // loop_pre_header
    _
  $region3: #{sk_bottleneck_forward.5} parent=0 // loop_header
    %s14 = sphi 0, %s18
    %p15 = scmp.ge.s32.totalorder %s14, 4
    %s24 = sphi 0, %s26
    %s27 = sphi 0, %s24
    %s28 = sphi 0, %s27
    %s44 = sphi 0, %s28
    %s48 = sphi 0, %s48
    %s50 = sphi 0, %s48
    %s51 = sphi 0, %s50
    %s65 = sphi 0, %s51
    %s69 = sphi 0, %s69
    %s71 = sphi 0, %s69
    %s72 = sphi 0, %s71
    %s86 = sphi 0, %s72
    %s90 = sphi 0, %s90
    %s92 = sphi 0, %s90
    %s93 = sphi 0, %s92
    %s107 = sphi 0, %s93
    %s113 = sphi 0, %s115
    %s116 = sphi 0, %s113
    %s117 = sphi 0, %s116
    %s133 = sphi 0, %s117
    %s137 = sphi 0, %s137
    %s139 = sphi 0, %s137
    %s140 = sphi 0, %s139
    %s154 = sphi 0, %s140
    %s158 = sphi 0, %s158
    %s160 = sphi 0, %s158
    %s161 = sphi 0, %s160
    %s175 = sphi 0, %s161
    %s179 = sphi 0, %s179
    %s181 = sphi 0, %s179
    %s182 = sphi 0, %s181
    %s196 = sphi 0, %s182
    %s202 = sphi 0, %s204
    %s205 = sphi 0, %s202
    %s206 = sphi 0, %s205
    %s222 = sphi 0, %s206
  $region4: #{sk_bottleneck_forward.5} parent=0 // loop_header_branch
    %17 = sbr.rel (%p15) target = $region8
  $region5: #{sk_bottleneck_forward.5} parent=0 // loop_body
    %s19 = ssub.s32 %s14, 1
    %s20 = ssub.s32 %s14, 2
    %s21 = sadd.s32 %s14, 1
    %s22 = ssub.s32 %s14, %s21
    %p23 = scmp.eq.s32.totalorder %s22, 0
    %s25 = sadd.s32 %s24, 1
    %s26 = scalar_select %p23, %s24, %s25
    %p29 = pneg %p23
    %p30 = scmp.eq.s32.totalorder %s14, 1
    %p31 = por %p29, %p30
    %p32 = scmp.ne.s32.totalorder %s24, %s27
    %p33 = scmp.eq.s32.totalorder %s14, 0
    %p34 = por %p32, %p33
    %p35 = scmp.ne.s32.totalorder %s24, %s27
    %p36 = scmp.eq.s32.totalorder %s19, 1
    %p37 = por %p35, %p36
    %p38 = scmp.ne.s32.totalorder %s27, %s28
    %p39 = scmp.eq.s32.totalorder %s19, 0
    %p40 = por %p38, %p39
    %p41 = scmp.ne.s32.totalorder %s27, %s28
    %p42 = scmp.eq.s32.totalorder %s20, 1
    %p43 = por %p41, %p42
    %p45 = scmp.ne.s32.totalorder %s28, %s44
    %p46 = scmp.eq.s32.totalorder %s20, 0
    %p47 = por %p45, %p46
    %s49 = sadd.s32 %s48, 1
    %p52 = scmp.eq.s32.totalorder %s14, 1
    %p53 = scmp.ne.s32.totalorder %s48, %s50
    %p54 = scmp.eq.s32.totalorder %s14, 0
    %p55 = por %p53, %p54
    %p56 = scmp.ne.s32.totalorder %s48, %s50
    %p57 = scmp.eq.s32.totalorder %s19, 1
    %p58 = por %p56, %p57
    %p59 = scmp.ne.s32.totalorder %s50, %s51
    %p60 = scmp.eq.s32.totalorder %s19, 0
    %p61 = por %p59, %p60
    %p62 = scmp.ne.s32.totalorder %s50, %s51
    %p63 = scmp.eq.s32.totalorder %s20, 1
    %p64 = por %p62, %p63
    %p66 = scmp.ne.s32.totalorder %s51, %s65
    %p67 = scmp.eq.s32.totalorder %s20, 0
    %p68 = por %p66, %p67
    %s70 = sadd.s32 %s69, 1
    %p73 = scmp.eq.s32.totalorder %s14, 1
    %p74 = scmp.ne.s32.totalorder %s69, %s71
    %p75 = scmp.eq.s32.totalorder %s14, 0
    %p76 = por %p74, %p75
    %p77 = scmp.ne.s32.totalorder %s69, %s71
    %p78 = scmp.eq.s32.totalorder %s19, 1
    %p79 = por %p77, %p78
    %p80 = scmp.ne.s32.totalorder %s71, %s72
    %p81 = scmp.eq.s32.totalorder %s19, 0
    %p82 = por %p80, %p81
    %p83 = scmp.ne.s32.totalorder %s71, %s72
    %p84 = scmp.eq.s32.totalorder %s20, 1
    %p85 = por %p83, %p84
    %p87 = scmp.ne.s32.totalorder %s72, %s86
    %p88 = scmp.eq.s32.totalorder %s20, 0
    %p89 = por %p87, %p88
    %s91 = sadd.s32 %s90, 1
    %p94 = scmp.eq.s32.totalorder %s14, 1
    %p95 = scmp.ne.s32.totalorder %s90, %s92
    %p96 = scmp.eq.s32.totalorder %s14, 0
    %p97 = por %p95, %p96
    %p98 = scmp.ne.s32.totalorder %s90, %s92
    %p99 = scmp.eq.s32.totalorder %s19, 1
    %p100 = por %p98, %p99
    %p101 = scmp.ne.s32.totalorder %s92, %s93
    %p102 = scmp.eq.s32.totalorder %s19, 0
    %p103 = por %p101, %p102
    %p104 = scmp.ne.s32.totalorder %s92, %s93
    %p105 = scmp.eq.s32.totalorder %s20, 1
    %p106 = por %p104, %p105
    %p108 = scmp.ne.s32.totalorder %s93, %s107
    %p109 = scmp.eq.s32.totalorder %s20, 0
    %p110 = por %p108, %p109
    %s111 = ssub.s32 %s14, %s21
    %p112 = scmp.eq.s32.totalorder %s111, 0
    %s114 = sadd.s32 %s113, 1
    %s115 = scalar_select %p112, %s113, %s114
    %p118 = pneg %p112
    %p119 = scmp.eq.s32.totalorder %s14, 1
    %p120 = por %p118, %p119
    %p121 = scmp.ne.s32.totalorder %s113, %s116
    %p122 = scmp.eq.s32.totalorder %s14, 0
    %p123 = por %p121, %p122
    %p124 = scmp.ne.s32.totalorder %s113, %s116
    %p125 = scmp.eq.s32.totalorder %s19, 1
    %p126 = por %p124, %p125
    %p127 = scmp.ne.s32.totalorder %s116, %s117
    %p128 = scmp.eq.s32.totalorder %s19, 0
    %p129 = por %p127, %p128
    %p130 = scmp.ne.s32.totalorder %s116, %s117
    %p131 = scmp.eq.s32.totalorder %s20, 1
    %p132 = por %p130, %p131
    %p134 = scmp.ne.s32.totalorder %s117, %s133
    %p135 = scmp.eq.s32.totalorder %s20, 0
    %p136 = por %p134, %p135
    %s138 = sadd.s32 %s137, 1
    %p141 = scmp.eq.s32.totalorder %s14, 1
    %p142 = scmp.ne.s32.totalorder %s137, %s139
    %p143 = scmp.eq.s32.totalorder %s14, 0
    %p144 = por %p142, %p143
    %p145 = scmp.ne.s32.totalorder %s137, %s139
    %p146 = scmp.eq.s32.totalorder %s19, 1
    %p147 = por %p145, %p146
    %p148 = scmp.ne.s32.totalorder %s139, %s140
    %p149 = scmp.eq.s32.totalorder %s19, 0
    %p150 = por %p148, %p149
    %p151 = scmp.ne.s32.totalorder %s139, %s140
    %p152 = scmp.eq.s32.totalorder %s20, 1
    %p153 = por %p151, %p152
    %p155 = scmp.ne.s32.totalorder %s140, %s154
    %p156 = scmp.eq.s32.totalorder %s20, 0
    %p157 = por %p155, %p156
    %s159 = sadd.s32 %s158, 1
    %p162 = scmp.eq.s32.totalorder %s14, 1
    %p163 = scmp.ne.s32.totalorder %s158, %s160
    %p164 = scmp.eq.s32.totalorder %s14, 0
    %p165 = por %p163, %p164
    %p166 = scmp.ne.s32.totalorder %s158, %s160
    %p167 = scmp.eq.s32.totalorder %s19, 1
    %p168 = por %p166, %p167
    %p169 = scmp.ne.s32.totalorder %s160, %s161
    %p170 = scmp.eq.s32.totalorder %s19, 0
    %p171 = por %p169, %p170
    %p172 = scmp.ne.s32.totalorder %s160, %s161
    %p173 = scmp.eq.s32.totalorder %s20, 1
    %p174 = por %p172, %p173
    %p176 = scmp.ne.s32.totalorder %s161, %s175
    %p177 = scmp.eq.s32.totalorder %s20, 0
    %p178 = por %p176, %p177
    %s180 = sadd.s32 %s179, 1
    %p183 = scmp.eq.s32.totalorder %s14, 1
    %p184 = scmp.ne.s32.totalorder %s179, %s181
    %p185 = scmp.eq.s32.totalorder %s14, 0
    %p186 = por %p184, %p185
    %p187 = scmp.ne.s32.totalorder %s179, %s181
    %p188 = scmp.eq.s32.totalorder %s19, 1
    %p189 = por %p187, %p188
    %p190 = scmp.ne.s32.totalorder %s181, %s182
    %p191 = scmp.eq.s32.totalorder %s19, 0
    %p192 = por %p190, %p191
    %p193 = scmp.ne.s32.totalorder %s181, %s182
    %p194 = scmp.eq.s32.totalorder %s20, 1
    %p195 = por %p193, %p194
    %p197 = scmp.ne.s32.totalorder %s182, %s196
    %p198 = scmp.eq.s32.totalorder %s20, 0
    %p199 = por %p197, %p198
    %s200 = ssub.s32 %s14, %s21
    %p201 = scmp.eq.s32.totalorder %s200, 0
    %s203 = sadd.s32 %s202, 1
    %s204 = scalar_select %p201, %s202, %s203
    %p207 = pneg %p201
    %p208 = scmp.eq.s32.totalorder %s14, 1
    %p209 = por %p207, %p208
    %p210 = scmp.ne.s32.totalorder %s202, %s205
    %p211 = scmp.eq.s32.totalorder %s14, 0
    %p212 = por %p210, %p211
    %p213 = scmp.ne.s32.totalorder %s202, %s205
    %p214 = scmp.eq.s32.totalorder %s19, 1
    %p215 = por %p213, %p214
    %p216 = scmp.ne.s32.totalorder %s205, %s206
    %p217 = scmp.eq.s32.totalorder %s19, 0
    %p218 = por %p216, %p217
    %p219 = scmp.ne.s32.totalorder %s205, %s206
    %p220 = scmp.eq.s32.totalorder %s20, 1
    %p221 = por %p219, %p220
    %p223 = scmp.ne.s32.totalorder %s206, %s222
    %p224 = scmp.eq.s32.totalorder %s20, 0
    %p225 = por %p223, %p224
    %p226 = scmp.le.s32.totalorder 1, %s14
    %p227 = scmp.lt.s32.totalorder %s14, 3
    %p228 = pnand %p226, %p227
    %p229 = pneg %p228
    // Predicated region
    $region9: #{sk_bottleneck_forward.5} parent=5 // pred_check
      _
    $region10: #{sk_bottleneck_forward.5} parent=5 // pred_check_branch
      %231 = sbr.rel (%p228) target = $region12
    $region11: #{sk_bottleneck_forward.5} parent=5 // pred_region
      %s232 = ssub.s32 %s14, 1
      // Predicated region
      $region13: #{sk_bottleneck_forward.5} parent=11 // pred_check
        %p233 = pneg %p61
      $region14: #{sk_bottleneck_forward.5} parent=11 // pred_check_branch
        %235 = sbr.rel (%p233) target = $region16
      $region15: #{sk_bottleneck_forward.5} parent=11 // pred_region
        _
      $region16: #{sk_bottleneck_forward.5} parent=11 // pred_fallthru
        _
      // Predicated region
      $region17: #{sk_bottleneck_forward.5} parent=11 // pred_check
        %p236 = pneg %p82
      $region18: #{sk_bottleneck_forward.5} parent=11 // pred_check_branch
        %238 = sbr.rel (%p236) target = $region20
      $region19: #{sk_bottleneck_forward.5} parent=11 // pred_region
        _
      $region20: #{sk_bottleneck_forward.5} parent=11 // pred_fallthru
        _
      // Predicated region
      $region21: #{sk_bottleneck_forward.5} parent=11 // pred_check
        %p239 = pneg %p103
      $region22: #{sk_bottleneck_forward.5} parent=11 // pred_check_branch
        %241 = sbr.rel (%p239) target = $region24
      $region23: #{sk_bottleneck_forward.5} parent=11 // pred_region
        _
      $region24: #{sk_bottleneck_forward.5} parent=11 // pred_fallthru
        _
      // Predicated region
      $region25: #{sk_bottleneck_forward.5} parent=11 // pred_check
        %p242 = pneg %p150
      $region26: #{sk_bottleneck_forward.5} parent=11 // pred_check_branch
        %244 = sbr.rel (%p242) target = $region28
      $region27: #{sk_bottleneck_forward.5} parent=11 // pred_region
        _
      $region28: #{sk_bottleneck_forward.5} parent=11 // pred_fallthru
        _
      // Predicated region
      $region29: #{sk_bottleneck_forward.5} parent=11 // pred_check
        %p245 = pneg %p171
      $region30: #{sk_bottleneck_forward.5} parent=11 // pred_check_branch
        %247 = sbr.rel (%p245) target = $region32
      $region31: #{sk_bottleneck_forward.5} parent=11 // pred_region
        _
      $region32: #{sk_bottleneck_forward.5} parent=11 // pred_fallthru
        _
      // Predicated region
      $region33: #{sk_bottleneck_forward.5} parent=11 // pred_check
        %p248 = pneg %p192
      $region34: #{sk_bottleneck_forward.5} parent=11 // pred_check_branch
        %250 = sbr.rel (%p248) target = $region36
      $region35: #{sk_bottleneck_forward.5} parent=11 // pred_region
        _
      $region36: #{sk_bottleneck_forward.5} parent=11 // pred_fallthru
        _
    $region12: #{sk_bottleneck_forward.5} parent=5 // pred_fallthru
      _
    %p251 = scmp.lt.s32.totalorder %s14, 2
    // Predicated region
    $region37: #{sk_bottleneck_forward.5} parent=5 // pred_check
      %p252 = pneg %p251
    $region38: #{sk_bottleneck_forward.5} parent=5 // pred_check_branch
      %254 = sbr.rel (%p252) target = $region40
    $region39: #{sk_bottleneck_forward.5} parent=5 // pred_region
      // Predicated region
      $region41: #{sk_bottleneck_forward.5} parent=39 // pred_check
        %p255 = pneg %p34
      $region42: #{sk_bottleneck_forward.5} parent=39 // pred_check_branch
        %257 = sbr.rel (%p255) target = $region44
      $region43: #{sk_bottleneck_forward.5} parent=39 // pred_region
        %s258 = smul.u32 8, %s14
        %p259 = scmp.lt.s32.totalorder %s258, 15
        %s260 = scalar_select %p259, %s258, 15
        %s261 = smul.addr %s260, 8
        %s262 = scalar_lea.vmem %s0, %s261
        %s263 = smul.u32 8, %s14
      $region44: #{sk_bottleneck_forward.5} parent=39 // pred_fallthru
        _
      // Predicated region
      $region45: #{sk_bottleneck_forward.5} parent=39 // pred_check
        %p264 = pneg %p123
      $region46: #{sk_bottleneck_forward.5} parent=39 // pred_check_branch
        %266 = sbr.rel (%p264) target = $region48
      $region47: #{sk_bottleneck_forward.5} parent=39 // pred_region
        %s267 = smul.u32 8, %s14
        %p268 = scmp.lt.s32.totalorder %s267, 15
        %s269 = scalar_select %p268, %s267, 15
        %s270 = smul.addr %s269, 8
        %s271 = scalar_lea.vmem %s4, %s270
        %s272 = smul.u32 8, %s14
      $region48: #{sk_bottleneck_forward.5} parent=39 // pred_fallthru
        _
    $region40: #{sk_bottleneck_forward.5} parent=5 // pred_fallthru
      _
    %p273 = scmp.le.s32.totalorder 1, %s14
    %p274 = scmp.lt.s32.totalorder %s14, 3
    %p275 = pnand %p273, %p274
    %p276 = pneg %p275
    // Predicated region
    $region49: #{sk_bottleneck_forward.5} parent=5 // pred_check
      _
    $region50: #{sk_bottleneck_forward.5} parent=5 // pred_check_branch
      %278 = sbr.rel (%p275) target = $region52
    $region51: #{sk_bottleneck_forward.5} parent=5 // pred_region
      %s279 = ssub.s32 %s14, 1
      %s280 = smul.u32 8, %s19
      %p281 = scmp.lt.s32.totalorder %s280, 15
      %s282 = scalar_select %p281, %s280, 15
      %s283 = smul.addr %s282, 8
      %s284 = scalar_lea.vmem %s0, %s283
      %p285 = pneg %p40
      %p286 = pneg %p37
      %p287 = pneg %p61
      %p288 = pneg %p58
      %p289 = pneg %p82
      %p290 = pneg %p79
      %p291 = pneg %p103
      %p292 = pneg %p100
      %s293 = smul.u32 8, %s19
      %p294 = scmp.lt.s32.totalorder %s293, 15
      %s295 = scalar_select %p294, %s293, 15
      %s296 = smul.addr %s295, 8
      %s297 = scalar_lea.vmem %s4, %s296
      %p298 = pneg %p129
      %p299 = pneg %p126
      %p300 = pneg %p150
      %p301 = pneg %p147
      %p302 = pneg %p171
      %p303 = pneg %p168
      %p304 = pneg %p192
      %p305 = pneg %p189
      %p306 = pneg %p218
      %p307 = pneg %p215
      %s308 = smul.u32 8, %s19
      %p309 = scmp.lt.s32.totalorder %s308, 15
      %s310 = scalar_select %p309, %s308, 15
      %s311 = smul.addr %s310, 2
      %s312 = smul.addr %s311, 8
      %s313 = scalar_lea.vmem %s8, %s312
      %s314 = smul.u32 8, %s19
      %p315 = scmp.lt.s32.totalorder %s314, 15
      %s316 = scalar_select %p315, %s314, 15
      %s317 = smul.addr %s316, 8
      %s318 = scalar_lea.vmem %s0, %s317
      %s319 = smul.u32 8, %s19
      %s320 = smul.u32 8, %s19
      %p321 = scmp.lt.s32.totalorder %s320, 15
      %s322 = scalar_select %p321, %s320, 15
      %s323 = smul.addr %s322, 8
      %s324 = scalar_lea.vmem %s4, %s323
      %s325 = smul.u32 8, %s19
      %s326 = smul.u32 8, %s19
      %p327 = scmp.lt.s32.totalorder %s326, 15
      %s328 = scalar_select %p327, %s326, 15
      %s329 = smul.addr %s328, 2
      %s330 = smul.addr %s329, 8
      %s331 = scalar_lea.vmem %s8, %s330
      %s332 = smul.u32 8, %s19
      %v333 = vld [vmem:[%s318] sm:$0xff]
      %v334 = vld [vmem:[%s318 + $0x8] sm:$0xff]
      %v335 = vld [vmem:[%s318 + $0x10] sm:$0xff]
      %v336 = vld [vmem:[%s318 + $0x18] sm:$0xff]
      %v337 = vld [vmem:[%s318 + $0x20] sm:$0xff]
      %v338 = vld [vmem:[%s318 + $0x28] sm:$0xff]
      %v339 = vld [vmem:[%s318 + $0x30] sm:$0xff]
      %v340 = vld [vmem:[%s318 + $0x38] sm:$0xff]
      %v341 = vld [vmem:[%s1] sm:$0xff]
      %v342 = vld [vmem:[%s1 + $0x8] sm:$0xff]
      %v343 = vld [vmem:[%s1 + $0x10] sm:$0xff]
      %v344 = vld [vmem:[%s1 + $0x18] sm:$0xff]
      %v345 = vld [vmem:[%s1 + $0x20] sm:$0xff]
      %v346 = vld [vmem:[%s1 + $0x28] sm:$0xff]
      %v347 = vld [vmem:[%s1 + $0x30] sm:$0xff]
      %v348 = vld [vmem:[%s1 + $0x38] sm:$0xff]
      %v349 = vld [vmem:[%s1 + $0x40] sm:$0xff]
      %v350 = vld [vmem:[%s1 + $0x48] sm:$0xff]
      %v351 = vld [vmem:[%s1 + $0x50] sm:$0xff]
      %v352 = vld [vmem:[%s1 + $0x58] sm:$0xff]
      %v353 = vld [vmem:[%s1 + $0x60] sm:$0xff]
      %v354 = vld [vmem:[%s1 + $0x68] sm:$0xff]
      %v355 = vld [vmem:[%s1 + $0x70] sm:$0xff]
      %v356 = vld [vmem:[%s1 + $0x78] sm:$0xff]
      %v357 = vld [vmem:[%s1 + $0x80] sm:$0xff]
      %v358 = vld [vmem:[%s1 + $0x88] sm:$0xff]
      %v359 = vld [vmem:[%s1 + $0x90] sm:$0xff]
      %v360 = vld [vmem:[%s1 + $0x98] sm:$0xff]
      %v361 = vld [vmem:[%s1 + $0xa0] sm:$0xff]
      %v362 = vld [vmem:[%s1 + $0xa8] sm:$0xff]
      %v363 = vld [vmem:[%s1 + $0xb0] sm:$0xff]
      %v364 = vld [vmem:[%s1 + $0xb8] sm:$0xff]
      %v365 = vld [vmem:[%s1 + $0xc0] sm:$0xff]
      %v366 = vld [vmem:[%s1 + $0xc8] sm:$0xff]
      %v367 = vld [vmem:[%s1 + $0xd0] sm:$0xff]
      %v368 = vld [vmem:[%s1 + $0xd8] sm:$0xff]
      %v369 = vld [vmem:[%s1 + $0xe0] sm:$0xff]
      %v370 = vld [vmem:[%s1 + $0xe8] sm:$0xff]
      %v371 = vld [vmem:[%s1 + $0xf0] sm:$0xff]
      %v372 = vld [vmem:[%s1 + $0xf8] sm:$0xff]
      %373 = vmatpush.msra.mxu0 %v371
      %374 = vmatpush.msra.mxu0 %v369
      %375 = vmatpush.msra.mxu0 %v367
      %376 = vmatpush.msra.mxu0 %v365
      %377 = vmatpush.msra.mxu0 %v363
      %378 = vmatpush.msra.mxu0 %v361
      %379 = vmatpush.msra.mxu0 %v359
      %380 = vmatpush.msra.mxu0 %v357
      %381 = vmatpush.msra.mxu0 %v355
      %382 = vmatpush.msra.mxu0 %v353
      %383 = vmatpush.msra.mxu0 %v351
      %384 = vmatpush.msra.mxu0 %v349
      %385 = vmatpush.msra.mxu0 %v347
      %386 = vmatpush.msra.mxu0 %v345
      %387 = vmatpush.msra.mxu0 %v343
      %388 = vmatpush.msra.mxu0 %v341
      %389 = vmatmul.f32.gmra.mxu0 %v333
      %v390 = vpop.f32.mrf.mxu0
      %v391 = vadd.f32 0.0, %v390
      %392 = vmatmul.f32.gmra.mxu0 %v334
      %v393 = vpop.f32.mrf.mxu0
      %v394 = vadd.f32 0.0, %v393
      %395 = vmatmul.f32.gmra.mxu0 %v335
      %v396 = vpop.f32.mrf.mxu0
      %v397 = vadd.f32 0.0, %v396
      %398 = vmatmul.f32.gmra.mxu0 %v336
      %v399 = vpop.f32.mrf.mxu0
      %v400 = vadd.f32 0.0, %v399
      %401 = vmatmul.f32.gmra.mxu0 %v337
      %v402 = vpop.f32.mrf.mxu0
      %v403 = vadd.f32 0.0, %v402
      %404 = vmatmul.f32.gmra.mxu0 %v338
      %v405 = vpop.f32.mrf.mxu0
      %v406 = vadd.f32 0.0, %v405
      %407 = vmatmul.f32.gmra.mxu0 %v339
      %v408 = vpop.f32.mrf.mxu0
      %v409 = vadd.f32 0.0, %v408
      %410 = vmatmul.f32.gmra.mxu0 %v340
      %v411 = vpop.f32.mrf.mxu0
      %v412 = vadd.f32 0.0, %v411
      %413 = vdwg.mxu0
      %414 = vmatpush.msra.mxu0 %v372
      %415 = vmatpush.msra.mxu0 %v370
      %416 = vmatpush.msra.mxu0 %v368
      %417 = vmatpush.msra.mxu0 %v366
      %418 = vmatpush.msra.mxu0 %v364
      %419 = vmatpush.msra.mxu0 %v362
      %420 = vmatpush.msra.mxu0 %v360
      %421 = vmatpush.msra.mxu0 %v358
      %422 = vmatpush.msra.mxu0 %v356
      %423 = vmatpush.msra.mxu0 %v354
      %424 = vmatpush.msra.mxu0 %v352
      %425 = vmatpush.msra.mxu0 %v350
      %426 = vmatpush.msra.mxu0 %v348
      %427 = vmatpush.msra.mxu0 %v346
      %428 = vmatpush.msra.mxu0 %v344
      %429 = vmatpush.msra.mxu0 %v342
      %430 = vmatmul.f32.gmra.mxu0 %v333
      %v431 = vpop.f32.mrf.mxu0
      %v432 = vadd.f32 0.0, %v431
      %433 = vmatmul.f32.gmra.mxu0 %v334
      %v434 = vpop.f32.mrf.mxu0
      %v435 = vadd.f32 0.0, %v434
      %436 = vmatmul.f32.gmra.mxu0 %v335
      %v437 = vpop.f32.mrf.mxu0
      %v438 = vadd.f32 0.0, %v437
      %439 = vmatmul.f32.gmra.mxu0 %v336
      %v440 = vpop.f32.mrf.mxu0
      %v441 = vadd.f32 0.0, %v440
      %442 = vmatmul.f32.gmra.mxu0 %v337
      %v443 = vpop.f32.mrf.mxu0
      %v444 = vadd.f32 0.0, %v443
      %445 = vmatmul.f32.gmra.mxu0 %v338
      %v446 = vpop.f32.mrf.mxu0
      %v447 = vadd.f32 0.0, %v446
      %448 = vmatmul.f32.gmra.mxu0 %v339
      %v449 = vpop.f32.mrf.mxu0
      %v450 = vadd.f32 0.0, %v449
      %451 = vmatmul.f32.gmra.mxu0 %v340
      %v452 = vpop.f32.mrf.mxu0
      %v453 = vadd.f32 0.0, %v452
      %454 = vdwg.mxu0
      %v455 = vld [vmem:[%s2] sm:$0x3]
      %v457 = vperm.slane %v455, 0
      %v458 = vperm.slane %v455, 1
      %v461 = vmul.f32 %v391, %v457
      %v462 = vmul.f32 %v432, %v458
      %v463 = vmul.f32 %v394, %v457
      %v464 = vmul.f32 %v435, %v458
      %v465 = vmul.f32 %v397, %v457
      %v466 = vmul.f32 %v438, %v458
      %v467 = vmul.f32 %v400, %v457
      %v468 = vmul.f32 %v441, %v458
      %v469 = vmul.f32 %v403, %v457
      %v470 = vmul.f32 %v444, %v458
      %v471 = vmul.f32 %v406, %v457
      %v472 = vmul.f32 %v447, %v458
      %v473 = vmul.f32 %v409, %v457
      %v474 = vmul.f32 %v450, %v458
      %v475 = vmul.f32 %v412, %v457
      %v476 = vmul.f32 %v453, %v458
      %v477 = vld [vmem:[%s3] sm:$0x3]
      %v479 = vperm.slane %v477, 0
      %v480 = vperm.slane %v477, 1
      %v483 = vadd.f32 %v461, %v479
      %v484 = vadd.f32 %v462, %v480
      %v485 = vadd.f32 %v463, %v479
      %v486 = vadd.f32 %v464, %v480
      %v487 = vadd.f32 %v465, %v479
      %v488 = vadd.f32 %v466, %v480
      %v489 = vadd.f32 %v467, %v479
      %v490 = vadd.f32 %v468, %v480
      %v491 = vadd.f32 %v469, %v479
      %v492 = vadd.f32 %v470, %v480
      %v493 = vadd.f32 %v471, %v479
      %v494 = vadd.f32 %v472, %v480
      %v495 = vadd.f32 %v473, %v479
      %v496 = vadd.f32 %v474, %v480
      %v497 = vadd.f32 %v475, %v479
      %v498 = vadd.f32 %v476, %v480
      %v499 = vmax.f32 %v483, 0.0
      %v500 = vmax.f32 %v484, 0.0
      %v501 = vmax.f32 %v485, 0.0
      %v502 = vmax.f32 %v486, 0.0
      %v503 = vmax.f32 %v487, 0.0
      %v504 = vmax.f32 %v488, 0.0
      %v505 = vmax.f32 %v489, 0.0
      %v506 = vmax.f32 %v490, 0.0
      %v507 = vmax.f32 %v491, 0.0
      %v508 = vmax.f32 %v492, 0.0
      %v509 = vmax.f32 %v493, 0.0
      %v510 = vmax.f32 %v494, 0.0
      %v511 = vmax.f32 %v495, 0.0
      %v512 = vmax.f32 %v496, 0.0
      %v513 = vmax.f32 %v497, 0.0
      %v514 = vmax.f32 %v498, 0.0
      %v515 = vld [vmem:[%s324] sm:$0xff]
      %v516 = vld [vmem:[%s324 + $0x8] sm:$0xff]
      %v517 = vld [vmem:[%s324 + $0x10] sm:$0xff]
      %v518 = vld [vmem:[%s324 + $0x18] sm:$0xff]
      %v519 = vld [vmem:[%s324 + $0x20] sm:$0xff]
      %v520 = vld [vmem:[%s324 + $0x28] sm:$0xff]
      %v521 = vld [vmem:[%s324 + $0x30] sm:$0xff]
      %v522 = vld [vmem:[%s324 + $0x38] sm:$0xff]
      %v523 = vld [vmem:[%s5] sm:$0xff]
      %v524 = vld [vmem:[%s5 + $0x8] sm:$0xff]
      %v525 = vld [vmem:[%s5 + $0x10] sm:$0xff]
      %v526 = vld [vmem:[%s5 + $0x18] sm:$0xff]
      %v527 = vld [vmem:[%s5 + $0x20] sm:$0xff]
      %v528 = vld [vmem:[%s5 + $0x28] sm:$0xff]
      %v529 = vld [vmem:[%s5 + $0x30] sm:$0xff]
      %v530 = vld [vmem:[%s5 + $0x38] sm:$0xff]
      %v531 = vld [vmem:[%s5 + $0x40] sm:$0xff]
      %v532 = vld [vmem:[%s5 + $0x48] sm:$0xff]
      %v533 = vld [vmem:[%s5 + $0x50] sm:$0xff]
      %v534 = vld [vmem:[%s5 + $0x58] sm:$0xff]
      %v535 = vld [vmem:[%s5 + $0x60] sm:$0xff]
      %v536 = vld [vmem:[%s5 + $0x68] sm:$0xff]
      %v537 = vld [vmem:[%s5 + $0x70] sm:$0xff]
      %v538 = vld [vmem:[%s5 + $0x78] sm:$0xff]
      %v539 = vld [vmem:[%s5 + $0x80] sm:$0xff]
      %v540 = vld [vmem:[%s5 + $0x88] sm:$0xff]
      %v541 = vld [vmem:[%s5 + $0x90] sm:$0xff]
      %v542 = vld [vmem:[%s5 + $0x98] sm:$0xff]
      %v543 = vld [vmem:[%s5 + $0xa0] sm:$0xff]
      %v544 = vld [vmem:[%s5 + $0xa8] sm:$0xff]
      %v545 = vld [vmem:[%s5 + $0xb0] sm:$0xff]
      %v546 = vld [vmem:[%s5 + $0xb8] sm:$0xff]
      %v547 = vld [vmem:[%s5 + $0xc0] sm:$0xff]
      %v548 = vld [vmem:[%s5 + $0xc8] sm:$0xff]
      %v549 = vld [vmem:[%s5 + $0xd0] sm:$0xff]
      %v550 = vld [vmem:[%s5 + $0xd8] sm:$0xff]
      %v551 = vld [vmem:[%s5 + $0xe0] sm:$0xff]
      %v552 = vld [vmem:[%s5 + $0xe8] sm:$0xff]
      %v553 = vld [vmem:[%s5 + $0xf0] sm:$0xff]
      %v554 = vld [vmem:[%s5 + $0xf8] sm:$0xff]
      %555 = vmatpush.msra.mxu0 %v553
      %556 = vmatpush.msra.mxu0 %v551
      %557 = vmatpush.msra.mxu0 %v549
      %558 = vmatpush.msra.mxu0 %v547
      %559 = vmatpush.msra.mxu0 %v545
      %560 = vmatpush.msra.mxu0 %v543
      %561 = vmatpush.msra.mxu0 %v541
      %562 = vmatpush.msra.mxu0 %v539
      %563 = vmatpush.msra.mxu0 %v537
      %564 = vmatpush.msra.mxu0 %v535
      %565 = vmatpush.msra.mxu0 %v533
      %566 = vmatpush.msra.mxu0 %v531
      %567 = vmatpush.msra.mxu0 %v529
      %568 = vmatpush.msra.mxu0 %v527
      %569 = vmatpush.msra.mxu0 %v525
      %570 = vmatpush.msra.mxu0 %v523
      %571 = vmatmul.f32.gmra.mxu0 %v515
      %v572 = vpop.f32.mrf.mxu0
      %v573 = vadd.f32 0.0, %v572
      %574 = vmatmul.f32.gmra.mxu0 %v516
      %v575 = vpop.f32.mrf.mxu0
      %v576 = vadd.f32 0.0, %v575
      %577 = vmatmul.f32.gmra.mxu0 %v517
      %v578 = vpop.f32.mrf.mxu0
      %v579 = vadd.f32 0.0, %v578
      %580 = vmatmul.f32.gmra.mxu0 %v518
      %v581 = vpop.f32.mrf.mxu0
      %v582 = vadd.f32 0.0, %v581
      %583 = vmatmul.f32.gmra.mxu0 %v519
      %v584 = vpop.f32.mrf.mxu0
      %v585 = vadd.f32 0.0, %v584
      %586 = vmatmul.f32.gmra.mxu0 %v520
      %v587 = vpop.f32.mrf.mxu0
      %v588 = vadd.f32 0.0, %v587
      %589 = vmatmul.f32.gmra.mxu0 %v521
      %v590 = vpop.f32.mrf.mxu0
      %v591 = vadd.f32 0.0, %v590
      %592 = vmatmul.f32.gmra.mxu0 %v522
      %v593 = vpop.f32.mrf.mxu0
      %v594 = vadd.f32 0.0, %v593
      %595 = vdwg.mxu0
      %596 = vmatpush.msra.mxu0 %v554
      %597 = vmatpush.msra.mxu0 %v552
      %598 = vmatpush.msra.mxu0 %v550
      %599 = vmatpush.msra.mxu0 %v548
      %600 = vmatpush.msra.mxu0 %v546
      %601 = vmatpush.msra.mxu0 %v544
      %602 = vmatpush.msra.mxu0 %v542
      %603 = vmatpush.msra.mxu0 %v540
      %604 = vmatpush.msra.mxu0 %v538
      %605 = vmatpush.msra.mxu0 %v536
      %606 = vmatpush.msra.mxu0 %v534
      %607 = vmatpush.msra.mxu0 %v532
      %608 = vmatpush.msra.mxu0 %v530
      %609 = vmatpush.msra.mxu0 %v528
      %610 = vmatpush.msra.mxu0 %v526
      %611 = vmatpush.msra.mxu0 %v524
      %612 = vmatmul.f32.gmra.mxu0 %v515
      %v613 = vpop.f32.mrf.mxu0
      %v614 = vadd.f32 0.0, %v613
      %615 = vmatmul.f32.gmra.mxu0 %v516
      %v616 = vpop.f32.mrf.mxu0
      %v617 = vadd.f32 0.0, %v616
      %618 = vmatmul.f32.gmra.mxu0 %v517
      %v619 = vpop.f32.mrf.mxu0
      %v620 = vadd.f32 0.0, %v619
      %621 = vmatmul.f32.gmra.mxu0 %v518
      %v622 = vpop.f32.mrf.mxu0
      %v623 = vadd.f32 0.0, %v622
      %624 = vmatmul.f32.gmra.mxu0 %v519
      %v625 = vpop.f32.mrf.mxu0
      %v626 = vadd.f32 0.0, %v625
      %627 = vmatmul.f32.gmra.mxu0 %v520
      %v628 = vpop.f32.mrf.mxu0
      %v629 = vadd.f32 0.0, %v628
      %630 = vmatmul.f32.gmra.mxu0 %v521
      %v631 = vpop.f32.mrf.mxu0
      %v632 = vadd.f32 0.0, %v631
      %633 = vmatmul.f32.gmra.mxu0 %v522
      %v634 = vpop.f32.mrf.mxu0
      %v635 = vadd.f32 0.0, %v634
      %636 = vdwg.mxu0
      %v637 = vld [vmem:[%s6] sm:$0x3]
      %v639 = vperm.slane %v637, 0
      %v640 = vperm.slane %v637, 1
      %v643 = vmul.f32 %v573, %v639
      %v644 = vmul.f32 %v614, %v640
      %v645 = vmul.f32 %v576, %v639
      %v646 = vmul.f32 %v617, %v640
      %v647 = vmul.f32 %v579, %v639
      %v648 = vmul.f32 %v620, %v640
      %v649 = vmul.f32 %v582, %v639
      %v650 = vmul.f32 %v623, %v640
      %v651 = vmul.f32 %v585, %v639
      %v652 = vmul.f32 %v626, %v640
      %v653 = vmul.f32 %v588, %v639
      %v654 = vmul.f32 %v629, %v640
      %v655 = vmul.f32 %v591, %v639
      %v656 = vmul.f32 %v632, %v640
      %v657 = vmul.f32 %v594, %v639
      %v658 = vmul.f32 %v635, %v640
      %v659 = vld [vmem:[%s7] sm:$0x3]
      %v661 = vperm.slane %v659, 0
      %v662 = vperm.slane %v659, 1
      %v665 = vadd.f32 %v643, %v661
      %v666 = vadd.f32 %v644, %v662
      %v667 = vadd.f32 %v645, %v661
      %v668 = vadd.f32 %v646, %v662
      %v669 = vadd.f32 %v647, %v661
      %v670 = vadd.f32 %v648, %v662
      %v671 = vadd.f32 %v649, %v661
      %v672 = vadd.f32 %v650, %v662
      %v673 = vadd.f32 %v651, %v661
      %v674 = vadd.f32 %v652, %v662
      %v675 = vadd.f32 %v653, %v661
      %v676 = vadd.f32 %v654, %v662
      %v677 = vadd.f32 %v655, %v661
      %v678 = vadd.f32 %v656, %v662
      %v679 = vadd.f32 %v657, %v661
      %v680 = vadd.f32 %v658, %v662
      %v681 = vadd.f32 %v499, %v665
      %v682 = vadd.f32 %v500, %v666
      %v683 = vadd.f32 %v501, %v667
      %v684 = vadd.f32 %v502, %v668
      %v685 = vadd.f32 %v503, %v669
      %v686 = vadd.f32 %v504, %v670
      %v687 = vadd.f32 %v505, %v671
      %v688 = vadd.f32 %v506, %v672
      %v689 = vadd.f32 %v507, %v673
      %v690 = vadd.f32 %v508, %v674
      %v691 = vadd.f32 %v509, %v675
      %v692 = vadd.f32 %v510, %v676
      %v693 = vadd.f32 %v511, %v677
      %v694 = vadd.f32 %v512, %v678
      %v695 = vadd.f32 %v513, %v679
      %v696 = vadd.f32 %v514, %v680
      %697 = vst [vmem:[%s331] sm:$0xff] %v681
      %698 = vst [vmem:[%s331 + $0x8] sm:$0xff] %v682
      %699 = vst [vmem:[%s331 + $0x10] sm:$0xff] %v683
      %700 = vst [vmem:[%s331 + $0x18] sm:$0xff] %v684
      %701 = vst [vmem:[%s331 + $0x20] sm:$0xff] %v685
      %702 = vst [vmem:[%s331 + $0x28] sm:$0xff] %v686
      %703 = vst [vmem:[%s331 + $0x30] sm:$0xff] %v687
      %704 = vst [vmem:[%s331 + $0x38] sm:$0xff] %v688
      %705 = vst [vmem:[%s331 + $0x40] sm:$0xff] %v689
      %706 = vst [vmem:[%s331 + $0x48] sm:$0xff] %v690
      %707 = vst [vmem:[%s331 + $0x50] sm:$0xff] %v691
      %708 = vst [vmem:[%s331 + $0x58] sm:$0xff] %v692
      %709 = vst [vmem:[%s331 + $0x60] sm:$0xff] %v693
      %710 = vst [vmem:[%s331 + $0x68] sm:$0xff] %v694
      %711 = vst [vmem:[%s331 + $0x70] sm:$0xff] %v695
      %712 = vst [vmem:[%s331 + $0x78] sm:$0xff] %v696
      %s713 = smul.u32 8, %s19
      %p714 = scmp.lt.s32.totalorder %s713, 15
      %s715 = scalar_select %p714, %s713, 15
      %s716 = smul.addr %s715, 2
      %s717 = smul.addr %s716, 8
      %s718 = scalar_lea.vmem %s8, %s717
      // Predicated region
      $region53: #{sk_bottleneck_forward.5} parent=51 // pred_check
        %p719 = pneg %p215
      $region54: #{sk_bottleneck_forward.5} parent=51 // pred_check_branch
        %721 = sbr.rel (%p719) target = $region56
      $region55: #{sk_bottleneck_forward.5} parent=51 // pred_region
        %s722 = smul.u32 8, %s19
      $region56: #{sk_bottleneck_forward.5} parent=51 // pred_fallthru
        _
    $region52: #{sk_bottleneck_forward.5} parent=5 // pred_fallthru
      _
    %p723 = scmp.le.s32.totalorder 2, %s14
    // Predicated region
    $region57: #{sk_bottleneck_forward.5} parent=5 // pred_check
      %p724 = pneg %p723
    $region58: #{sk_bottleneck_forward.5} parent=5 // pred_check_branch
      %726 = sbr.rel (%p724) target = $region60
    $region59: #{sk_bottleneck_forward.5} parent=5 // pred_region
      %s727 = ssub.s32 %s14, 2
      // Predicated region
      $region61: #{sk_bottleneck_forward.5} parent=59 // pred_check
        %p728 = pneg %p221
      $region62: #{sk_bottleneck_forward.5} parent=59 // pred_check_branch
        %730 = sbr.rel (%p728) target = $region64
      $region63: #{sk_bottleneck_forward.5} parent=59 // pred_region
        %s731 = smul.u32 8, %s20
        %p732 = scmp.lt.s32.totalorder %s731, 15
        %s733 = scalar_select %p732, %s731, 15
        %s734 = smul.addr %s733, 2
        %s735 = smul.addr %s734, 8
        %s736 = scalar_lea.vmem %s8, %s735
      $region64: #{sk_bottleneck_forward.5} parent=59 // pred_fallthru
        _
    $region60: #{sk_bottleneck_forward.5} parent=5 // pred_fallthru
      _
  $region6: #{sk_bottleneck_forward.5} parent=0 // loop_footer
    %s18 = sadd.s32 1, %s14
  $region7: #{sk_bottleneck_forward.5} parent=0 // loop_footer_branch
    %13 = sbr.rel target = $region3
  $region8: #{sk_bottleneck_forward.5} parent=0 // loop_exit
    _

// kernel: sk_bottleneck_forward.4
$region0: #{sk_bottleneck_forward.4}
  #allocation0 [shape = 'u32[]', space=smem, size = 0x4, offset = 0x4, fixed_abs, tag = 'smem constant byte address 0x4 - core index']
  #allocation1 [shape = 'u32[72,128]{1,0:T(1,128)}', space=vmem, size = 0x9000, scoped, tag = 'internal scratch']
  #allocation2 [shape = 'f32[20,640]{1,0:T(8,128)}', space=vmem, size = 0xf000, scoped, tag = 'scratch operand']
  %s0 = inlined_call_operand.vmem [shape: f32[2,16,512], index: 0, kind: input, shape index: {}]
  %s1 = inlined_call_operand.vmem [shape: f32[18,512], index: 1, kind: input, shape index: {}]
  %s2 = inlined_call_operand.vmem [shape: f32[6,512], index: 2, kind: input, shape index: {}]
  %s3 = inlined_call_operand.vmem [shape: f32[32,32], index: 3, kind: input, shape index: {}]
  %s4 = inlined_call_operand.vmem [shape: f32[1,32], index: 4, kind: input, shape index: {}]
  %s5 = inlined_call_operand.vmem [shape: f32[1,32], index: 5, kind: input, shape index: {}]
  %s6 = inlined_call_operand.vmem [shape: f32[32,32], index: 6, kind: input, shape index: {}]
  %s7 = inlined_call_operand.vmem [shape: f32[1,32], index: 7, kind: input, shape index: {}]
  %s8 = inlined_call_operand.vmem [shape: f32[32,32], index: 8, kind: input, shape index: {}]
  %s9 = inlined_call_operand.vmem [shape: f32[1,32], index: 9, kind: input, shape index: {}]
  %s10 = inlined_call_operand.vmem [shape: f32[2,16,512], index: 10, kind: output, shape index: {}]
  %s11 = sld [smem:[#allocation0]]
  $region73: #{sk_bottleneck_forward.4} parent=0
    _
  %s13 = ssub.s32 1, %s11
  %s14 = scalar_select 0, %s13, %s11
  loop: start=0, step=1, limit=4
  $region2: #{sk_bottleneck_forward.4} parent=0 // loop_pre_header
    _
  $region3: #{sk_bottleneck_forward.4} parent=0 // loop_header
    %s16 = sphi 0, %s20
    %p17 = scmp.ge.s32.totalorder %s16, 4
    %s26 = sphi 0, %s28
    %s29 = sphi 0, %s26
    %s30 = sphi 0, %s29
    %s46 = sphi 0, %s30
    %s50 = sphi 0, %s50
    %s52 = sphi 0, %s50
    %s53 = sphi 0, %s52
    %s67 = sphi 0, %s53
    %s71 = sphi 0, %s71
    %s73 = sphi 0, %s71
    %s74 = sphi 0, %s73
    %s88 = sphi 0, %s74
    %s92 = sphi 0, %s92
    %s94 = sphi 0, %s92
    %s95 = sphi 0, %s94
    %s109 = sphi 0, %s95
    %s113 = sphi 0, %s113
    %s115 = sphi 0, %s113
    %s116 = sphi 0, %s115
    %s130 = sphi 0, %s116
    %s134 = sphi 0, %s134
    %s136 = sphi 0, %s134
    %s137 = sphi 0, %s136
    %s151 = sphi 0, %s137
    %s155 = sphi 0, %s155
    %s157 = sphi 0, %s155
    %s158 = sphi 0, %s157
    %s172 = sphi 0, %s158
    %s176 = sphi 0, %s176
    %s178 = sphi 0, %s176
    %s179 = sphi 0, %s178
    %s193 = sphi 0, %s179
    %s197 = sphi 0, %s197
    %s199 = sphi 0, %s197
    %s200 = sphi 0, %s199
    %s214 = sphi 0, %s200
    %s218 = sphi 0, %s218
    %s220 = sphi 0, %s218
    %s221 = sphi 0, %s220
    %s235 = sphi 0, %s221
    %s241 = sphi 0, %s243
    %s244 = sphi 0, %s241
    %s245 = sphi 0, %s244
    %s261 = sphi 0, %s245
  $region4: #{sk_bottleneck_forward.4} parent=0 // loop_header_branch
    %19 = sbr.rel (%p17) target = $region8
  $region5: #{sk_bottleneck_forward.4} parent=0 // loop_body
    %s21 = ssub.s32 %s16, 1
    %s22 = ssub.s32 %s16, 2
    %s23 = sadd.s32 %s16, 1
    %s24 = ssub.s32 %s16, %s23
    %p25 = scmp.eq.s32.totalorder %s24, 0
    %s27 = sadd.s32 %s26, 1
    %s28 = scalar_select %p25, %s26, %s27
    %p31 = pneg %p25
    %p32 = scmp.eq.s32.totalorder %s16, 1
    %p33 = por %p31, %p32
    %p34 = scmp.ne.s32.totalorder %s26, %s29
    %p35 = scmp.eq.s32.totalorder %s16, 0
    %p36 = por %p34, %p35
    %p37 = scmp.ne.s32.totalorder %s26, %s29
    %p38 = scmp.eq.s32.totalorder %s21, 1
    %p39 = por %p37, %p38
    %p40 = scmp.ne.s32.totalorder %s29, %s30
    %p41 = scmp.eq.s32.totalorder %s21, 0
    %p42 = por %p40, %p41
    %p43 = scmp.ne.s32.totalorder %s29, %s30
    %p44 = scmp.eq.s32.totalorder %s22, 1
    %p45 = por %p43, %p44
    %p47 = scmp.ne.s32.totalorder %s30, %s46
    %p48 = scmp.eq.s32.totalorder %s22, 0
    %p49 = por %p47, %p48
    %s51 = sadd.s32 %s50, 1
    %p54 = scmp.eq.s32.totalorder %s16, 1
    %p55 = scmp.ne.s32.totalorder %s50, %s52
    %p56 = scmp.eq.s32.totalorder %s16, 0
    %p57 = por %p55, %p56
    %p58 = scmp.ne.s32.totalorder %s50, %s52
    %p59 = scmp.eq.s32.totalorder %s21, 1
    %p60 = por %p58, %p59
    %p61 = scmp.ne.s32.totalorder %s52, %s53
    %p62 = scmp.eq.s32.totalorder %s21, 0
    %p63 = por %p61, %p62
    %p64 = scmp.ne.s32.totalorder %s52, %s53
    %p65 = scmp.eq.s32.totalorder %s22, 1
    %p66 = por %p64, %p65
    %p68 = scmp.ne.s32.totalorder %s53, %s67
    %p69 = scmp.eq.s32.totalorder %s22, 0
    %p70 = por %p68, %p69
    %s72 = sadd.s32 %s71, 1
    %p75 = scmp.eq.s32.totalorder %s16, 1
    %p76 = scmp.ne.s32.totalorder %s71, %s73
    %p77 = scmp.eq.s32.totalorder %s16, 0
    %p78 = por %p76, %p77
    %p79 = scmp.ne.s32.totalorder %s71, %s73
    %p80 = scmp.eq.s32.totalorder %s21, 1
    %p81 = por %p79, %p80
    %p82 = scmp.ne.s32.totalorder %s73, %s74
    %p83 = scmp.eq.s32.totalorder %s21, 0
    %p84 = por %p82, %p83
    %p85 = scmp.ne.s32.totalorder %s73, %s74
    %p86 = scmp.eq.s32.totalorder %s22, 1
    %p87 = por %p85, %p86
    %p89 = scmp.ne.s32.totalorder %s74, %s88
    %p90 = scmp.eq.s32.totalorder %s22, 0
    %p91 = por %p89, %p90
    %s93 = sadd.s32 %s92, 1
    %p96 = scmp.eq.s32.totalorder %s16, 1
    %p97 = scmp.ne.s32.totalorder %s92, %s94
    %p98 = scmp.eq.s32.totalorder %s16, 0
    %p99 = por %p97, %p98
    %p100 = scmp.ne.s32.totalorder %s92, %s94
    %p101 = scmp.eq.s32.totalorder %s21, 1
    %p102 = por %p100, %p101
    %p103 = scmp.ne.s32.totalorder %s94, %s95
    %p104 = scmp.eq.s32.totalorder %s21, 0
    %p105 = por %p103, %p104
    %p106 = scmp.ne.s32.totalorder %s94, %s95
    %p107 = scmp.eq.s32.totalorder %s22, 1
    %p108 = por %p106, %p107
    %p110 = scmp.ne.s32.totalorder %s95, %s109
    %p111 = scmp.eq.s32.totalorder %s22, 0
    %p112 = por %p110, %p111
    %s114 = sadd.s32 %s113, 1
    %p117 = scmp.eq.s32.totalorder %s16, 1
    %p118 = scmp.ne.s32.totalorder %s113, %s115
    %p119 = scmp.eq.s32.totalorder %s16, 0
    %p120 = por %p118, %p119
    %p121 = scmp.ne.s32.totalorder %s113, %s115
    %p122 = scmp.eq.s32.totalorder %s21, 1
    %p123 = por %p121, %p122
    %p124 = scmp.ne.s32.totalorder %s115, %s116
    %p125 = scmp.eq.s32.totalorder %s21, 0
    %p126 = por %p124, %p125
    %p127 = scmp.ne.s32.totalorder %s115, %s116
    %p128 = scmp.eq.s32.totalorder %s22, 1
    %p129 = por %p127, %p128
    %p131 = scmp.ne.s32.totalorder %s116, %s130
    %p132 = scmp.eq.s32.totalorder %s22, 0
    %p133 = por %p131, %p132
    %s135 = sadd.s32 %s134, 1
    %p138 = scmp.eq.s32.totalorder %s16, 1
    %p139 = scmp.ne.s32.totalorder %s134, %s136
    %p140 = scmp.eq.s32.totalorder %s16, 0
    %p141 = por %p139, %p140
    %p142 = scmp.ne.s32.totalorder %s134, %s136
    %p143 = scmp.eq.s32.totalorder %s21, 1
    %p144 = por %p142, %p143
    %p145 = scmp.ne.s32.totalorder %s136, %s137
    %p146 = scmp.eq.s32.totalorder %s21, 0
    %p147 = por %p145, %p146
    %p148 = scmp.ne.s32.totalorder %s136, %s137
    %p149 = scmp.eq.s32.totalorder %s22, 1
    %p150 = por %p148, %p149
    %p152 = scmp.ne.s32.totalorder %s137, %s151
    %p153 = scmp.eq.s32.totalorder %s22, 0
    %p154 = por %p152, %p153
    %s156 = sadd.s32 %s155, 1
    %p159 = scmp.eq.s32.totalorder %s16, 1
    %p160 = scmp.ne.s32.totalorder %s155, %s157
    %p161 = scmp.eq.s32.totalorder %s16, 0
    %p162 = por %p160, %p161
    %p163 = scmp.ne.s32.totalorder %s155, %s157
    %p164 = scmp.eq.s32.totalorder %s21, 1
    %p165 = por %p163, %p164
    %p166 = scmp.ne.s32.totalorder %s157, %s158
    %p167 = scmp.eq.s32.totalorder %s21, 0
    %p168 = por %p166, %p167
    %p169 = scmp.ne.s32.totalorder %s157, %s158
    %p170 = scmp.eq.s32.totalorder %s22, 1
    %p171 = por %p169, %p170
    %p173 = scmp.ne.s32.totalorder %s158, %s172
    %p174 = scmp.eq.s32.totalorder %s22, 0
    %p175 = por %p173, %p174
    %s177 = sadd.s32 %s176, 1
    %p180 = scmp.eq.s32.totalorder %s16, 1
    %p181 = scmp.ne.s32.totalorder %s176, %s178
    %p182 = scmp.eq.s32.totalorder %s16, 0
    %p183 = por %p181, %p182
    %p184 = scmp.ne.s32.totalorder %s176, %s178
    %p185 = scmp.eq.s32.totalorder %s21, 1
    %p186 = por %p184, %p185
    %p187 = scmp.ne.s32.totalorder %s178, %s179
    %p188 = scmp.eq.s32.totalorder %s21, 0
    %p189 = por %p187, %p188
    %p190 = scmp.ne.s32.totalorder %s178, %s179
    %p191 = scmp.eq.s32.totalorder %s22, 1
    %p192 = por %p190, %p191
    %p194 = scmp.ne.s32.totalorder %s179, %s193
    %p195 = scmp.eq.s32.totalorder %s22, 0
    %p196 = por %p194, %p195
    %s198 = sadd.s32 %s197, 1
    %p201 = scmp.eq.s32.totalorder %s16, 1
    %p202 = scmp.ne.s32.totalorder %s197, %s199
    %p203 = scmp.eq.s32.totalorder %s16, 0
    %p204 = por %p202, %p203
    %p205 = scmp.ne.s32.totalorder %s197, %s199
    %p206 = scmp.eq.s32.totalorder %s21, 1
    %p207 = por %p205, %p206
    %p208 = scmp.ne.s32.totalorder %s199, %s200
    %p209 = scmp.eq.s32.totalorder %s21, 0
    %p210 = por %p208, %p209
    %p211 = scmp.ne.s32.totalorder %s199, %s200
    %p212 = scmp.eq.s32.totalorder %s22, 1
    %p213 = por %p211, %p212
    %p215 = scmp.ne.s32.totalorder %s200, %s214
    %p216 = scmp.eq.s32.totalorder %s22, 0
    %p217 = por %p215, %p216
    %s219 = sadd.s32 %s218, 1
    %p222 = scmp.eq.s32.totalorder %s16, 1
    %p223 = scmp.ne.s32.totalorder %s218, %s220
    %p224 = scmp.eq.s32.totalorder %s16, 0
    %p225 = por %p223, %p224
    %p226 = scmp.ne.s32.totalorder %s218, %s220
    %p227 = scmp.eq.s32.totalorder %s21, 1
    %p228 = por %p226, %p227
    %p229 = scmp.ne.s32.totalorder %s220, %s221
    %p230 = scmp.eq.s32.totalorder %s21, 0
    %p231 = por %p229, %p230
    %p232 = scmp.ne.s32.totalorder %s220, %s221
    %p233 = scmp.eq.s32.totalorder %s22, 1
    %p234 = por %p232, %p233
    %p236 = scmp.ne.s32.totalorder %s221, %s235
    %p237 = scmp.eq.s32.totalorder %s22, 0
    %p238 = por %p236, %p237
    %s239 = ssub.s32 %s16, %s23
    %p240 = scmp.eq.s32.totalorder %s239, 0
    %s242 = sadd.s32 %s241, 1
    %s243 = scalar_select %p240, %s241, %s242
    %p246 = pneg %p240
    %p247 = scmp.eq.s32.totalorder %s16, 1
    %p248 = por %p246, %p247
    %p249 = scmp.ne.s32.totalorder %s241, %s244
    %p250 = scmp.eq.s32.totalorder %s16, 0
    %p251 = por %p249, %p250
    %p252 = scmp.ne.s32.totalorder %s241, %s244
    %p253 = scmp.eq.s32.totalorder %s21, 1
    %p254 = por %p252, %p253
    %p255 = scmp.ne.s32.totalorder %s244, %s245
    %p256 = scmp.eq.s32.totalorder %s21, 0
    %p257 = por %p255, %p256
    %p258 = scmp.ne.s32.totalorder %s244, %s245
    %p259 = scmp.eq.s32.totalorder %s22, 1
    %p260 = por %p258, %p259
    %p262 = scmp.ne.s32.totalorder %s245, %s261
    %p263 = scmp.eq.s32.totalorder %s22, 0
    %p264 = por %p262, %p263
    %p265 = scmp.le.s32.totalorder 1, %s16
    %p266 = scmp.lt.s32.totalorder %s16, 3
    %p267 = pnand %p265, %p266
    %p268 = pneg %p267
    // Predicated region
    $region9: #{sk_bottleneck_forward.4} parent=5 // pred_check
      _
    $region10: #{sk_bottleneck_forward.4} parent=5 // pred_check_branch
      %270 = sbr.rel (%p267) target = $region12
    $region11: #{sk_bottleneck_forward.4} parent=5 // pred_region
      %s271 = ssub.s32 %s16, 1
      // Predicated region
      $region13: #{sk_bottleneck_forward.4} parent=11 // pred_check
        %p272 = pneg %p63
      $region14: #{sk_bottleneck_forward.4} parent=11 // pred_check_branch
        %274 = sbr.rel (%p272) target = $region16
      $region15: #{sk_bottleneck_forward.4} parent=11 // pred_region
        _
      $region16: #{sk_bottleneck_forward.4} parent=11 // pred_fallthru
        _
      // Predicated region
      $region17: #{sk_bottleneck_forward.4} parent=11 // pred_check
        %p275 = pneg %p84
      $region18: #{sk_bottleneck_forward.4} parent=11 // pred_check_branch
        %277 = sbr.rel (%p275) target = $region20
      $region19: #{sk_bottleneck_forward.4} parent=11 // pred_region
        _
      $region20: #{sk_bottleneck_forward.4} parent=11 // pred_fallthru
        _
      // Predicated region
      $region21: #{sk_bottleneck_forward.4} parent=11 // pred_check
        %p278 = pneg %p105
      $region22: #{sk_bottleneck_forward.4} parent=11 // pred_check_branch
        %280 = sbr.rel (%p278) target = $region24
      $region23: #{sk_bottleneck_forward.4} parent=11 // pred_region
        _
      $region24: #{sk_bottleneck_forward.4} parent=11 // pred_fallthru
        _
      // Predicated region
      $region25: #{sk_bottleneck_forward.4} parent=11 // pred_check
        %p281 = pneg %p126
      $region26: #{sk_bottleneck_forward.4} parent=11 // pred_check_branch
        %283 = sbr.rel (%p281) target = $region28
      $region27: #{sk_bottleneck_forward.4} parent=11 // pred_region
        _
      $region28: #{sk_bottleneck_forward.4} parent=11 // pred_fallthru
        _
      // Predicated region
      $region29: #{sk_bottleneck_forward.4} parent=11 // pred_check
        %p284 = pneg %p147
      $region30: #{sk_bottleneck_forward.4} parent=11 // pred_check_branch
        %286 = sbr.rel (%p284) target = $region32
      $region31: #{sk_bottleneck_forward.4} parent=11 // pred_region
        _
      $region32: #{sk_bottleneck_forward.4} parent=11 // pred_fallthru
        _
      // Predicated region
      $region33: #{sk_bottleneck_forward.4} parent=11 // pred_check
        %p287 = pneg %p168
      $region34: #{sk_bottleneck_forward.4} parent=11 // pred_check_branch
        %289 = sbr.rel (%p287) target = $region36
      $region35: #{sk_bottleneck_forward.4} parent=11 // pred_region
        _
      $region36: #{sk_bottleneck_forward.4} parent=11 // pred_fallthru
        _
      // Predicated region
      $region37: #{sk_bottleneck_forward.4} parent=11 // pred_check
        %p290 = pneg %p189
      $region38: #{sk_bottleneck_forward.4} parent=11 // pred_check_branch
        %292 = sbr.rel (%p290) target = $region40
      $region39: #{sk_bottleneck_forward.4} parent=11 // pred_region
        _
      $region40: #{sk_bottleneck_forward.4} parent=11 // pred_fallthru
        _
      // Predicated region
      $region41: #{sk_bottleneck_forward.4} parent=11 // pred_check
        %p293 = pneg %p210
      $region42: #{sk_bottleneck_forward.4} parent=11 // pred_check_branch
        %295 = sbr.rel (%p293) target = $region44
      $region43: #{sk_bottleneck_forward.4} parent=11 // pred_region
        _
      $region44: #{sk_bottleneck_forward.4} parent=11 // pred_fallthru
        _
      // Predicated region
      $region45: #{sk_bottleneck_forward.4} parent=11 // pred_check
        %p296 = pneg %p231
      $region46: #{sk_bottleneck_forward.4} parent=11 // pred_check_branch
        %298 = sbr.rel (%p296) target = $region48
      $region47: #{sk_bottleneck_forward.4} parent=11 // pred_region
        _
      $region48: #{sk_bottleneck_forward.4} parent=11 // pred_fallthru
        _
    $region12: #{sk_bottleneck_forward.4} parent=5 // pred_fallthru
      _
    %p299 = scmp.lt.s32.totalorder %s16, 2
    // Predicated region
    $region49: #{sk_bottleneck_forward.4} parent=5 // pred_check
      %p300 = pneg %p299
    $region50: #{sk_bottleneck_forward.4} parent=5 // pred_check_branch
      %302 = sbr.rel (%p300) target = $region52
    $region51: #{sk_bottleneck_forward.4} parent=5 // pred_region
      // Predicated region
      $region53: #{sk_bottleneck_forward.4} parent=51 // pred_check
        %p303 = pneg %p36
      $region54: #{sk_bottleneck_forward.4} parent=51 // pred_check_branch
        %305 = sbr.rel (%p303) target = $region56
      $region55: #{sk_bottleneck_forward.4} parent=51 // pred_region
        %p306 = scmp.lt.s32.totalorder %s16, 1
        %s307 = scalar_select %p306, %s16, 1
        %s308 = smul.addr %s307, 8
        %s309 = smul.addr %s308, 8
        %s310 = scalar_lea.vmem %s0, %s309
      $region56: #{sk_bottleneck_forward.4} parent=51 // pred_fallthru
        _
    $region52: #{sk_bottleneck_forward.4} parent=5 // pred_fallthru
      _
    %p311 = scmp.le.s32.totalorder 1, %s16
    %p312 = scmp.lt.s32.totalorder %s16, 3
    %p313 = pnand %p311, %p312
    %p314 = pneg %p313
    // Predicated region
    $region57: #{sk_bottleneck_forward.4} parent=5 // pred_check
      _
    $region58: #{sk_bottleneck_forward.4} parent=5 // pred_check_branch
      %316 = sbr.rel (%p313) target = $region60
    $region59: #{sk_bottleneck_forward.4} parent=5 // pred_region
      %s317 = ssub.s32 %s16, 1
      %p318 = scmp.lt.s32.totalorder %s21, 1
      %s319 = scalar_select %p318, %s21, 1
      %s320 = smul.addr %s319, 8
      %s321 = smul.addr %s320, 8
      %s322 = scalar_lea.vmem %s0, %s321
      %p323 = pneg %p42
      %p324 = pneg %p39
      %p325 = pneg %p63
      %p326 = pneg %p60
      %p327 = pneg %p84
      %p328 = pneg %p81
      %p329 = pneg %p105
      %p330 = pneg %p102
      %p331 = pneg %p126
      %p332 = pneg %p123
      %p333 = pneg %p147
      %p334 = pneg %p144
      %p335 = pneg %p168
      %p336 = pneg %p165
      %p337 = pneg %p189
      %p338 = pneg %p186
      %p339 = pneg %p210
      %p340 = pneg %p207
      %p341 = pneg %p231
      %p342 = pneg %p228
      %p343 = pneg %p257
      %p344 = pneg %p254
      %p345 = scmp.lt.s32.totalorder %s21, 1
      %s346 = scalar_select %p345, %s21, 1
      %s347 = smul.addr %s346, 8
      %s348 = smul.addr %s347, 8
      %s349 = scalar_lea.vmem %s10, %s348
      %p350 = scmp.lt.s32.totalorder %s21, 1
      %s351 = scalar_select %p350, %s21, 1
      %s352 = smul.addr %s351, 8
      %s353 = smul.addr %s352, 8
      %s354 = scalar_lea.vmem %s0, %s353
      %p355 = scmp.lt.s32.totalorder %s21, 1
      %s356 = scalar_select %p355, %s21, 1
      %s357 = smul.addr %s356, 8
      %s358 = smul.addr %s357, 8
      %s359 = scalar_lea.vmem %s10, %s358
      %360 = vst [vmem:[#allocation2] sm:$0xff] 0.0
      %361 = vst [vmem:[#allocation2 + $0x8] sm:$0xff] 0.0
      %362 = vst [vmem:[#allocation2 + $0x10] sm:$0xff] 0.0
      %363 = vst [vmem:[#allocation2 + $0x18] sm:$0xff] 0.0
      %364 = vst [vmem:[#allocation2 + $0x20] sm:$0xff] 0.0
      %365 = vst [vmem:[#allocation2 + $0x28] sm:$0xff] 0.0
      %366 = vst [vmem:[#allocation2 + $0x30] sm:$0xff] 0.0
      %367 = vst [vmem:[#allocation2 + $0x38] sm:$0xff] 0.0
      %368 = vst [vmem:[#allocation2 + $0x40] sm:$0xff] 0.0
      %369 = vst [vmem:[#allocation2 + $0x48] sm:$0xff] 0.0
      %370 = vst [vmem:[#allocation2 + $0x50] sm:$0xf] 0.0
      %371 = vst [vmem:[#allocation2 + $0x58] sm:$0xf] 0.0
      %372 = vst [vmem:[#allocation2 + $0x60] sm:$0xf] 0.0
      %373 = vst [vmem:[#allocation2 + $0x68] sm:$0xf] 0.0
      %374 = vst [vmem:[#allocation2 + $0x70] sm:$0xf] 0.0
      %v375 = vld [vmem:[%s354] sm:$0xff]
      %v376 = vld [vmem:[%s354 + $0x8] sm:$0xff]
      %v377 = vld [vmem:[%s354 + $0x10] sm:$0xff]
      %v378 = vld [vmem:[%s354 + $0x18] sm:$0xff]
      %v379 = vld [vmem:[%s354 + $0x20] sm:$0xff]
      %v380 = vld [vmem:[%s354 + $0x28] sm:$0xff]
      %v381 = vld [vmem:[%s354 + $0x30] sm:$0xff]
      %v382 = vld [vmem:[%s354 + $0x38] sm:$0xff]
      %vm391 = vcmask 1041408
      %v392 = vrot.slane %v375, 6
      %v393 = vrot.slane %v376, 6
      %v394 = vrot.slane %v377, 6
      %v395 = vrot.slane %v378, 6
      %v396 = vrot.slane %v379, 6
      %v397 = vsel %vm391, %v392, %v396
      %v398 = vrot.slane %v380, 6
      %v399 = vsel %vm391, %v393, %v398
      %v400 = vrot.slane %v381, 6
      %v401 = vsel %vm391, %v394, %v400
      %v402 = vrot.slane %v382, 6
      %v403 = vsel %vm391, %v395, %v402
      %404 = vrot.lane.b32.xlu0 %v392, 64
      %v405 = vpop.permute.xlu0 %404
      %406 = vrot.lane.b32.xlu0 %v393, 64
      %v407 = vpop.permute.xlu0 %406
      %408 = vrot.lane.b32.xlu0 %v394, 64
      %v409 = vpop.permute.xlu0 %408
      %410 = vrot.lane.b32.xlu0 %v395, 64
      %v411 = vpop.permute.xlu0 %410
      %412 = vrot.lane.b32.xlu0 %v397, 64
      %v413 = vpop.permute.xlu0 %412
      %414 = vrot.lane.b32.xlu0 %v399, 64
      %v415 = vpop.permute.xlu0 %414
      %416 = vrot.lane.b32.xlu0 %v401, 64
      %v417 = vpop.permute.xlu0 %416
      %418 = vrot.lane.b32.xlu0 %v403, 64
      %v419 = vpop.permute.xlu0 %418
      %420 = vrot.lane.b32.xlu0 %v396, 64
      %v421 = vpop.permute.xlu0 %420
      %422 = vrot.lane.b32.xlu0 %v398, 64
      %v423 = vpop.permute.xlu0 %422
      %424 = vrot.lane.b32.xlu0 %v400, 64
      %v425 = vpop.permute.xlu0 %424
      %426 = vrot.lane.b32.xlu0 %v402, 64
      %v427 = vpop.permute.xlu0 %426
      %vm428 = vcmask 523264
      %v429 = vsel %vm428, %v405, %v407
      %v430 = vsel %vm428, %v407, %v409
      %v431 = vsel %vm428, %v409, %v411
      %v432 = vsel %vm428, %v413, %v415
      %v433 = vsel %vm428, %v415, %v417
      %v434 = vsel %vm428, %v417, %v419
      %v435 = vsel %vm428, %v421, %v423
      %v436 = vsel %vm428, %v423, %v425
      %v437 = vsel %vm428, %v425, %v427
      %vm453 = vcmask 1048066
      %454 = vst.msk [vmem:[#allocation2] sm:$0xfc] %vm453, %v405
      %455 = vst [vmem:[#allocation2 + $0x8] sm:$0xfc] %v429
      %456 = vst [vmem:[#allocation2 + $0x10] sm:$0xfc] %v430
      %457 = vst [vmem:[#allocation2 + $0x18] sm:$0xfc] %v431
      %vm458 = vcmask 523266
      %459 = vst.msk [vmem:[#allocation2 + $0x20] sm:$0xfc] %vm458, %v411
      %vm460 = vcmask 1048064
      %461 = vst.msk [vmem:[#allocation2 + $0x28] sm:$0xff] %vm460, %v413
      %462 = vst [vmem:[#allocation2 + $0x30] sm:$0xff] %v432
      %463 = vst [vmem:[#allocation2 + $0x38] sm:$0xff] %v433
      %464 = vst [vmem:[#allocation2 + $0x40] sm:$0xff] %v434
      %465 = vst.msk [vmem:[#allocation2 + $0x48] sm:$0xff] %vm428, %v419
      %vm466 = vcmask 1041920
      %467 = vst.msk [vmem:[#allocation2 + $0x50] sm:$0x3] %vm466, %v421
      %468 = vst [vmem:[#allocation2 + $0x58] sm:$0x3] %v435
      %469 = vst [vmem:[#allocation2 + $0x60] sm:$0x3] %v436
      %470 = vst [vmem:[#allocation2 + $0x68] sm:$0x3] %v437
      %vm471 = vcmask 517120
      %472 = vst.msk [vmem:[#allocation2 + $0x70] sm:$0x3] %vm471, %v427
      %v473 = vld [vmem:[#allocation2] sm:$0xfe]
      %v474 = vld [vmem:[#allocation2 + $0x8] sm:$0xfe]
      %v475 = vld [vmem:[#allocation2 + $0x10] sm:$0xfe]
      %v476 = vld [vmem:[#allocation2 + $0x18] sm:$0xfe]
      %v477 = vld [vmem:[#allocation2 + $0x20] sm:$0xfe]
      %v478 = vld [vmem:[#allocation2 + $0x28] sm:$0xff]
      %v479 = vld [vmem:[#allocation2 + $0x30] sm:$0xff]
      %v480 = vld [vmem:[#allocation2 + $0x38] sm:$0xff]
      %v481 = vld [vmem:[#allocation2 + $0x40] sm:$0xff]
      %v482 = vld [vmem:[#allocation2 + $0x48] sm:$0xff]
      %v483 = vld [vmem:[#allocation2 + $0x50] sm:$0x1]
      %v484 = vld [vmem:[#allocation2 + $0x58] sm:$0x1]
      %v485 = vld [vmem:[#allocation2 + $0x60] sm:$0x1]
      %v486 = vld [vmem:[#allocation2 + $0x68] sm:$0x1]
      %v487 = vld [vmem:[#allocation2 + $0x70] sm:$0x1]
      %v488 = vld [vmem:[%s1] ss:$8 sm:$0xf]
      %v490 = vperm.slane %v488, 0
      %v491 = vperm.slane %v488, 1
      %v492 = vperm.slane %v488, 2
      %v493 = vperm.slane %v488, 3
      %494 = vrot.lane.b32.xlu0 %v490, 32
      %v495 = vpop.permute.xlu0 %494
      %496 = vrot.lane.b32.xlu0 %v491, 32
      %v497 = vpop.permute.xlu0 %496
      %498 = vrot.lane.b32.xlu0 %v492, 32
      %v499 = vpop.permute.xlu0 %498
      %500 = vrot.lane.b32.xlu0 %v493, 32
      %v501 = vpop.permute.xlu0 %500
      %vm502 = vcmask 261120
      %v503 = vsel %vm502, %v495, %v497
      %v504 = vsel %vm502, %v497, %v499
      %v505 = vsel %vm502, %v499, %v501
      %v511 = vmul.f32 %v473, %v495
      %v512 = vmul.f32 %v474, %v503
      %v513 = vmul.f32 %v475, %v504
      %v514 = vmul.f32 %v476, %v505
      %v515 = vmul.f32 %v477, %v501
      %v516 = vmul.f32 %v478, %v495
      %v517 = vmul.f32 %v479, %v503
      %v518 = vmul.f32 %v480, %v504
      %v519 = vmul.f32 %v481, %v505
      %v520 = vmul.f32 %v482, %v501
      %v521 = vmul.f32 %v483, %v495
      %v522 = vmul.f32 %v484, %v503
      %v523 = vmul.f32 %v485, %v504
      %v524 = vmul.f32 %v486, %v505
      %v525 = vmul.f32 %v487, %v501
      %s526 = scalar_lea.vmem %s1, 1
      %v527 = vld [vmem:[%s526] ss:$8 sm:$0xf]
      %v529 = vperm.slane %v527, 0
      %v530 = vperm.slane %v527, 1
      %v531 = vperm.slane %v527, 2
      %v532 = vperm.slane %v527, 3
      %533 = vrot.lane.b32.xlu0 %v529, 64
      %v534 = vpop.permute.xlu0 %533
      %535 = vrot.lane.b32.xlu0 %v530, 64
      %v536 = vpop.permute.xlu0 %535
      %537 = vrot.lane.b32.xlu0 %v531, 64
      %v538 = vpop.permute.xlu0 %537
      %539 = vrot.lane.b32.xlu0 %v532, 64
      %v540 = vpop.permute.xlu0 %539
      %v541 = vsel %vm428, %v534, %v536
      %v542 = vsel %vm428, %v536, %v538
      %v543 = vsel %vm428, %v538, %v540
      %v549 = vmul.f32 %v473, %v534
      %v550 = vmul.f32 %v474, %v541
      %v551 = vmul.f32 %v475, %v542
      %v552 = vmul.f32 %v476, %v543
      %v553 = vmul.f32 %v477, %v540
      %v554 = vmul.f32 %v478, %v534
      %v555 = vmul.f32 %v479, %v541
      %v556 = vmul.f32 %v480, %v542
      %v557 = vmul.f32 %v481, %v543
      %v558 = vmul.f32 %v482, %v540
      %v559 = vmul.f32 %v483, %v534
      %v560 = vmul.f32 %v484, %v541
      %v561 = vmul.f32 %v485, %v542
      %v562 = vmul.f32 %v486, %v543
      %v563 = vmul.f32 %v487, %v540
      %579 = vrot.lane.b32.xlu0 %v549, 96
      %v580 = vpop.permute.xlu0 %579
      %581 = vrot.lane.b32.xlu0 %v550, 96
      %v582 = vpop.permute.xlu0 %581
      %583 = vrot.lane.b32.xlu0 %v551, 96
      %v584 = vpop.permute.xlu0 %583
      %585 = vrot.lane.b32.xlu0 %v552, 96
      %v586 = vpop.permute.xlu0 %585
      %587 = vrot.lane.b32.xlu0 %v553, 96
      %v588 = vpop.permute.xlu0 %587
      %589 = vrot.lane.b32.xlu0 %v554, 96
      %v590 = vpop.permute.xlu0 %589
      %591 = vrot.lane.b32.xlu0 %v555, 96
      %v592 = vpop.permute.xlu0 %591
      %593 = vrot.lane.b32.xlu0 %v556, 96
      %v594 = vpop.permute.xlu0 %593
      %595 = vrot.lane.b32.xlu0 %v557, 96
      %v596 = vpop.permute.xlu0 %595
      %597 = vrot.lane.b32.xlu0 %v558, 96
      %v598 = vpop.permute.xlu0 %597
      %599 = vrot.lane.b32.xlu0 %v559, 96
      %v600 = vpop.permute.xlu0 %599
      %601 = vrot.lane.b32.xlu0 %v560, 96
      %v602 = vpop.permute.xlu0 %601
      %603 = vrot.lane.b32.xlu0 %v561, 96
      %v604 = vpop.permute.xlu0 %603
      %605 = vrot.lane.b32.xlu0 %v562, 96
      %v606 = vpop.permute.xlu0 %605
      %607 = vrot.lane.b32.xlu0 %v563, 96
      %v608 = vpop.permute.xlu0 %607
      %vm609 = vcmask 785408
      %v610 = vsel %vm609, %v580, %v582
      %v611 = vsel %vm609, %v582, %v584
      %v612 = vsel %vm609, %v584, %v586
      %v613 = vsel %vm609, %v586, %v588
      %v614 = vsel %vm609, %v590, %v592
      %v615 = vsel %vm609, %v592, %v594
      %v616 = vsel %vm609, %v594, %v596
      %v617 = vsel %vm609, %v596, %v598
      %v618 = vsel %vm609, %v600, %v602
      %v619 = vsel %vm609, %v602, %v604
      %v620 = vsel %vm609, %v604, %v606
      %v621 = vsel %vm609, %v606, %v608
      %v637 = vadd.f32 %v511, %v610
      %v638 = vadd.f32 %v512, %v611
      %v639 = vadd.f32 %v513, %v612
      %v640 = vadd.f32 %v514, %v613
      %v641 = vadd.f32 %v515, %v588
      %v642 = vadd.f32 %v516, %v614
      %v643 = vadd.f32 %v517, %v615
      %v644 = vadd.f32 %v518, %v616
      %v645 = vadd.f32 %v519, %v617
      %v646 = vadd.f32 %v520, %v598
      %v647 = vadd.f32 %v521, %v618
      %v648 = vadd.f32 %v522, %v619
      %v649 = vadd.f32 %v523, %v620
      %v650 = vadd.f32 %v524, %v621
      %v651 = vadd.f32 %v525, %v608
      %s652 = scalar_lea.vmem %s1, 2
      %v653 = vld [vmem:[%s652] ss:$8 sm:$0xf]
      %v655 = vperm.slane %v653, 0
      %v656 = vperm.slane %v653, 1
      %v657 = vperm.slane %v653, 2
      %v658 = vperm.slane %v653, 3
      %659 = vrot.lane.b32.xlu0 %v655, 96
      %v660 = vpop.permute.xlu0 %659
      %661 = vrot.lane.b32.xlu0 %v656, 96
      %v662 = vpop.permute.xlu0 %661
      %663 = vrot.lane.b32.xlu0 %v657, 96
      %v664 = vpop.permute.xlu0 %663
      %665 = vrot.lane.b32.xlu0 %v658, 96
      %v666 = vpop.permute.xlu0 %665
      %v667 = vsel %vm609, %v660, %v662
      %v668 = vsel %vm609, %v662, %v664
      %v669 = vsel %vm609, %v664, %v666
      %v675 = vmul.f32 %v473, %v660
      %v676 = vmul.f32 %v474, %v667
      %v677 = vmul.f32 %v475, %v668
      %v678 = vmul.f32 %v476, %v669
      %v679 = vmul.f32 %v477, %v666
      %v680 = vmul.f32 %v478, %v660
      %v681 = vmul.f32 %v479, %v667
      %v682 = vmul.f32 %v480, %v668
      %v683 = vmul.f32 %v481, %v669
      %v684 = vmul.f32 %v482, %v666
      %v685 = vmul.f32 %v483, %v660
      %v686 = vmul.f32 %v484, %v667
      %v687 = vmul.f32 %v485, %v668
      %v688 = vmul.f32 %v486, %v669
      %v689 = vmul.f32 %v487, %v666
      %705 = vrot.lane.b32.xlu0 %v675, 64
      %v706 = vpop.permute.xlu0 %705
      %707 = vrot.lane.b32.xlu0 %v676, 64
      %v708 = vpop.permute.xlu0 %707
      %709 = vrot.lane.b32.xlu0 %v677, 64
      %v710 = vpop.permute.xlu0 %709
      %711 = vrot.lane.b32.xlu0 %v678, 64
      %v712 = vpop.permute.xlu0 %711
      %713 = vrot.lane.b32.xlu0 %v679, 64
      %v714 = vpop.permute.xlu0 %713
      %715 = vrot.lane.b32.xlu0 %v680, 64
      %v716 = vpop.permute.xlu0 %715
      %717 = vrot.lane.b32.xlu0 %v681, 64
      %v718 = vpop.permute.xlu0 %717
      %719 = vrot.lane.b32.xlu0 %v682, 64
      %v720 = vpop.permute.xlu0 %719
      %721 = vrot.lane.b32.xlu0 %v683, 64
      %v722 = vpop.permute.xlu0 %721
      %723 = vrot.lane.b32.xlu0 %v684, 64
      %v724 = vpop.permute.xlu0 %723
      %725 = vrot.lane.b32.xlu0 %v685, 64
      %v726 = vpop.permute.xlu0 %725
      %727 = vrot.lane.b32.xlu0 %v686, 64
      %v728 = vpop.permute.xlu0 %727
      %729 = vrot.lane.b32.xlu0 %v687, 64
      %v730 = vpop.permute.xlu0 %729
      %731 = vrot.lane.b32.xlu0 %v688, 64
      %v732 = vpop.permute.xlu0 %731
      %733 = vrot.lane.b32.xlu0 %v689, 64
      %v734 = vpop.permute.xlu0 %733
      %v735 = vsel %vm428, %v706, %v708
      %v736 = vsel %vm428, %v708, %v710
      %v737 = vsel %vm428, %v710, %v712
      %v738 = vsel %vm428, %v712, %v714
      %v739 = vsel %vm428, %v716, %v718
      %v740 = vsel %vm428, %v718, %v720
      %v741 = vsel %vm428, %v720, %v722
      %v742 = vsel %vm428, %v722, %v724
      %v743 = vsel %vm428, %v726, %v728
      %v744 = vsel %vm428, %v728, %v730
      %v745 = vsel %vm428, %v730, %v732
      %v746 = vsel %vm428, %v732, %v734
      %v762 = vadd.f32 %v637, %v735
      %v763 = vadd.f32 %v638, %v736
      %v764 = vadd.f32 %v639, %v737
      %v765 = vadd.f32 %v640, %v738
      %v766 = vadd.f32 %v641, %v714
      %v767 = vadd.f32 %v642, %v739
      %v768 = vadd.f32 %v643, %v740
      %v769 = vadd.f32 %v644, %v741
      %v770 = vadd.f32 %v645, %v742
      %v771 = vadd.f32 %v646, %v724
      %v772 = vadd.f32 %v647, %v743
      %v773 = vadd.f32 %v648, %v744
      %v774 = vadd.f32 %v649, %v745
      %v775 = vadd.f32 %v650, %v746
      %v776 = vadd.f32 %v651, %v734
      %v777 = vld [vmem:[#allocation2] sm:$0xfc]
      %v778 = vld [vmem:[#allocation2 + $0x8] sm:$0xfc]
      %v779 = vld [vmem:[#allocation2 + $0x10] sm:$0xfc]
      %v780 = vld [vmem:[#allocation2 + $0x18] sm:$0xfc]
      %v781 = vld [vmem:[#allocation2 + $0x20] sm:$0xfc]
      %v782 = vld [vmem:[#allocation2 + $0x50] sm:$0x3]
      %v783 = vld [vmem:[#allocation2 + $0x58] sm:$0x3]
      %v784 = vld [vmem:[#allocation2 + $0x60] sm:$0x3]
      %v785 = vld [vmem:[#allocation2 + $0x68] sm:$0x3]
      %v786 = vld [vmem:[#allocation2 + $0x70] sm:$0x3]
      %s787 = scalar_lea.vmem %s1, 3
      %v788 = vld [vmem:[%s787] ss:$8 sm:$0xf]
      %v790 = vperm.slane %v788, 0
      %v791 = vperm.slane %v788, 1
      %v792 = vperm.slane %v788, 2
      %v793 = vperm.slane %v788, 3
      %794 = vrot.lane.b32.xlu0 %v790, 32
      %v795 = vpop.permute.xlu0 %794
      %796 = vrot.lane.b32.xlu0 %v791, 32
      %v797 = vpop.permute.xlu0 %796
      %798 = vrot.lane.b32.xlu0 %v792, 32
      %v799 = vpop.permute.xlu0 %798
      %800 = vrot.lane.b32.xlu0 %v793, 32
      %v801 = vpop.permute.xlu0 %800
      %v802 = vsel %vm502, %v795, %v797
      %v803 = vsel %vm502, %v797, %v799
      %v804 = vsel %vm502, %v799, %v801
      %v810 = vmul.f32 %v777, %v795
      %v811 = vmul.f32 %v778, %v802
      %v812 = vmul.f32 %v779, %v803
      %v813 = vmul.f32 %v780, %v804
      %v814 = vmul.f32 %v781, %v801
      %v815 = vmul.f32 %v478, %v795
      %v816 = vmul.f32 %v479, %v802
      %v817 = vmul.f32 %v480, %v803
      %v818 = vmul.f32 %v481, %v804
      %v819 = vmul.f32 %v482, %v801
      %v820 = vmul.f32 %v782, %v795
      %v821 = vmul.f32 %v783, %v802
      %v822 = vmul.f32 %v784, %v803
      %v823 = vmul.f32 %v785, %v804
      %v824 = vmul.f32 %v786, %v801
      %vm840 = vcmask 1046528
      %v841 = vrot.slane %v810, 1
      %v842 = vrot.slane %v815, 1
      %v843 = vsel %vm840, %v841, %v842
      %v844 = vrot.slane %v811, 1
      %v845 = vrot.slane %v816, 1
      %v846 = vsel %vm840, %v844, %v845
      %v847 = vrot.slane %v812, 1
      %v848 = vrot.slane %v817, 1
      %v849 = vsel %vm840, %v847, %v848
      %v850 = vrot.slane %v813, 1
      %v851 = vrot.slane %v818, 1
      %v852 = vsel %vm840, %v850, %v851
      %v853 = vrot.slane %v814, 1
      %v854 = vrot.slane %v819, 1
      %v855 = vsel %vm840, %v853, %v854
      %v856 = vrot.slane %v820, 1
      %v857 = vsel %vm840, %v842, %v856
      %v858 = vrot.slane %v821, 1
      %v859 = vsel %vm840, %v845, %v858
      %v860 = vrot.slane %v822, 1
      %v861 = vsel %vm840, %v848, %v860
      %v862 = vrot.slane %v823, 1
      %v863 = vsel %vm840, %v851, %v862
      %v864 = vrot.slane %v824, 1
      %v865 = vsel %vm840, %v854, %v864
      %v881 = vadd.f32 %v762, %v843
      %v882 = vadd.f32 %v763, %v846
      %v883 = vadd.f32 %v764, %v849
      %v884 = vadd.f32 %v765, %v852
      %v885 = vadd.f32 %v766, %v855
      %v886 = vadd.f32 %v767, %v857
      %v887 = vadd.f32 %v768, %v859
      %v888 = vadd.f32 %v769, %v861
      %v889 = vadd.f32 %v770, %v863
      %v890 = vadd.f32 %v771, %v865
      %v891 = vadd.f32 %v772, %v856
      %v892 = vadd.f32 %v773, %v858
      %v893 = vadd.f32 %v774, %v860
      %v894 = vadd.f32 %v775, %v862
      %v895 = vadd.f32 %v776, %v864
      %s896 = scalar_lea.vmem %s1, 4
      %v897 = vld [vmem:[%s896] ss:$8 sm:$0xf]
      %v899 = vperm.slane %v897, 0
      %v900 = vperm.slane %v897, 1
      %v901 = vperm.slane %v897, 2
      %v902 = vperm.slane %v897, 3
      %903 = vrot.lane.b32.xlu0 %v899, 64
      %v904 = vpop.permute.xlu0 %903
      %905 = vrot.lane.b32.xlu0 %v900, 64
      %v906 = vpop.permute.xlu0 %905
      %907 = vrot.lane.b32.xlu0 %v901, 64
      %v908 = vpop.permute.xlu0 %907
      %909 = vrot.lane.b32.xlu0 %v902, 64
      %v910 = vpop.permute.xlu0 %909
      %v911 = vsel %vm428, %v904, %v906
      %v912 = vsel %vm428, %v906, %v908
      %v913 = vsel %vm428, %v908, %v910
      %v919 = vmul.f32 %v777, %v904
      %v920 = vmul.f32 %v778, %v911
      %v921 = vmul.f32 %v779, %v912
      %v922 = vmul.f32 %v780, %v913
      %v923 = vmul.f32 %v781, %v910
      %v924 = vmul.f32 %v478, %v904
      %v925 = vmul.f32 %v479, %v911
      %v926 = vmul.f32 %v480, %v912
      %v927 = vmul.f32 %v481, %v913
      %v928 = vmul.f32 %v482, %v910
      %v929 = vmul.f32 %v782, %v904
      %v930 = vmul.f32 %v783, %v911
      %v931 = vmul.f32 %v784, %v912
      %v932 = vmul.f32 %v785, %v913
      %v933 = vmul.f32 %v786, %v910
      %v949 = vrot.slane %v919, 1
      %v950 = vrot.slane %v924, 1
      %v951 = vsel %vm840, %v949, %v950
      %v952 = vrot.slane %v920, 1
      %v953 = vrot.slane %v925, 1
      %v954 = vsel %vm840, %v952, %v953
      %v955 = vrot.slane %v921, 1
      %v956 = vrot.slane %v926, 1
      %v957 = vsel %vm840, %v955, %v956
      %v958 = vrot.slane %v922, 1
      %v959 = vrot.slane %v927, 1
      %v960 = vsel %vm840, %v958, %v959
      %v961 = vrot.slane %v923, 1
      %v962 = vrot.slane %v928, 1
      %v963 = vsel %vm840, %v961, %v962
      %v964 = vrot.slane %v929, 1
      %v965 = vsel %vm840, %v950, %v964
      %v966 = vrot.slane %v930, 1
      %v967 = vsel %vm840, %v953, %v966
      %v968 = vrot.slane %v931, 1
      %v969 = vsel %vm840, %v956, %v968
      %v970 = vrot.slane %v932, 1
      %v971 = vsel %vm840, %v959, %v970
      %v972 = vrot.slane %v933, 1
      %v973 = vsel %vm840, %v962, %v972
      %974 = vrot.lane.b32.xlu0 %v951, 96
      %v975 = vpop.permute.xlu0 %974
      %976 = vrot.lane.b32.xlu0 %v954, 96
      %v977 = vpop.permute.xlu0 %976
      %978 = vrot.lane.b32.xlu0 %v957, 96
      %v979 = vpop.permute.xlu0 %978
      %980 = vrot.lane.b32.xlu0 %v960, 96
      %v981 = vpop.permute.xlu0 %980
      %982 = vrot.lane.b32.xlu0 %v963, 96
      %v983 = vpop.permute.xlu0 %982
      %984 = vrot.lane.b32.xlu0 %v965, 96
      %v985 = vpop.permute.xlu0 %984
      %986 = vrot.lane.b32.xlu0 %v967, 96
      %v987 = vpop.permute.xlu0 %986
      %988 = vrot.lane.b32.xlu0 %v969, 96
      %v989 = vpop.permute.xlu0 %988
      %990 = vrot.lane.b32.xlu0 %v971, 96
      %v991 = vpop.permute.xlu0 %990
      %992 = vrot.lane.b32.xlu0 %v973, 96
      %v993 = vpop.permute.xlu0 %992
      %994 = vrot.lane.b32.xlu0 %v964, 96
      %v995 = vpop.permute.xlu0 %994
      %996 = vrot.lane.b32.xlu0 %v966, 96
      %v997 = vpop.permute.xlu0 %996
      %998 = vrot.lane.b32.xlu0 %v968, 96
      %v999 = vpop.permute.xlu0 %998
      %1000 = vrot.lane.b32.xlu0 %v970, 96
      %v1001 = vpop.permute.xlu0 %1000
      %1002 = vrot.lane.b32.xlu0 %v972, 96
      %v1003 = vpop.permute.xlu0 %1002
      %v1004 = vsel %vm609, %v975, %v977
      %v1005 = vsel %vm609, %v977, %v979
      %v1006 = vsel %vm609, %v979, %v981
      %v1007 = vsel %vm609, %v981, %v983
      %v1008 = vsel %vm609, %v985, %v987
      %v1009 = vsel %vm609, %v987, %v989
      %v1010 = vsel %vm609, %v989, %v991
      %v1011 = vsel %vm609, %v991, %v993
      %v1012 = vsel %vm609, %v995, %v997
      %v1013 = vsel %vm609, %v997, %v999
      %v1014 = vsel %vm609, %v999, %v1001
      %v1015 = vsel %vm609, %v1001, %v1003
      %v1031 = vadd.f32 %v881, %v1004
      %v1032 = vadd.f32 %v882, %v1005
      %v1033 = vadd.f32 %v883, %v1006
      %v1034 = vadd.f32 %v884, %v1007
      %v1035 = vadd.f32 %v885, %v983
      %v1036 = vadd.f32 %v886, %v1008
      %v1037 = vadd.f32 %v887, %v1009
      %v1038 = vadd.f32 %v888, %v1010
      %v1039 = vadd.f32 %v889, %v1011
      %v1040 = vadd.f32 %v890, %v993
      %v1041 = vadd.f32 %v891, %v1012
      %v1042 = vadd.f32 %v892, %v1013
      %v1043 = vadd.f32 %v893, %v1014
      %v1044 = vadd.f32 %v894, %v1015
      %v1045 = vadd.f32 %v895, %v1003
      %s1046 = scalar_lea.vmem %s1, 5
      %v1047 = vld [vmem:[%s1046] ss:$8 sm:$0xf]
      %v1049 = vperm.slane %v1047, 0
      %v1050 = vperm.slane %v1047, 1
      %v1051 = vperm.slane %v1047, 2
      %v1052 = vperm.slane %v1047, 3
      %1053 = vrot.lane.b32.xlu0 %v1049, 96
      %v1054 = vpop.permute.xlu0 %1053
      %1055 = vrot.lane.b32.xlu0 %v1050, 96
      %v1056 = vpop.permute.xlu0 %1055
      %1057 = vrot.lane.b32.xlu0 %v1051, 96
      %v1058 = vpop.permute.xlu0 %1057
      %1059 = vrot.lane.b32.xlu0 %v1052, 96
      %v1060 = vpop.permute.xlu0 %1059
      %v1061 = vsel %vm609, %v1054, %v1056
      %v1062 = vsel %vm609, %v1056, %v1058
      %v1063 = vsel %vm609, %v1058, %v1060
      %v1069 = vmul.f32 %v777, %v1054
      %v1070 = vmul.f32 %v778, %v1061
      %v1071 = vmul.f32 %v779, %v1062
      %v1072 = vmul.f32 %v780, %v1063
      %v1073 = vmul.f32 %v781, %v1060
      %v1074 = vmul.f32 %v478, %v1054
      %v1075 = vmul.f32 %v479, %v1061
      %v1076 = vmul.f32 %v480, %v1062
      %v1077 = vmul.f32 %v481, %v1063
      %v1078 = vmul.f32 %v482, %v1060
      %v1079 = vmul.f32 %v782, %v1054
      %v1080 = vmul.f32 %v783, %v1061
      %v1081 = vmul.f32 %v784, %v1062
      %v1082 = vmul.f32 %v785, %v1063
      %v1083 = vmul.f32 %v786, %v1060
      %v1099 = vrot.slane %v1069, 1
      %v1100 = vrot.slane %v1074, 1
      %v1101 = vsel %vm840, %v1099, %v1100
      %v1102 = vrot.slane %v1070, 1
      %v1103 = vrot.slane %v1075, 1
      %v1104 = vsel %vm840, %v1102, %v1103
      %v1105 = vrot.slane %v1071, 1
      %v1106 = vrot.slane %v1076, 1
      %v1107 = vsel %vm840, %v1105, %v1106
      %v1108 = vrot.slane %v1072, 1
      %v1109 = vrot.slane %v1077, 1
      %v1110 = vsel %vm840, %v1108, %v1109
      %v1111 = vrot.slane %v1073, 1
      %v1112 = vrot.slane %v1078, 1
      %v1113 = vsel %vm840, %v1111, %v1112
      %v1114 = vrot.slane %v1079, 1
      %v1115 = vsel %vm840, %v1100, %v1114
      %v1116 = vrot.slane %v1080, 1
      %v1117 = vsel %vm840, %v1103, %v1116
      %v1118 = vrot.slane %v1081, 1
      %v1119 = vsel %vm840, %v1106, %v1118
      %v1120 = vrot.slane %v1082, 1
      %v1121 = vsel %vm840, %v1109, %v1120
      %v1122 = vrot.slane %v1083, 1
      %v1123 = vsel %vm840, %v1112, %v1122
      %1124 = vrot.lane.b32.xlu0 %v1101, 64
      %v1125 = vpop.permute.xlu0 %1124
      %1126 = vrot.lane.b32.xlu0 %v1104, 64
      %v1127 = vpop.permute.xlu0 %1126
      %1128 = vrot.lane.b32.xlu0 %v1107, 64
      %v1129 = vpop.permute.xlu0 %1128
      %1130 = vrot.lane.b32.xlu0 %v1110, 64
      %v1131 = vpop.permute.xlu0 %1130
      %1132 = vrot.lane.b32.xlu0 %v1113, 64
      %v1133 = vpop.permute.xlu0 %1132
      %1134 = vrot.lane.b32.xlu0 %v1115, 64
      %v1135 = vpop.permute.xlu0 %1134
      %1136 = vrot.lane.b32.xlu0 %v1117, 64
      %v1137 = vpop.permute.xlu0 %1136
      %1138 = vrot.lane.b32.xlu0 %v1119, 64
      %v1139 = vpop.permute.xlu0 %1138
      %1140 = vrot.lane.b32.xlu0 %v1121, 64
      %v1141 = vpop.permute.xlu0 %1140
      %1142 = vrot.lane.b32.xlu0 %v1123, 64
      %v1143 = vpop.permute.xlu0 %1142
      %1144 = vrot.lane.b32.xlu0 %v1114, 64
      %v1145 = vpop.permute.xlu0 %1144
      %1146 = vrot.lane.b32.xlu0 %v1116, 64
      %v1147 = vpop.permute.xlu0 %1146
      %1148 = vrot.lane.b32.xlu0 %v1118, 64
      %v1149 = vpop.permute.xlu0 %1148
      %1150 = vrot.lane.b32.xlu0 %v1120, 64
      %v1151 = vpop.permute.xlu0 %1150
      %1152 = vrot.lane.b32.xlu0 %v1122, 64
      %v1153 = vpop.permute.xlu0 %1152
      %v1154 = vsel %vm428, %v1125, %v1127
      %v1155 = vsel %vm428, %v1127, %v1129
      %v1156 = vsel %vm428, %v1129, %v1131
      %v1157 = vsel %vm428, %v1131, %v1133
      %v1158 = vsel %vm428, %v1135, %v1137
      %v1159 = vsel %vm428, %v1137, %v1139
      %v1160 = vsel %vm428, %v1139, %v1141
      %v1161 = vsel %vm428, %v1141, %v1143
      %v1162 = vsel %vm428, %v1145, %v1147
      %v1163 = vsel %vm428, %v1147, %v1149
      %v1164 = vsel %vm428, %v1149, %v1151
      %v1165 = vsel %vm428, %v1151, %v1153
      %v1181 = vadd.f32 %v1031, %v1154
      %v1182 = vadd.f32 %v1032, %v1155
      %v1183 = vadd.f32 %v1033, %v1156
      %v1184 = vadd.f32 %v1034, %v1157
      %v1185 = vadd.f32 %v1035, %v1133
      %v1186 = vadd.f32 %v1036, %v1158
      %v1187 = vadd.f32 %v1037, %v1159
      %v1188 = vadd.f32 %v1038, %v1160
      %v1189 = vadd.f32 %v1039, %v1161
      %v1190 = vadd.f32 %v1040, %v1143
      %v1191 = vadd.f32 %v1041, %v1162
      %v1192 = vadd.f32 %v1042, %v1163
      %v1193 = vadd.f32 %v1043, %v1164
      %v1194 = vadd.f32 %v1044, %v1165
      %v1195 = vadd.f32 %v1045, %v1153
      %v1196 = vld [vmem:[#allocation2] sm:$0xf8]
      %v1197 = vld [vmem:[#allocation2 + $0x8] sm:$0xf8]
      %v1198 = vld [vmem:[#allocation2 + $0x10] sm:$0xf8]
      %v1199 = vld [vmem:[#allocation2 + $0x18] sm:$0xf8]
      %v1200 = vld [vmem:[#allocation2 + $0x20] sm:$0xf8]
      %v1201 = vld [vmem:[#allocation2 + $0x50] sm:$0x7]
      %v1202 = vld [vmem:[#allocation2 + $0x58] sm:$0x7]
      %v1203 = vld [vmem:[#allocation2 + $0x60] sm:$0x7]
      %v1204 = vld [vmem:[#allocation2 + $0x68] sm:$0x7]
      %v1205 = vld [vmem:[#allocation2 + $0x70] sm:$0x7]
      %s1206 = scalar_lea.vmem %s1, 6
      %v1207 = vld [vmem:[%s1206] ss:$8 sm:$0xf]
      %v1209 = vperm.slane %v1207, 0
      %v1210 = vperm.slane %v1207, 1
      %v1211 = vperm.slane %v1207, 2
      %v1212 = vperm.slane %v1207, 3
      %1213 = vrot.lane.b32.xlu0 %v1209, 32
      %v1214 = vpop.permute.xlu0 %1213
      %1215 = vrot.lane.b32.xlu0 %v1210, 32
      %v1216 = vpop.permute.xlu0 %1215
      %1217 = vrot.lane.b32.xlu0 %v1211, 32
      %v1218 = vpop.permute.xlu0 %1217
      %1219 = vrot.lane.b32.xlu0 %v1212, 32
      %v1220 = vpop.permute.xlu0 %1219
      %v1221 = vsel %vm502, %v1214, %v1216
      %v1222 = vsel %vm502, %v1216, %v1218
      %v1223 = vsel %vm502, %v1218, %v1220
      %v1229 = vmul.f32 %v1196, %v1214
      %v1230 = vmul.f32 %v1197, %v1221
      %v1231 = vmul.f32 %v1198, %v1222
      %v1232 = vmul.f32 %v1199, %v1223
      %v1233 = vmul.f32 %v1200, %v1220
      %v1234 = vmul.f32 %v478, %v1214
      %v1235 = vmul.f32 %v479, %v1221
      %v1236 = vmul.f32 %v480, %v1222
      %v1237 = vmul.f32 %v481, %v1223
      %v1238 = vmul.f32 %v482, %v1220
      %v1239 = vmul.f32 %v1201, %v1214
      %v1240 = vmul.f32 %v1202, %v1221
      %v1241 = vmul.f32 %v1203, %v1222
      %v1242 = vmul.f32 %v1204, %v1223
      %v1243 = vmul.f32 %v1205, %v1220
      %vm1259 = vcmask 1045504
      %v1260 = vrot.slane %v1229, 2
      %v1261 = vrot.slane %v1234, 2
      %v1262 = vsel %vm1259, %v1260, %v1261
      %v1263 = vrot.slane %v1230, 2
      %v1264 = vrot.slane %v1235, 2
      %v1265 = vsel %vm1259, %v1263, %v1264
      %v1266 = vrot.slane %v1231, 2
      %v1267 = vrot.slane %v1236, 2
      %v1268 = vsel %vm1259, %v1266, %v1267
      %v1269 = vrot.slane %v1232, 2
      %v1270 = vrot.slane %v1237, 2
      %v1271 = vsel %vm1259, %v1269, %v1270
      %v1272 = vrot.slane %v1233, 2
      %v1273 = vrot.slane %v1238, 2
      %v1274 = vsel %vm1259, %v1272, %v1273
      %v1275 = vrot.slane %v1239, 2
      %v1276 = vsel %vm1259, %v1261, %v1275
      %v1277 = vrot.slane %v1240, 2
      %v1278 = vsel %vm1259, %v1264, %v1277
      %v1279 = vrot.slane %v1241, 2
      %v1280 = vsel %vm1259, %v1267, %v1279
      %v1281 = vrot.slane %v1242, 2
      %v1282 = vsel %vm1259, %v1270, %v1281
      %v1283 = vrot.slane %v1243, 2
      %v1284 = vsel %vm1259, %v1273, %v1283
      %v1300 = vadd.f32 %v1181, %v1262
      %v1301 = vadd.f32 %v1182, %v1265
      %v1302 = vadd.f32 %v1183, %v1268
      %v1303 = vadd.f32 %v1184, %v1271
      %v1304 = vadd.f32 %v1185, %v1274
      %v1305 = vadd.f32 %v1186, %v1276
      %v1306 = vadd.f32 %v1187, %v1278
      %v1307 = vadd.f32 %v1188, %v1280
      %v1308 = vadd.f32 %v1189, %v1282
      %v1309 = vadd.f32 %v1190, %v1284
      %v1310 = vadd.f32 %v1191, %v1275
      %v1311 = vadd.f32 %v1192, %v1277
      %v1312 = vadd.f32 %v1193, %v1279
      %v1313 = vadd.f32 %v1194, %v1281
      %v1314 = vadd.f32 %v1195, %v1283
      %s1315 = scalar_lea.vmem %s1, 7
      %v1316 = vld [vmem:[%s1315] ss:$8 sm:$0xf]
      %v1318 = vperm.slane %v1316, 0
      %v1319 = vperm.slane %v1316, 1
      %v1320 = vperm.slane %v1316, 2
      %v1321 = vperm.slane %v1316, 3
      %1322 = vrot.lane.b32.xlu0 %v1318, 64
      %v1323 = vpop.permute.xlu0 %1322
      %1324 = vrot.lane.b32.xlu0 %v1319, 64
      %v1325 = vpop.permute.xlu0 %1324
      %1326 = vrot.lane.b32.xlu0 %v1320, 64
      %v1327 = vpop.permute.xlu0 %1326
      %1328 = vrot.lane.b32.xlu0 %v1321, 64
      %v1329 = vpop.permute.xlu0 %1328
      %v1330 = vsel %vm428, %v1323, %v1325
      %v1331 = vsel %vm428, %v1325, %v1327
      %v1332 = vsel %vm428, %v1327, %v1329
      %v1338 = vmul.f32 %v1196, %v1323
      %v1339 = vmul.f32 %v1197, %v1330
      %v1340 = vmul.f32 %v1198, %v1331
      %v1341 = vmul.f32 %v1199, %v1332
      %v1342 = vmul.f32 %v1200, %v1329
      %v1343 = vmul.f32 %v478, %v1323
      %v1344 = vmul.f32 %v479, %v1330
      %v1345 = vmul.f32 %v480, %v1331
      %v1346 = vmul.f32 %v481, %v1332
      %v1347 = vmul.f32 %v482, %v1329
      %v1348 = vmul.f32 %v1201, %v1323
      %v1349 = vmul.f32 %v1202, %v1330
      %v1350 = vmul.f32 %v1203, %v1331
      %v1351 = vmul.f32 %v1204, %v1332
      %v1352 = vmul.f32 %v1205, %v1329
      %v1368 = vrot.slane %v1338, 2
      %v1369 = vrot.slane %v1343, 2
      %v1370 = vsel %vm1259, %v1368, %v1369
      %v1371 = vrot.slane %v1339, 2
      %v1372 = vrot.slane %v1344, 2
      %v1373 = vsel %vm1259, %v1371, %v1372
      %v1374 = vrot.slane %v1340, 2
      %v1375 = vrot.slane %v1345, 2
      %v1376 = vsel %vm1259, %v1374, %v1375
      %v1377 = vrot.slane %v1341, 2
      %v1378 = vrot.slane %v1346, 2
      %v1379 = vsel %vm1259, %v1377, %v1378
      %v1380 = vrot.slane %v1342, 2
      %v1381 = vrot.slane %v1347, 2
      %v1382 = vsel %vm1259, %v1380, %v1381
      %v1383 = vrot.slane %v1348, 2
      %v1384 = vsel %vm1259, %v1369, %v1383
      %v1385 = vrot.slane %v1349, 2
      %v1386 = vsel %vm1259, %v1372, %v1385
      %v1387 = vrot.slane %v1350, 2
      %v1388 = vsel %vm1259, %v1375, %v1387
      %v1389 = vrot.slane %v1351, 2
      %v1390 = vsel %vm1259, %v1378, %v1389
      %v1391 = vrot.slane %v1352, 2
      %v1392 = vsel %vm1259, %v1381, %v1391
      %1393 = vrot.lane.b32.xlu0 %v1370, 96
      %v1394 = vpop.permute.xlu0 %1393
      %1395 = vrot.lane.b32.xlu0 %v1373, 96
      %v1396 = vpop.permute.xlu0 %1395
      %1397 = vrot.lane.b32.xlu0 %v1376, 96
      %v1398 = vpop.permute.xlu0 %1397
      %1399 = vrot.lane.b32.xlu0 %v1379, 96
      %v1400 = vpop.permute.xlu0 %1399
      %1401 = vrot.lane.b32.xlu0 %v1382, 96
      %v1402 = vpop.permute.xlu0 %1401
      %1403 = vrot.lane.b32.xlu0 %v1384, 96
      %v1404 = vpop.permute.xlu0 %1403
      %1405 = vrot.lane.b32.xlu0 %v1386, 96
      %v1406 = vpop.permute.xlu0 %1405
      %1407 = vrot.lane.b32.xlu0 %v1388, 96
      %v1408 = vpop.permute.xlu0 %1407
      %1409 = vrot.lane.b32.xlu0 %v1390, 96
      %v1410 = vpop.permute.xlu0 %1409
      %1411 = vrot.lane.b32.xlu0 %v1392, 96
      %v1412 = vpop.permute.xlu0 %1411
      %1413 = vrot.lane.b32.xlu0 %v1383, 96
      %v1414 = vpop.permute.xlu0 %1413
      %1415 = vrot.lane.b32.xlu0 %v1385, 96
      %v1416 = vpop.permute.xlu0 %1415
      %1417 = vrot.lane.b32.xlu0 %v1387, 96
      %v1418 = vpop.permute.xlu0 %1417
      %1419 = vrot.lane.b32.xlu0 %v1389, 96
      %v1420 = vpop.permute.xlu0 %1419
      %1421 = vrot.lane.b32.xlu0 %v1391, 96
      %v1422 = vpop.permute.xlu0 %1421
      %v1423 = vsel %vm609, %v1394, %v1396
      %v1424 = vsel %vm609, %v1396, %v1398
      %v1425 = vsel %vm609, %v1398, %v1400
      %v1426 = vsel %vm609, %v1400, %v1402
      %v1427 = vsel %vm609, %v1404, %v1406
      %v1428 = vsel %vm609, %v1406, %v1408
      %v1429 = vsel %vm609, %v1408, %v1410
      %v1430 = vsel %vm609, %v1410, %v1412
      %v1431 = vsel %vm609, %v1414, %v1416
      %v1432 = vsel %vm609, %v1416, %v1418
      %v1433 = vsel %vm609, %v1418, %v1420
      %v1434 = vsel %vm609, %v1420, %v1422
      %v1450 = vadd.f32 %v1300, %v1423
      %v1451 = vadd.f32 %v1301, %v1424
      %v1452 = vadd.f32 %v1302, %v1425
      %v1453 = vadd.f32 %v1303, %v1426
      %v1454 = vadd.f32 %v1304, %v1402
      %v1455 = vadd.f32 %v1305, %v1427
      %v1456 = vadd.f32 %v1306, %v1428
      %v1457 = vadd.f32 %v1307, %v1429
      %v1458 = vadd.f32 %v1308, %v1430
      %v1459 = vadd.f32 %v1309, %v1412
      %v1460 = vadd.f32 %v1310, %v1431
      %v1461 = vadd.f32 %v1311, %v1432
      %v1462 = vadd.f32 %v1312, %v1433
      %v1463 = vadd.f32 %v1313, %v1434
      %v1464 = vadd.f32 %v1314, %v1422
      %s1465 = scalar_lea.vmem %s1, 32
      %v1466 = vld [vmem:[%s1465] ss:$8 sm:$0xf]
      %v1468 = vperm.slane %v1466, 0
      %v1469 = vperm.slane %v1466, 1
      %v1470 = vperm.slane %v1466, 2
      %v1471 = vperm.slane %v1466, 3
      %1472 = vrot.lane.b32.xlu0 %v1468, 96
      %v1473 = vpop.permute.xlu0 %1472
      %1474 = vrot.lane.b32.xlu0 %v1469, 96
      %v1475 = vpop.permute.xlu0 %1474
      %1476 = vrot.lane.b32.xlu0 %v1470, 96
      %v1477 = vpop.permute.xlu0 %1476
      %1478 = vrot.lane.b32.xlu0 %v1471, 96
      %v1479 = vpop.permute.xlu0 %1478
      %v1480 = vsel %vm609, %v1473, %v1475
      %v1481 = vsel %vm609, %v1475, %v1477
      %v1482 = vsel %vm609, %v1477, %v1479
      %v1488 = vmul.f32 %v1196, %v1473
      %v1489 = vmul.f32 %v1197, %v1480
      %v1490 = vmul.f32 %v1198, %v1481
      %v1491 = vmul.f32 %v1199, %v1482
      %v1492 = vmul.f32 %v1200, %v1479
      %v1493 = vmul.f32 %v478, %v1473
      %v1494 = vmul.f32 %v479, %v1480
      %v1495 = vmul.f32 %v480, %v1481
      %v1496 = vmul.f32 %v481, %v1482
      %v1497 = vmul.f32 %v482, %v1479
      %v1498 = vmul.f32 %v1201, %v1473
      %v1499 = vmul.f32 %v1202, %v1480
      %v1500 = vmul.f32 %v1203, %v1481
      %v1501 = vmul.f32 %v1204, %v1482
      %v1502 = vmul.f32 %v1205, %v1479
      %v1518 = vrot.slane %v1488, 2
      %v1519 = vrot.slane %v1493, 2
      %v1520 = vsel %vm1259, %v1518, %v1519
      %v1521 = vrot.slane %v1489, 2
      %v1522 = vrot.slane %v1494, 2
      %v1523 = vsel %vm1259, %v1521, %v1522
      %v1524 = vrot.slane %v1490, 2
      %v1525 = vrot.slane %v1495, 2
      %v1526 = vsel %vm1259, %v1524, %v1525
      %v1527 = vrot.slane %v1491, 2
      %v1528 = vrot.slane %v1496, 2
      %v1529 = vsel %vm1259, %v1527, %v1528
      %v1530 = vrot.slane %v1492, 2
      %v1531 = vrot.slane %v1497, 2
      %v1532 = vsel %vm1259, %v1530, %v1531
      %v1533 = vrot.slane %v1498, 2
      %v1534 = vsel %vm1259, %v1519, %v1533
      %v1535 = vrot.slane %v1499, 2
      %v1536 = vsel %vm1259, %v1522, %v1535
      %v1537 = vrot.slane %v1500, 2
      %v1538 = vsel %vm1259, %v1525, %v1537
      %v1539 = vrot.slane %v1501, 2
      %v1540 = vsel %vm1259, %v1528, %v1539
      %v1541 = vrot.slane %v1502, 2
      %v1542 = vsel %vm1259, %v1531, %v1541
      %1543 = vrot.lane.b32.xlu0 %v1520, 64
      %v1544 = vpop.permute.xlu0 %1543
      %1545 = vrot.lane.b32.xlu0 %v1523, 64
      %v1546 = vpop.permute.xlu0 %1545
      %1547 = vrot.lane.b32.xlu0 %v1526, 64
      %v1548 = vpop.permute.xlu0 %1547
      %1549 = vrot.lane.b32.xlu0 %v1529, 64
      %v1550 = vpop.permute.xlu0 %1549
      %1551 = vrot.lane.b32.xlu0 %v1532, 64
      %v1552 = vpop.permute.xlu0 %1551
      %1553 = vrot.lane.b32.xlu0 %v1534, 64
      %v1554 = vpop.permute.xlu0 %1553
      %1555 = vrot.lane.b32.xlu0 %v1536, 64
      %v1556 = vpop.permute.xlu0 %1555
      %1557 = vrot.lane.b32.xlu0 %v1538, 64
      %v1558 = vpop.permute.xlu0 %1557
      %1559 = vrot.lane.b32.xlu0 %v1540, 64
      %v1560 = vpop.permute.xlu0 %1559
      %1561 = vrot.lane.b32.xlu0 %v1542, 64
      %v1562 = vpop.permute.xlu0 %1561
      %1563 = vrot.lane.b32.xlu0 %v1533, 64
      %v1564 = vpop.permute.xlu0 %1563
      %1565 = vrot.lane.b32.xlu0 %v1535, 64
      %v1566 = vpop.permute.xlu0 %1565
      %1567 = vrot.lane.b32.xlu0 %v1537, 64
      %v1568 = vpop.permute.xlu0 %1567
      %1569 = vrot.lane.b32.xlu0 %v1539, 64
      %v1570 = vpop.permute.xlu0 %1569
      %1571 = vrot.lane.b32.xlu0 %v1541, 64
      %v1572 = vpop.permute.xlu0 %1571
      %v1573 = vsel %vm428, %v1544, %v1546
      %v1574 = vsel %vm428, %v1546, %v1548
      %v1575 = vsel %vm428, %v1548, %v1550
      %v1576 = vsel %vm428, %v1550, %v1552
      %v1577 = vsel %vm428, %v1554, %v1556
      %v1578 = vsel %vm428, %v1556, %v1558
      %v1579 = vsel %vm428, %v1558, %v1560
      %v1580 = vsel %vm428, %v1560, %v1562
      %v1581 = vsel %vm428, %v1564, %v1566
      %v1582 = vsel %vm428, %v1566, %v1568
      %v1583 = vsel %vm428, %v1568, %v1570
      %v1584 = vsel %vm428, %v1570, %v1572
      %v1600 = vadd.f32 %v1450, %v1573
      %v1601 = vadd.f32 %v1451, %v1574
      %v1602 = vadd.f32 %v1452, %v1575
      %v1603 = vadd.f32 %v1453, %v1576
      %v1604 = vadd.f32 %v1454, %v1552
      %v1605 = vadd.f32 %v1455, %v1577
      %v1606 = vadd.f32 %v1456, %v1578
      %v1607 = vadd.f32 %v1457, %v1579
      %v1608 = vadd.f32 %v1458, %v1580
      %v1609 = vadd.f32 %v1459, %v1562
      %v1610 = vadd.f32 %v1460, %v1581
      %v1611 = vadd.f32 %v1461, %v1582
      %v1612 = vadd.f32 %v1462, %v1583
      %v1613 = vadd.f32 %v1463, %v1584
      %v1614 = vadd.f32 %v1464, %v1572
      %v1615 = vld [vmem:[%s2] ss:$8 sm:$0xf]
      %s1616 = scalar_lea.vmem %s2, 1
      %v1617 = vld [vmem:[%s1616] ss:$8 sm:$0xf]
      %v1619 = vperm.slane %v1615, 0
      %v1620 = vperm.slane %v1615, 1
      %v1621 = vperm.slane %v1615, 2
      %v1622 = vperm.slane %v1615, 3
      %1623 = vrot.lane.b32.xlu0 %v1619, 32
      %v1624 = vpop.permute.xlu0 %1623
      %1625 = vrot.lane.b32.xlu0 %v1620, 32
      %v1626 = vpop.permute.xlu0 %1625
      %1627 = vrot.lane.b32.xlu0 %v1621, 32
      %v1628 = vpop.permute.xlu0 %1627
      %1629 = vrot.lane.b32.xlu0 %v1622, 32
      %v1630 = vpop.permute.xlu0 %1629
      %v1631 = vsel %vm502, %v1624, %v1626
      %v1632 = vsel %vm502, %v1626, %v1628
      %v1633 = vsel %vm502, %v1628, %v1630
      %v1639 = vmul.f32 %v1600, %v1624
      %v1640 = vmul.f32 %v1601, %v1631
      %v1641 = vmul.f32 %v1602, %v1632
      %v1642 = vmul.f32 %v1603, %v1633
      %v1643 = vmul.f32 %v1604, %v1630
      %v1644 = vmul.f32 %v1605, %v1624
      %v1645 = vmul.f32 %v1606, %v1631
      %v1646 = vmul.f32 %v1607, %v1632
      %v1647 = vmul.f32 %v1608, %v1633
      %v1648 = vmul.f32 %v1609, %v1630
      %v1649 = vmul.f32 %v1610, %v1624
      %v1650 = vmul.f32 %v1611, %v1631
      %v1651 = vmul.f32 %v1612, %v1632
      %v1652 = vmul.f32 %v1613, %v1633
      %v1653 = vmul.f32 %v1614, %v1630
      %v1655 = vperm.slane %v1617, 0
      %v1656 = vperm.slane %v1617, 1
      %v1657 = vperm.slane %v1617, 2
      %v1658 = vperm.slane %v1617, 3
      %1659 = vrot.lane.b32.xlu0 %v1655, 32
      %v1660 = vpop.permute.xlu0 %1659
      %1661 = vrot.lane.b32.xlu0 %v1656, 32
      %v1662 = vpop.permute.xlu0 %1661
      %1663 = vrot.lane.b32.xlu0 %v1657, 32
      %v1664 = vpop.permute.xlu0 %1663
      %1665 = vrot.lane.b32.xlu0 %v1658, 32
      %v1666 = vpop.permute.xlu0 %1665
      %v1667 = vsel %vm502, %v1660, %v1662
      %v1668 = vsel %vm502, %v1662, %v1664
      %v1669 = vsel %vm502, %v1664, %v1666
      %v1675 = vadd.f32 %v1639, %v1660
      %v1676 = vadd.f32 %v1640, %v1667
      %v1677 = vadd.f32 %v1641, %v1668
      %v1678 = vadd.f32 %v1642, %v1669
      %v1679 = vadd.f32 %v1643, %v1666
      %v1680 = vadd.f32 %v1644, %v1660
      %v1681 = vadd.f32 %v1645, %v1667
      %v1682 = vadd.f32 %v1646, %v1668
      %v1683 = vadd.f32 %v1647, %v1669
      %v1684 = vadd.f32 %v1648, %v1666
      %v1685 = vadd.f32 %v1649, %v1660
      %v1686 = vadd.f32 %v1650, %v1667
      %v1687 = vadd.f32 %v1651, %v1668
      %v1688 = vadd.f32 %v1652, %v1669
      %v1689 = vadd.f32 %v1653, %v1666
      %v1690 = vmax.f32 %v1675, 0.0
      %v1691 = vmax.f32 %v1676, 0.0
      %v1692 = vmax.f32 %v1677, 0.0
      %v1693 = vmax.f32 %v1678, 0.0
      %v1694 = vmax.f32 %v1679, 0.0
      %v1695 = vmax.f32 %v1680, 0.0
      %v1696 = vmax.f32 %v1681, 0.0
      %v1697 = vmax.f32 %v1682, 0.0
      %v1698 = vmax.f32 %v1683, 0.0
      %v1699 = vmax.f32 %v1684, 0.0
      %v1700 = vmax.f32 %v1685, 0.0
      %v1701 = vmax.f32 %v1686, 0.0
      %v1702 = vmax.f32 %v1687, 0.0
      %v1703 = vmax.f32 %v1688, 0.0
      %v1704 = vmax.f32 %v1689, 0.0
      %v1705 = vld [vmem:[#allocation2] sm:$0xff]
      %v1706 = vld [vmem:[#allocation2 + $0x8] sm:$0xff]
      %v1707 = vld [vmem:[#allocation2 + $0x10] sm:$0xff]
      %v1708 = vld [vmem:[#allocation2 + $0x18] sm:$0xff]
      %s1709 = scalar_lea.vmem %s1, 33
      %v1710 = vld [vmem:[%s1709] ss:$8 sm:$0xf]
      %v1712 = vperm.slane %v1710, 0
      %v1713 = vperm.slane %v1710, 1
      %v1714 = vperm.slane %v1710, 2
      %v1715 = vperm.slane %v1710, 3
      %v1720 = vmul.f32 %v1705, %v1712
      %v1721 = vmul.f32 %v1706, %v1713
      %v1722 = vmul.f32 %v1707, %v1714
      %v1723 = vmul.f32 %v1708, %v1715
      %v1724 = vmul.f32 %v478, %v1712
      %v1725 = vmul.f32 %v479, %v1713
      %v1726 = vmul.f32 %v480, %v1714
      %v1727 = vmul.f32 %v481, %v1715
      %v1728 = vld [vmem:[#allocation2 + $0x20] sm:$0xff]
      %s1729 = scalar_lea.vmem %s1, 34
      %v1730 = vld [vmem:[%s1729] ss:$8 sm:$0xf]
      %v1732 = vperm.slane %v1730, 0
      %v1733 = vperm.slane %v1730, 1
      %v1734 = vperm.slane %v1730, 2
      %v1735 = vperm.slane %v1730, 3
      %1736 = vrot.lane.b32.xlu0 %v1732, 64
      %v1737 = vpop.permute.xlu0 %1736
      %1738 = vrot.lane.b32.xlu0 %v1733, 64
      %v1739 = vpop.permute.xlu0 %1738
      %1740 = vrot.lane.b32.xlu0 %v1734, 64
      %v1741 = vpop.permute.xlu0 %1740
      %1742 = vrot.lane.b32.xlu0 %v1735, 64
      %v1743 = vpop.permute.xlu0 %1742
      %v1744 = vsel %vm428, %v1737, %v1739
      %v1745 = vsel %vm428, %v1739, %v1741
      %v1746 = vsel %vm428, %v1741, %v1743
      %v1752 = vmul.f32 %v1705, %v1737
      %v1753 = vmul.f32 %v1706, %v1744
      %v1754 = vmul.f32 %v1707, %v1745
      %v1755 = vmul.f32 %v1708, %v1746
      %v1756 = vmul.f32 %v1728, %v1743
      %v1757 = vmul.f32 %v478, %v1737
      %v1758 = vmul.f32 %v479, %v1744
      %v1759 = vmul.f32 %v480, %v1745
      %v1760 = vmul.f32 %v481, %v1746
      %v1761 = vmul.f32 %v482, %v1743
      %1772 = vrot.lane.b32.xlu0 %v1752, 64
      %v1773 = vpop.permute.xlu0 %1772
      %1774 = vrot.lane.b32.xlu0 %v1753, 64
      %v1775 = vpop.permute.xlu0 %1774
      %1776 = vrot.lane.b32.xlu0 %v1754, 64
      %v1777 = vpop.permute.xlu0 %1776
      %1778 = vrot.lane.b32.xlu0 %v1755, 64
      %v1779 = vpop.permute.xlu0 %1778
      %1780 = vrot.lane.b32.xlu0 %v1756, 64
      %v1781 = vpop.permute.xlu0 %1780
      %1782 = vrot.lane.b32.xlu0 %v1757, 64
      %v1783 = vpop.permute.xlu0 %1782
      %1784 = vrot.lane.b32.xlu0 %v1758, 64
      %v1785 = vpop.permute.xlu0 %1784
      %1786 = vrot.lane.b32.xlu0 %v1759, 64
      %v1787 = vpop.permute.xlu0 %1786
      %1788 = vrot.lane.b32.xlu0 %v1760, 64
      %v1789 = vpop.permute.xlu0 %1788
      %1790 = vrot.lane.b32.xlu0 %v1761, 64
      %v1791 = vpop.permute.xlu0 %1790
      %v1792 = vsel %vm428, %v1773, %v1775
      %v1793 = vsel %vm428, %v1775, %v1777
      %v1794 = vsel %vm428, %v1777, %v1779
      %v1795 = vsel %vm428, %v1779, %v1781
      %v1796 = vsel %vm428, %v1783, %v1785
      %v1797 = vsel %vm428, %v1785, %v1787
      %v1798 = vsel %vm428, %v1787, %v1789
      %v1799 = vsel %vm428, %v1789, %v1791
      %v1808 = vadd.f32 %v1720, %v1792
      %v1809 = vadd.f32 %v1721, %v1793
      %v1810 = vadd.f32 %v1722, %v1794
      %v1811 = vadd.f32 %v1723, %v1795
      %v1812 = vadd.f32 %v1724, %v1796
      %v1813 = vadd.f32 %v1725, %v1797
      %v1814 = vadd.f32 %v1726, %v1798
      %v1815 = vadd.f32 %v1727, %v1799
      %s1816 = scalar_lea.vmem %s1, 35
      %v1817 = vld [vmem:[%s1816] ss:$8 sm:$0xf]
      %v1819 = vperm.slane %v1817, 0
      %v1820 = vperm.slane %v1817, 1
      %v1821 = vperm.slane %v1817, 2
      %v1822 = vperm.slane %v1817, 3
      %v1827 = vmul.f32 %v1706, %v1819
      %v1828 = vmul.f32 %v1707, %v1820
      %v1829 = vmul.f32 %v1708, %v1821
      %v1830 = vmul.f32 %v1728, %v1822
      %v1831 = vmul.f32 %v479, %v1819
      %v1832 = vmul.f32 %v480, %v1820
      %v1833 = vmul.f32 %v481, %v1821
      %v1834 = vmul.f32 %v482, %v1822
      %v1835 = vadd.f32 %v1808, %v1827
      %v1836 = vadd.f32 %v1809, %v1828
      %v1837 = vadd.f32 %v1810, %v1829
      %v1838 = vadd.f32 %v1811, %v1830
      %v1839 = vadd.f32 %v1812, %v1831
      %v1840 = vadd.f32 %v1813, %v1832
      %v1841 = vadd.f32 %v1814, %v1833
      %v1842 = vadd.f32 %v1815, %v1834
      %s1843 = scalar_lea.vmem %s1, 36
      %v1844 = vld [vmem:[%s1843] ss:$8 sm:$0xf]
      %v1846 = vperm.slane %v1844, 0
      %v1847 = vperm.slane %v1844, 1
      %v1848 = vperm.slane %v1844, 2
      %v1849 = vperm.slane %v1844, 3
      %v1854 = vmul.f32 %v777, %v1846
      %v1855 = vmul.f32 %v778, %v1847
      %v1856 = vmul.f32 %v779, %v1848
      %v1857 = vmul.f32 %v780, %v1849
      %v1858 = vmul.f32 %v478, %v1846
      %v1859 = vmul.f32 %v479, %v1847
      %v1860 = vmul.f32 %v480, %v1848
      %v1861 = vmul.f32 %v481, %v1849
      %v1862 = vmul.f32 %v782, %v1846
      %v1863 = vmul.f32 %v783, %v1847
      %v1864 = vmul.f32 %v784, %v1848
      %v1865 = vmul.f32 %v785, %v1849
      %v1878 = vrot.slane %v1854, 2
      %v1879 = vrot.slane %v1858, 2
      %v1880 = vsel %vm1259, %v1878, %v1879
      %v1881 = vrot.slane %v1855, 2
      %v1882 = vrot.slane %v1859, 2
      %v1883 = vsel %vm1259, %v1881, %v1882
      %v1884 = vrot.slane %v1856, 2
      %v1885 = vrot.slane %v1860, 2
      %v1886 = vsel %vm1259, %v1884, %v1885
      %v1887 = vrot.slane %v1857, 2
      %v1888 = vrot.slane %v1861, 2
      %v1889 = vsel %vm1259, %v1887, %v1888
      %v1890 = vrot.slane %v1862, 2
      %v1891 = vsel %vm1259, %v1879, %v1890
      %v1892 = vrot.slane %v1863, 2
      %v1893 = vsel %vm1259, %v1882, %v1892
      %v1894 = vrot.slane %v1864, 2
      %v1895 = vsel %vm1259, %v1885, %v1894
      %v1896 = vrot.slane %v1865, 2
      %v1897 = vsel %vm1259, %v1888, %v1896
      %v1906 = vadd.f32 %v1835, %v1880
      %v1907 = vadd.f32 %v1836, %v1883
      %v1908 = vadd.f32 %v1837, %v1886
      %v1909 = vadd.f32 %v1838, %v1889
      %v1910 = vadd.f32 %v1839, %v1891
      %v1911 = vadd.f32 %v1840, %v1893
      %v1912 = vadd.f32 %v1841, %v1895
      %v1913 = vadd.f32 %v1842, %v1897
      %s1914 = scalar_lea.vmem %s1, 37
      %v1915 = vld [vmem:[%s1914] ss:$8 sm:$0xf]
      %v1917 = vperm.slane %v1915, 0
      %v1918 = vperm.slane %v1915, 1
      %v1919 = vperm.slane %v1915, 2
      %v1920 = vperm.slane %v1915, 3
      %1921 = vrot.lane.b32.xlu0 %v1917, 64
      %v1922 = vpop.permute.xlu0 %1921
      %1923 = vrot.lane.b32.xlu0 %v1918, 64
      %v1924 = vpop.permute.xlu0 %1923
      %1925 = vrot.lane.b32.xlu0 %v1919, 64
      %v1926 = vpop.permute.xlu0 %1925
      %1927 = vrot.lane.b32.xlu0 %v1920, 64
      %v1928 = vpop.permute.xlu0 %1927
      %v1929 = vsel %vm428, %v1922, %v1924
      %v1930 = vsel %vm428, %v1924, %v1926
      %v1931 = vsel %vm428, %v1926, %v1928
      %v1937 = vmul.f32 %v777, %v1922
      %v1938 = vmul.f32 %v778, %v1929
      %v1939 = vmul.f32 %v779, %v1930
      %v1940 = vmul.f32 %v780, %v1931
      %v1941 = vmul.f32 %v781, %v1928
      %v1942 = vmul.f32 %v478, %v1922
      %v1943 = vmul.f32 %v479, %v1929
      %v1944 = vmul.f32 %v480, %v1930
      %v1945 = vmul.f32 %v481, %v1931
      %v1946 = vmul.f32 %v482, %v1928
      %v1947 = vmul.f32 %v782, %v1922
      %v1948 = vmul.f32 %v783, %v1929
      %v1949 = vmul.f32 %v784, %v1930
      %v1950 = vmul.f32 %v785, %v1931
      %v1951 = vmul.f32 %v786, %v1928
      %v1967 = vrot.slane %v1937, 2
      %v1968 = vrot.slane %v1942, 2
      %v1969 = vsel %vm1259, %v1967, %v1968
      %v1970 = vrot.slane %v1938, 2
      %v1971 = vrot.slane %v1943, 2
      %v1972 = vsel %vm1259, %v1970, %v1971
      %v1973 = vrot.slane %v1939, 2
      %v1974 = vrot.slane %v1944, 2
      %v1975 = vsel %vm1259, %v1973, %v1974
      %v1976 = vrot.slane %v1940, 2
      %v1977 = vrot.slane %v1945, 2
      %v1978 = vsel %vm1259, %v1976, %v1977
      %v1979 = vrot.slane %v1941, 2
      %v1980 = vrot.slane %v1946, 2
      %v1981 = vsel %vm1259, %v1979, %v1980
      %v1982 = vrot.slane %v1947, 2
      %v1983 = vsel %vm1259, %v1968, %v1982
      %v1984 = vrot.slane %v1948, 2
      %v1985 = vsel %vm1259, %v1971, %v1984
      %v1986 = vrot.slane %v1949, 2
      %v1987 = vsel %vm1259, %v1974, %v1986
      %v1988 = vrot.slane %v1950, 2
      %v1989 = vsel %vm1259, %v1977, %v1988
      %v1990 = vrot.slane %v1951, 2
      %v1991 = vsel %vm1259, %v1980, %v1990
      %1992 = vrot.lane.b32.xlu0 %v1969, 64
      %v1993 = vpop.permute.xlu0 %1992
      %1994 = vrot.lane.b32.xlu0 %v1972, 64
      %v1995 = vpop.permute.xlu0 %1994
      %1996 = vrot.lane.b32.xlu0 %v1975, 64
      %v1997 = vpop.permute.xlu0 %1996
      %1998 = vrot.lane.b32.xlu0 %v1978, 64
      %v1999 = vpop.permute.xlu0 %1998
      %2000 = vrot.lane.b32.xlu0 %v1981, 64
      %v2001 = vpop.permute.xlu0 %2000
      %2002 = vrot.lane.b32.xlu0 %v1983, 64
      %v2003 = vpop.permute.xlu0 %2002
      %2004 = vrot.lane.b32.xlu0 %v1985, 64
      %v2005 = vpop.permute.xlu0 %2004
      %2006 = vrot.lane.b32.xlu0 %v1987, 64
      %v2007 = vpop.permute.xlu0 %2006
      %2008 = vrot.lane.b32.xlu0 %v1989, 64
      %v2009 = vpop.permute.xlu0 %2008
      %2010 = vrot.lane.b32.xlu0 %v1991, 64
      %v2011 = vpop.permute.xlu0 %2010
      %v2012 = vsel %vm428, %v1993, %v1995
      %v2013 = vsel %vm428, %v1995, %v1997
      %v2014 = vsel %vm428, %v1997, %v1999
      %v2015 = vsel %vm428, %v1999, %v2001
      %v2016 = vsel %vm428, %v2003, %v2005
      %v2017 = vsel %vm428, %v2005, %v2007
      %v2018 = vsel %vm428, %v2007, %v2009
      %v2019 = vsel %vm428, %v2009, %v2011
      %v2028 = vadd.f32 %v1906, %v2012
      %v2029 = vadd.f32 %v1907, %v2013
      %v2030 = vadd.f32 %v1908, %v2014
      %v2031 = vadd.f32 %v1909, %v2015
      %v2032 = vadd.f32 %v1910, %v2016
      %v2033 = vadd.f32 %v1911, %v2017
      %v2034 = vadd.f32 %v1912, %v2018
      %v2035 = vadd.f32 %v1913, %v2019
      %s2036 = scalar_lea.vmem %s1, 38
      %v2037 = vld [vmem:[%s2036] ss:$8 sm:$0xf]
      %v2039 = vperm.slane %v2037, 0
      %v2040 = vperm.slane %v2037, 1
      %v2041 = vperm.slane %v2037, 2
      %v2042 = vperm.slane %v2037, 3
      %v2047 = vmul.f32 %v778, %v2039
      %v2048 = vmul.f32 %v779, %v2040
      %v2049 = vmul.f32 %v780, %v2041
      %v2050 = vmul.f32 %v781, %v2042
      %v2051 = vmul.f32 %v479, %v2039
      %v2052 = vmul.f32 %v480, %v2040
      %v2053 = vmul.f32 %v481, %v2041
      %v2054 = vmul.f32 %v482, %v2042
      %v2055 = vmul.f32 %v783, %v2039
      %v2056 = vmul.f32 %v784, %v2040
      %v2057 = vmul.f32 %v785, %v2041
      %v2058 = vmul.f32 %v786, %v2042
      %v2071 = vrot.slane %v2047, 2
      %v2072 = vrot.slane %v2051, 2
      %v2073 = vsel %vm1259, %v2071, %v2072
      %v2074 = vrot.slane %v2048, 2
      %v2075 = vrot.slane %v2052, 2
      %v2076 = vsel %vm1259, %v2074, %v2075
      %v2077 = vrot.slane %v2049, 2
      %v2078 = vrot.slane %v2053, 2
      %v2079 = vsel %vm1259, %v2077, %v2078
      %v2080 = vrot.slane %v2050, 2
      %v2081 = vrot.slane %v2054, 2
      %v2082 = vsel %vm1259, %v2080, %v2081
      %v2083 = vrot.slane %v2055, 2
      %v2084 = vsel %vm1259, %v2072, %v2083
      %v2085 = vrot.slane %v2056, 2
      %v2086 = vsel %vm1259, %v2075, %v2085
      %v2087 = vrot.slane %v2057, 2
      %v2088 = vsel %vm1259, %v2078, %v2087
      %v2089 = vrot.slane %v2058, 2
      %v2090 = vsel %vm1259, %v2081, %v2089
      %v2099 = vadd.f32 %v2028, %v2073
      %v2100 = vadd.f32 %v2029, %v2076
      %v2101 = vadd.f32 %v2030, %v2079
      %v2102 = vadd.f32 %v2031, %v2082
      %v2103 = vadd.f32 %v2032, %v2084
      %v2104 = vadd.f32 %v2033, %v2086
      %v2105 = vadd.f32 %v2034, %v2088
      %v2106 = vadd.f32 %v2035, %v2090
      %v2107 = vld [vmem:[#allocation2] sm:$0xf0]
      %v2108 = vld [vmem:[#allocation2 + $0x8] sm:$0xf0]
      %v2109 = vld [vmem:[#allocation2 + $0x10] sm:$0xf0]
      %v2110 = vld [vmem:[#allocation2 + $0x18] sm:$0xf0]
      %v2111 = vld [vmem:[#allocation2 + $0x50] sm:$0xf]
      %v2112 = vld [vmem:[#allocation2 + $0x58] sm:$0xf]
      %v2113 = vld [vmem:[#allocation2 + $0x60] sm:$0xf]
      %v2114 = vld [vmem:[#allocation2 + $0x68] sm:$0xf]
      %s2115 = scalar_lea.vmem %s1, 39
      %v2116 = vld [vmem:[%s2115] ss:$8 sm:$0xf]
      %v2118 = vperm.slane %v2116, 0
      %v2119 = vperm.slane %v2116, 1
      %v2120 = vperm.slane %v2116, 2
      %v2121 = vperm.slane %v2116, 3
      %v2126 = vmul.f32 %v2107, %v2118
      %v2127 = vmul.f32 %v2108, %v2119
      %v2128 = vmul.f32 %v2109, %v2120
      %v2129 = vmul.f32 %v2110, %v2121
      %v2130 = vmul.f32 %v478, %v2118
      %v2131 = vmul.f32 %v479, %v2119
      %v2132 = vmul.f32 %v480, %v2120
      %v2133 = vmul.f32 %v481, %v2121
      %v2134 = vmul.f32 %v2111, %v2118
      %v2135 = vmul.f32 %v2112, %v2119
      %v2136 = vmul.f32 %v2113, %v2120
      %v2137 = vmul.f32 %v2114, %v2121
      %vm2150 = vcmask 1043456
      %v2151 = vrot.slane %v2126, 4
      %v2152 = vrot.slane %v2130, 4
      %v2153 = vsel %vm2150, %v2151, %v2152
      %v2154 = vrot.slane %v2127, 4
      %v2155 = vrot.slane %v2131, 4
      %v2156 = vsel %vm2150, %v2154, %v2155
      %v2157 = vrot.slane %v2128, 4
      %v2158 = vrot.slane %v2132, 4
      %v2159 = vsel %vm2150, %v2157, %v2158
      %v2160 = vrot.slane %v2129, 4
      %v2161 = vrot.slane %v2133, 4
      %v2162 = vsel %vm2150, %v2160, %v2161
      %v2163 = vrot.slane %v2134, 4
      %v2164 = vsel %vm2150, %v2152, %v2163
      %v2165 = vrot.slane %v2135, 4
      %v2166 = vsel %vm2150, %v2155, %v2165
      %v2167 = vrot.slane %v2136, 4
      %v2168 = vsel %vm2150, %v2158, %v2167
      %v2169 = vrot.slane %v2137, 4
      %v2170 = vsel %vm2150, %v2161, %v2169
      %v2179 = vadd.f32 %v2099, %v2153
      %v2180 = vadd.f32 %v2100, %v2156
      %v2181 = vadd.f32 %v2101, %v2159
      %v2182 = vadd.f32 %v2102, %v2162
      %v2183 = vadd.f32 %v2103, %v2164
      %v2184 = vadd.f32 %v2104, %v2166
      %v2185 = vadd.f32 %v2105, %v2168
      %v2186 = vadd.f32 %v2106, %v2170
      %v2187 = vld [vmem:[#allocation2 + $0x20] sm:$0xf0]
      %v2188 = vld [vmem:[#allocation2 + $0x70] sm:$0xf]
      %s2189 = scalar_lea.vmem %s1, 64
      %v2190 = vld [vmem:[%s2189] ss:$8 sm:$0xf]
      %v2192 = vperm.slane %v2190, 0
      %v2193 = vperm.slane %v2190, 1
      %v2194 = vperm.slane %v2190, 2
      %v2195 = vperm.slane %v2190, 3
      %2196 = vrot.lane.b32.xlu0 %v2192, 64
      %v2197 = vpop.permute.xlu0 %2196
      %2198 = vrot.lane.b32.xlu0 %v2193, 64
      %v2199 = vpop.permute.xlu0 %2198
      %2200 = vrot.lane.b32.xlu0 %v2194, 64
      %v2201 = vpop.permute.xlu0 %2200
      %2202 = vrot.lane.b32.xlu0 %v2195, 64
      %v2203 = vpop.permute.xlu0 %2202
      %v2204 = vsel %vm428, %v2197, %v2199
      %v2205 = vsel %vm428, %v2199, %v2201
      %v2206 = vsel %vm428, %v2201, %v2203
      %v2212 = vmul.f32 %v2107, %v2197
      %v2213 = vmul.f32 %v2108, %v2204
      %v2214 = vmul.f32 %v2109, %v2205
      %v2215 = vmul.f32 %v2110, %v2206
      %v2216 = vmul.f32 %v2187, %v2203
      %v2217 = vmul.f32 %v478, %v2197
      %v2218 = vmul.f32 %v479, %v2204
      %v2219 = vmul.f32 %v480, %v2205
      %v2220 = vmul.f32 %v481, %v2206
      %v2221 = vmul.f32 %v482, %v2203
      %v2222 = vmul.f32 %v2111, %v2197
      %v2223 = vmul.f32 %v2112, %v2204
      %v2224 = vmul.f32 %v2113, %v2205
      %v2225 = vmul.f32 %v2114, %v2206
      %v2226 = vmul.f32 %v2188, %v2203
      %v2242 = vrot.slane %v2212, 4
      %v2243 = vrot.slane %v2217, 4
      %v2244 = vsel %vm2150, %v2242, %v2243
      %v2245 = vrot.slane %v2213, 4
      %v2246 = vrot.slane %v2218, 4
      %v2247 = vsel %vm2150, %v2245, %v2246
      %v2248 = vrot.slane %v2214, 4
      %v2249 = vrot.slane %v2219, 4
      %v2250 = vsel %vm2150, %v2248, %v2249
      %v2251 = vrot.slane %v2215, 4
      %v2252 = vrot.slane %v2220, 4
      %v2253 = vsel %vm2150, %v2251, %v2252
      %v2254 = vrot.slane %v2216, 4
      %v2255 = vrot.slane %v2221, 4
      %v2256 = vsel %vm2150, %v2254, %v2255
      %v2257 = vrot.slane %v2222, 4
      %v2258 = vsel %vm2150, %v2243, %v2257
      %v2259 = vrot.slane %v2223, 4
      %v2260 = vsel %vm2150, %v2246, %v2259
      %v2261 = vrot.slane %v2224, 4
      %v2262 = vsel %vm2150, %v2249, %v2261
      %v2263 = vrot.slane %v2225, 4
      %v2264 = vsel %vm2150, %v2252, %v2263
      %v2265 = vrot.slane %v2226, 4
      %v2266 = vsel %vm2150, %v2255, %v2265
      %2267 = vrot.lane.b32.xlu0 %v2244, 64
      %v2268 = vpop.permute.xlu0 %2267
      %2269 = vrot.lane.b32.xlu0 %v2247, 64
      %v2270 = vpop.permute.xlu0 %2269
      %2271 = vrot.lane.b32.xlu0 %v2250, 64
      %v2272 = vpop.permute.xlu0 %2271
      %2273 = vrot.lane.b32.xlu0 %v2253, 64
      %v2274 = vpop.permute.xlu0 %2273
      %2275 = vrot.lane.b32.xlu0 %v2256, 64
      %v2276 = vpop.permute.xlu0 %2275
      %2277 = vrot.lane.b32.xlu0 %v2258, 64
      %v2278 = vpop.permute.xlu0 %2277
      %2279 = vrot.lane.b32.xlu0 %v2260, 64
      %v2280 = vpop.permute.xlu0 %2279
      %2281 = vrot.lane.b32.xlu0 %v2262, 64
      %v2282 = vpop.permute.xlu0 %2281
      %2283 = vrot.lane.b32.xlu0 %v2264, 64
      %v2284 = vpop.permute.xlu0 %2283
      %2285 = vrot.lane.b32.xlu0 %v2266, 64
      %v2286 = vpop.permute.xlu0 %2285
      %v2287 = vsel %vm428, %v2268, %v2270
      %v2288 = vsel %vm428, %v2270, %v2272
      %v2289 = vsel %vm428, %v2272, %v2274
      %v2290 = vsel %vm428, %v2274, %v2276
      %v2291 = vsel %vm428, %v2278, %v2280
      %v2292 = vsel %vm428, %v2280, %v2282
      %v2293 = vsel %vm428, %v2282, %v2284
      %v2294 = vsel %vm428, %v2284, %v2286
      %v2303 = vadd.f32 %v2179, %v2287
      %v2304 = vadd.f32 %v2180, %v2288
      %v2305 = vadd.f32 %v2181, %v2289
      %v2306 = vadd.f32 %v2182, %v2290
      %v2307 = vadd.f32 %v2183, %v2291
      %v2308 = vadd.f32 %v2184, %v2292
      %v2309 = vadd.f32 %v2185, %v2293
      %v2310 = vadd.f32 %v2186, %v2294
      %s2311 = scalar_lea.vmem %s1, 65
      %v2312 = vld [vmem:[%s2311] ss:$8 sm:$0xf]
      %v2314 = vperm.slane %v2312, 0
      %v2315 = vperm.slane %v2312, 1
      %v2316 = vperm.slane %v2312, 2
      %v2317 = vperm.slane %v2312, 3
      %v2322 = vmul.f32 %v2108, %v2314
      %v2323 = vmul.f32 %v2109, %v2315
      %v2324 = vmul.f32 %v2110, %v2316
      %v2325 = vmul.f32 %v2187, %v2317
      %v2326 = vmul.f32 %v479, %v2314
      %v2327 = vmul.f32 %v480, %v2315
      %v2328 = vmul.f32 %v481, %v2316
      %v2329 = vmul.f32 %v482, %v2317
      %v2330 = vmul.f32 %v2112, %v2314
      %v2331 = vmul.f32 %v2113, %v2315
      %v2332 = vmul.f32 %v2114, %v2316
      %v2333 = vmul.f32 %v2188, %v2317
      %v2346 = vrot.slane %v2322, 4
      %v2347 = vrot.slane %v2326, 4
      %v2348 = vsel %vm2150, %v2346, %v2347
      %v2349 = vrot.slane %v2323, 4
      %v2350 = vrot.slane %v2327, 4
      %v2351 = vsel %vm2150, %v2349, %v2350
      %v2352 = vrot.slane %v2324, 4
      %v2353 = vrot.slane %v2328, 4
      %v2354 = vsel %vm2150, %v2352, %v2353
      %v2355 = vrot.slane %v2325, 4
      %v2356 = vrot.slane %v2329, 4
      %v2357 = vsel %vm2150, %v2355, %v2356
      %v2358 = vrot.slane %v2330, 4
      %v2359 = vsel %vm2150, %v2347, %v2358
      %v2360 = vrot.slane %v2331, 4
      %v2361 = vsel %vm2150, %v2350, %v2360
      %v2362 = vrot.slane %v2332, 4
      %v2363 = vsel %vm2150, %v2353, %v2362
      %v2364 = vrot.slane %v2333, 4
      %v2365 = vsel %vm2150, %v2356, %v2364
      %v2374 = vadd.f32 %v2303, %v2348
      %v2375 = vadd.f32 %v2304, %v2351
      %v2376 = vadd.f32 %v2305, %v2354
      %v2377 = vadd.f32 %v2306, %v2357
      %v2378 = vadd.f32 %v2307, %v2359
      %v2379 = vadd.f32 %v2308, %v2361
      %v2380 = vadd.f32 %v2309, %v2363
      %v2381 = vadd.f32 %v2310, %v2365
      %s2382 = scalar_lea.vmem %s2, 2
      %v2383 = vld [vmem:[%s2382] ss:$8 sm:$0xf]
      %s2384 = scalar_lea.vmem %s2, 3
      %v2385 = vld [vmem:[%s2384] ss:$8 sm:$0xf]
      %v2387 = vperm.slane %v2383, 0
      %v2388 = vperm.slane %v2383, 1
      %v2389 = vperm.slane %v2383, 2
      %v2390 = vperm.slane %v2383, 3
      %v2395 = vmul.f32 %v2374, %v2387
      %v2396 = vmul.f32 %v2375, %v2388
      %v2397 = vmul.f32 %v2376, %v2389
      %v2398 = vmul.f32 %v2377, %v2390
      %v2399 = vmul.f32 %v2378, %v2387
      %v2400 = vmul.f32 %v2379, %v2388
      %v2401 = vmul.f32 %v2380, %v2389
      %v2402 = vmul.f32 %v2381, %v2390
      %v2404 = vperm.slane %v2385, 0
      %v2405 = vperm.slane %v2385, 1
      %v2406 = vperm.slane %v2385, 2
      %v2407 = vperm.slane %v2385, 3
      %v2412 = vadd.f32 %v2395, %v2404
      %v2413 = vadd.f32 %v2396, %v2405
      %v2414 = vadd.f32 %v2397, %v2406
      %v2415 = vadd.f32 %v2398, %v2407
      %v2416 = vadd.f32 %v2399, %v2404
      %v2417 = vadd.f32 %v2400, %v2405
      %v2418 = vadd.f32 %v2401, %v2406
      %v2419 = vadd.f32 %v2402, %v2407
      %v2420 = vmax.f32 %v2412, 0.0
      %v2421 = vmax.f32 %v2413, 0.0
      %v2422 = vmax.f32 %v2414, 0.0
      %v2423 = vmax.f32 %v2415, 0.0
      %v2424 = vmax.f32 %v2416, 0.0
      %v2425 = vmax.f32 %v2417, 0.0
      %v2426 = vmax.f32 %v2418, 0.0
      %v2427 = vmax.f32 %v2419, 0.0
      %vm2436 = vcmask 1040384
      %v2437 = vrot.slane %v2420, 7
      %v2438 = vrot.slane %v2421, 7
      %v2439 = vrot.slane %v2422, 7
      %v2440 = vrot.slane %v2423, 7
      %v2441 = vrot.slane %v2424, 7
      %v2442 = vsel %vm2436, %v2437, %v2441
      %v2443 = vrot.slane %v2425, 7
      %v2444 = vsel %vm2436, %v2438, %v2443
      %v2445 = vrot.slane %v2426, 7
      %v2446 = vsel %vm2436, %v2439, %v2445
      %v2447 = vrot.slane %v2427, 7
      %v2448 = vsel %vm2436, %v2440, %v2447
      %2449 = vrot.lane.b32.xlu0 %v2437, 32
      %v2450 = vpop.permute.xlu0 %2449
      %2451 = vrot.lane.b32.xlu0 %v2438, 32
      %v2452 = vpop.permute.xlu0 %2451
      %2453 = vrot.lane.b32.xlu0 %v2439, 32
      %v2454 = vpop.permute.xlu0 %2453
      %2455 = vrot.lane.b32.xlu0 %v2440, 32
      %v2456 = vpop.permute.xlu0 %2455
      %2457 = vrot.lane.b32.xlu0 %v2442, 32
      %v2458 = vpop.permute.xlu0 %2457
      %2459 = vrot.lane.b32.xlu0 %v2444, 32
      %v2460 = vpop.permute.xlu0 %2459
      %2461 = vrot.lane.b32.xlu0 %v2446, 32
      %v2462 = vpop.permute.xlu0 %2461
      %2463 = vrot.lane.b32.xlu0 %v2448, 32
      %v2464 = vpop.permute.xlu0 %2463
      %2465 = vrot.lane.b32.xlu0 %v2441, 32
      %v2466 = vpop.permute.xlu0 %2465
      %2467 = vrot.lane.b32.xlu0 %v2443, 32
      %v2468 = vpop.permute.xlu0 %2467
      %2469 = vrot.lane.b32.xlu0 %v2445, 32
      %v2470 = vpop.permute.xlu0 %2469
      %2471 = vrot.lane.b32.xlu0 %v2447, 32
      %v2472 = vpop.permute.xlu0 %2471
      %v2473 = vsel %vm502, %v2450, %v2452
      %v2474 = vsel %vm502, %v2452, %v2454
      %v2475 = vsel %vm502, %v2454, %v2456
      %v2476 = vsel %vm502, %v2458, %v2460
      %v2477 = vsel %vm502, %v2460, %v2462
      %v2478 = vsel %vm502, %v2462, %v2464
      %v2479 = vsel %vm502, %v2466, %v2468
      %v2480 = vsel %vm502, %v2468, %v2470
      %v2481 = vsel %vm502, %v2470, %v2472
      %v2497 = vadd.f32 %v1690, %v2450
      %v2498 = vadd.f32 %v1691, %v2473
      %v2499 = vadd.f32 %v1692, %v2474
      %v2500 = vadd.f32 %v1693, %v2475
      %v2501 = vadd.f32 %v1694, %v2456
      %v2502 = vadd.f32 %v1695, %v2458
      %v2503 = vadd.f32 %v1696, %v2476
      %v2504 = vadd.f32 %v1697, %v2477
      %v2505 = vadd.f32 %v1698, %v2478
      %v2506 = vadd.f32 %v1699, %v2464
      %v2507 = vadd.f32 %v1700, %v2466
      %v2508 = vadd.f32 %v1701, %v2479
      %v2509 = vadd.f32 %v1702, %v2480
      %v2510 = vadd.f32 %v1703, %v2481
      %v2511 = vadd.f32 %v1704, %v2472
      %v2527 = vrot.slane %v2497, 1
      %v2528 = vrot.slane %v2502, 1
      %v2529 = vsel %vm840, %v2527, %v2528
      %v2530 = vrot.slane %v2498, 1
      %v2531 = vrot.slane %v2503, 1
      %v2532 = vsel %vm840, %v2530, %v2531
      %v2533 = vrot.slane %v2499, 1
      %v2534 = vrot.slane %v2504, 1
      %v2535 = vsel %vm840, %v2533, %v2534
      %v2536 = vrot.slane %v2500, 1
      %v2537 = vrot.slane %v2505, 1
      %v2538 = vsel %vm840, %v2536, %v2537
      %v2539 = vrot.slane %v2501, 1
      %v2540 = vrot.slane %v2506, 1
      %v2541 = vsel %vm840, %v2539, %v2540
      %v2542 = vrot.slane %v2507, 1
      %v2543 = vsel %vm840, %v2528, %v2542
      %v2544 = vrot.slane %v2508, 1
      %v2545 = vsel %vm840, %v2531, %v2544
      %v2546 = vrot.slane %v2509, 1
      %v2547 = vsel %vm840, %v2534, %v2546
      %v2548 = vrot.slane %v2510, 1
      %v2549 = vsel %vm840, %v2537, %v2548
      %v2550 = vrot.slane %v2511, 1
      %v2551 = vsel %vm840, %v2540, %v2550
      %vm2562 = vcmask 1047808
      %v2563 = vsel %vm2562, %v2529, 0.0
      %v2564 = vsel %vm2562, %v2543, 0.0
      %v2565 = vadd.f32 %v2563, %v2564
      %v2566 = vrot.slane %v2565, 4
      %v2567 = vadd.f32 %v2565, %v2566
      %v2568 = vrot.slane %v2567, 2
      %v2569 = vadd.f32 %v2567, %v2568
      %v2570 = vrot.slane %v2569, 1
      %v2571 = vadd.f32 %v2569, %v2570
      %v2572 = vadd.f32 %v2532, %v2545
      %v2573 = vrot.slane %v2572, 4
      %v2574 = vadd.f32 %v2572, %v2573
      %v2575 = vrot.slane %v2574, 2
      %v2576 = vadd.f32 %v2574, %v2575
      %v2577 = vrot.slane %v2576, 1
      %v2578 = vadd.f32 %v2576, %v2577
      %v2579 = vadd.f32 %v2535, %v2547
      %v2580 = vrot.slane %v2579, 4
      %v2581 = vadd.f32 %v2579, %v2580
      %v2582 = vrot.slane %v2581, 2
      %v2583 = vadd.f32 %v2581, %v2582
      %v2584 = vrot.slane %v2583, 1
      %v2585 = vadd.f32 %v2583, %v2584
      %v2586 = vadd.f32 %v2538, %v2549
      %v2587 = vrot.slane %v2586, 4
      %v2588 = vadd.f32 %v2586, %v2587
      %v2589 = vrot.slane %v2588, 2
      %v2590 = vadd.f32 %v2588, %v2589
      %v2591 = vrot.slane %v2590, 1
      %v2592 = vadd.f32 %v2590, %v2591
      %v2593 = vsel %vm502, %v2541, 0.0
      %v2594 = vsel %vm502, %v2551, 0.0
      %v2595 = vadd.f32 %v2593, %v2594
      %v2596 = vrot.slane %v2595, 4
      %v2597 = vadd.f32 %v2595, %v2596
      %v2598 = vrot.slane %v2597, 2
      %v2599 = vadd.f32 %v2597, %v2598
      %v2600 = vrot.slane %v2599, 1
      %v2601 = vadd.f32 %v2599, %v2600
      %2603 = vrot.lane.b32.xlu0 %v2571, 96
      %v2604 = vpop.permute.xlu0 %2603
      %v2606 = vadd.f32 %v2571, %v2604
      %2607 = vrot.lane.b32.xlu0 %v2571, 64
      %v2608 = vpop.permute.xlu0 %2607
      %v2610 = vadd.f32 %v2606, %v2608
      %2612 = vrot.lane.b32.xlu0 %v2578, 32
      %v2613 = vpop.permute.xlu0 %2612
      %v2615 = vadd.f32 %v2610, %v2613
      %v2616 = vadd.f32 %v2615, %v2578
      %2617 = vrot.lane.b32.xlu0 %v2578, 96
      %v2618 = vpop.permute.xlu0 %2617
      %v2620 = vadd.f32 %v2616, %v2618
      %2621 = vrot.lane.b32.xlu0 %v2578, 64
      %v2622 = vpop.permute.xlu0 %2621
      %v2624 = vadd.f32 %v2620, %v2622
      %2626 = vrot.lane.b32.xlu0 %v2585, 32
      %v2627 = vpop.permute.xlu0 %2626
      %v2629 = vadd.f32 %v2624, %v2627
      %v2630 = vadd.f32 %v2629, %v2585
      %2631 = vrot.lane.b32.xlu0 %v2585, 96
      %v2632 = vpop.permute.xlu0 %2631
      %v2634 = vadd.f32 %v2630, %v2632
      %2635 = vrot.lane.b32.xlu0 %v2585, 64
      %v2636 = vpop.permute.xlu0 %2635
      %v2638 = vadd.f32 %v2634, %v2636
      %2640 = vrot.lane.b32.xlu0 %v2592, 32
      %v2641 = vpop.permute.xlu0 %2640
      %v2643 = vadd.f32 %v2638, %v2641
      %v2644 = vadd.f32 %v2643, %v2592
      %2645 = vrot.lane.b32.xlu0 %v2592, 96
      %v2646 = vpop.permute.xlu0 %2645
      %v2648 = vadd.f32 %v2644, %v2646
      %2649 = vrot.lane.b32.xlu0 %v2592, 64
      %v2650 = vpop.permute.xlu0 %2649
      %v2652 = vadd.f32 %v2648, %v2650
      %2654 = vrot.lane.b32.xlu0 %v2601, 32
      %v2655 = vpop.permute.xlu0 %2654
      %v2657 = vadd.f32 %v2652, %v2655
      %v2658 = vmul.f32 %v2657, 0.00390625
      %v2659 = vld [vmem:[%s3] sm:$0xff]
      %v2660 = vld [vmem:[%s3 + $0x8] sm:$0xff]
      %v2661 = vld [vmem:[%s3 + $0x10] sm:$0xff]
      %v2662 = vld [vmem:[%s3 + $0x18] sm:$0xff]
      %2664 = vrot.lane.b32.xlu0 %v2658, 96
      %v2665 = vpop.permute.xlu0 %2664
      %v2666 = vsel %vm502, %v2665, 0
      %2668 = vmatpush.msra.mxu0 0.0
      %2669 = vmatpush.msra.mxu0 0.0
      %2670 = vmatpush.msra.mxu0 0.0
      %2671 = vmatpush.msra.mxu0 0.0
      %2672 = vmatpush.msra.mxu0 0.0
      %2673 = vmatpush.msra.mxu0 0.0
      %2674 = vmatpush.msra.mxu0 0.0
      %2675 = vmatpush.msra.mxu0 0.0
      %2676 = vmatpush.msra.mxu0 0.0
      %2677 = vmatpush.msra.mxu0 0.0
      %2678 = vmatpush.msra.mxu0 0.0
      %2679 = vmatpush.msra.mxu0 0.0
      %2680 = vmatpush.msra.mxu0 %v2662
      %2681 = vmatpush.msra.mxu0 %v2661
      %2682 = vmatpush.msra.mxu0 %v2660
      %2683 = vmatpush.msra.mxu0 %v2659
      %2684 = vmatmul.f32.gmra.mxu0 %v2666
      %v2685 = vpop.f32.mrf.mxu0
      %v2686 = vadd.f32 0.0, %v2685
      %2687 = vdwg.mxu0
      %v2688 = vld [vmem:[%s4] sm:$0x1]
      %v2689 = vmul.f32 %v2686, %v2688
      %v2690 = vld [vmem:[%s5] sm:$0x1]
      %v2691 = vadd.f32 %v2689, %v2690
      %v2692 = vmax.f32 %v2691, 0.0
      %v2693 = vld [vmem:[%s6] sm:$0xff]
      %v2694 = vld [vmem:[%s6 + $0x8] sm:$0xff]
      %v2695 = vld [vmem:[%s6 + $0x10] sm:$0xff]
      %v2696 = vld [vmem:[%s6 + $0x18] sm:$0xff]
      %v2697 = vld [vmem:[%s7] sm:$0x1]
      %v2699 = vsel %vm502, %v2692, 0
      %2701 = vmatpush.msra.mxu0 0.0
      %2702 = vmatpush.msra.mxu0 0.0
      %2703 = vmatpush.msra.mxu0 0.0
      %2704 = vmatpush.msra.mxu0 0.0
      %2705 = vmatpush.msra.mxu0 0.0
      %2706 = vmatpush.msra.mxu0 0.0
      %2707 = vmatpush.msra.mxu0 0.0
      %2708 = vmatpush.msra.mxu0 0.0
      %2709 = vmatpush.msra.mxu0 0.0
      %2710 = vmatpush.msra.mxu0 0.0
      %2711 = vmatpush.msra.mxu0 0.0
      %2712 = vmatpush.msra.mxu0 0.0
      %2713 = vmatpush.msra.mxu0 %v2696
      %2714 = vmatpush.msra.mxu0 %v2695
      %2715 = vmatpush.msra.mxu0 %v2694
      %2716 = vmatpush.msra.mxu0 %v2693
      %2717 = vmatmul.f32.gmra.mxu0 %v2699
      %v2718 = vpop.f32.mrf.mxu0
      %v2719 = vadd.f32 %v2697, %v2718
      %2720 = vdwg.mxu0
      %v2721 = vld [vmem:[%s8] sm:$0xff]
      %v2722 = vld [vmem:[%s8 + $0x8] sm:$0xff]
      %v2723 = vld [vmem:[%s8 + $0x10] sm:$0xff]
      %v2724 = vld [vmem:[%s8 + $0x18] sm:$0xff]
      %v2725 = vld [vmem:[%s9] sm:$0x1]
      %2726 = vmatpush.msra.mxu0 0.0
      %2727 = vmatpush.msra.mxu0 0.0
      %2728 = vmatpush.msra.mxu0 0.0
      %2729 = vmatpush.msra.mxu0 0.0
      %2730 = vmatpush.msra.mxu0 0.0
      %2731 = vmatpush.msra.mxu0 0.0
      %2732 = vmatpush.msra.mxu0 0.0
      %2733 = vmatpush.msra.mxu0 0.0
      %2734 = vmatpush.msra.mxu0 0.0
      %2735 = vmatpush.msra.mxu0 0.0
      %2736 = vmatpush.msra.mxu0 0.0
      %2737 = vmatpush.msra.mxu0 0.0
      %2738 = vmatpush.msra.mxu0 %v2724
      %2739 = vmatpush.msra.mxu0 %v2723
      %2740 = vmatpush.msra.mxu0 %v2722
      %2741 = vmatpush.msra.mxu0 %v2721
      %2742 = vmatmul.f32.gmra.mxu0 %v2699
      %v2743 = vpop.f32.mrf.mxu0
      %v2744 = vadd.f32 %v2725, %v2743
      %2745 = vdwg.mxu0
      %v2746 = vmax.f32 %v2719, %v2744
      %v2747 = vsub.f32 %v2719, %v2746
      %v2748 = vmul.f32 %v2747, 1.442695
      %v2749 = vpow.pop %v2748
      %v2750 = vsub.f32 %v2744, %v2746
      %v2751 = vmul.f32 %v2750, 1.442695
      %v2752 = vpow.pop %v2751
      %v2753 = vadd.f32 %v2749, %v2752
      %v2754 = vrcp.pop %v2753
      %v2755 = vmul.f32 %v2749, %v2754
      %2757 = vrot.lane.b32.xlu0 %v2755, 32
      %v2758 = vpop.permute.xlu0 %2757
      %2760 = vrot.lane.b32.xlu0 %v2755, 64
      %v2761 = vpop.permute.xlu0 %2760
      %2763 = vrot.lane.b32.xlu0 %v2755, 96
      %v2764 = vpop.permute.xlu0 %2763
      %v2766 = vsel %vm502, %v2755, %v2758
      %v2767 = vsel %vm428, %v2766, %v2761
      %v2768 = vsel %vm609, %v2767, %v2764
      %v2769 = vmul.f32 %v2752, %v2754
      %2771 = vrot.lane.b32.xlu0 %v2769, 32
      %v2772 = vpop.permute.xlu0 %2771
      %2774 = vrot.lane.b32.xlu0 %v2769, 64
      %v2775 = vpop.permute.xlu0 %2774
      %2777 = vrot.lane.b32.xlu0 %v2769, 96
      %v2778 = vpop.permute.xlu0 %2777
      %v2780 = vsel %vm502, %v2769, %v2772
      %v2781 = vsel %vm428, %v2780, %v2775
      %v2782 = vsel %vm609, %v2781, %v2778
      %v2783 = vperm.slane %v2768, 0
      %2785 = vrot.lane.b32.xlu0 %v2783, 32
      %v2786 = vpop.permute.xlu0 %2785
      %v2788 = vmul.f32 %v1690, %v2786
      %v2789 = vmul.f32 %v1691, %v2786
      %v2790 = vmul.f32 %v1692, %v2786
      %v2791 = vmul.f32 %v1693, %v2786
      %v2792 = vmul.f32 %v1694, %v2786
      %v2793 = vmul.f32 %v1695, %v2786
      %v2794 = vmul.f32 %v1696, %v2786
      %v2795 = vmul.f32 %v1697, %v2786
      %v2796 = vmul.f32 %v1698, %v2786
      %v2797 = vmul.f32 %v1699, %v2786
      %v2798 = vmul.f32 %v1700, %v2786
      %v2799 = vmul.f32 %v1701, %v2786
      %v2800 = vmul.f32 %v1702, %v2786
      %v2801 = vmul.f32 %v1703, %v2786
      %v2802 = vmul.f32 %v1704, %v2786
      %v2803 = vperm.slane %v2782, 0
      %v2804 = vmul.f32 %v2420, %v2803
      %v2805 = vmul.f32 %v2421, %v2803
      %v2806 = vmul.f32 %v2422, %v2803
      %v2807 = vmul.f32 %v2423, %v2803
      %v2808 = vmul.f32 %v2424, %v2803
      %v2809 = vmul.f32 %v2425, %v2803
      %v2810 = vmul.f32 %v2426, %v2803
      %v2811 = vmul.f32 %v2427, %v2803
      %v2820 = vrot.slane %v2804, 7
      %v2821 = vrot.slane %v2805, 7
      %v2822 = vrot.slane %v2806, 7
      %v2823 = vrot.slane %v2807, 7
      %v2824 = vrot.slane %v2808, 7
      %v2825 = vsel %vm2436, %v2820, %v2824
      %v2826 = vrot.slane %v2809, 7
      %v2827 = vsel %vm2436, %v2821, %v2826
      %v2828 = vrot.slane %v2810, 7
      %v2829 = vsel %vm2436, %v2822, %v2828
      %v2830 = vrot.slane %v2811, 7
      %v2831 = vsel %vm2436, %v2823, %v2830
      %2832 = vrot.lane.b32.xlu0 %v2820, 32
      %v2833 = vpop.permute.xlu0 %2832
      %2834 = vrot.lane.b32.xlu0 %v2821, 32
      %v2835 = vpop.permute.xlu0 %2834
      %2836 = vrot.lane.b32.xlu0 %v2822, 32
      %v2837 = vpop.permute.xlu0 %2836
      %2838 = vrot.lane.b32.xlu0 %v2823, 32
      %v2839 = vpop.permute.xlu0 %2838
      %2840 = vrot.lane.b32.xlu0 %v2825, 32
      %v2841 = vpop.permute.xlu0 %2840
      %2842 = vrot.lane.b32.xlu0 %v2827, 32
      %v2843 = vpop.permute.xlu0 %2842
      %2844 = vrot.lane.b32.xlu0 %v2829, 32
      %v2845 = vpop.permute.xlu0 %2844
      %2846 = vrot.lane.b32.xlu0 %v2831, 32
      %v2847 = vpop.permute.xlu0 %2846
      %2848 = vrot.lane.b32.xlu0 %v2824, 32
      %v2849 = vpop.permute.xlu0 %2848
      %2850 = vrot.lane.b32.xlu0 %v2826, 32
      %v2851 = vpop.permute.xlu0 %2850
      %2852 = vrot.lane.b32.xlu0 %v2828, 32
      %v2853 = vpop.permute.xlu0 %2852
      %2854 = vrot.lane.b32.xlu0 %v2830, 32
      %v2855 = vpop.permute.xlu0 %2854
      %v2856 = vsel %vm502, %v2833, %v2835
      %v2857 = vsel %vm502, %v2835, %v2837
      %v2858 = vsel %vm502, %v2837, %v2839
      %v2859 = vsel %vm502, %v2841, %v2843
      %v2860 = vsel %vm502, %v2843, %v2845
      %v2861 = vsel %vm502, %v2845, %v2847
      %v2862 = vsel %vm502, %v2849, %v2851
      %v2863 = vsel %vm502, %v2851, %v2853
      %v2864 = vsel %vm502, %v2853, %v2855
      %v2880 = vadd.f32 %v2788, %v2833
      %v2881 = vadd.f32 %v2789, %v2856
      %v2882 = vadd.f32 %v2790, %v2857
      %v2883 = vadd.f32 %v2791, %v2858
      %v2884 = vadd.f32 %v2792, %v2839
      %v2885 = vadd.f32 %v2793, %v2841
      %v2886 = vadd.f32 %v2794, %v2859
      %v2887 = vadd.f32 %v2795, %v2860
      %v2888 = vadd.f32 %v2796, %v2861
      %v2889 = vadd.f32 %v2797, %v2847
      %v2890 = vadd.f32 %v2798, %v2849
      %v2891 = vadd.f32 %v2799, %v2862
      %v2892 = vadd.f32 %v2800, %v2863
      %v2893 = vadd.f32 %v2801, %v2864
      %v2894 = vadd.f32 %v2802, %v2855
      %s2895 = scalar_lea.vmem %s2, 4
      %v2896 = vld [vmem:[%s2895] ss:$8 sm:$0xf]
      %v2898 = vperm.slane %v2896, 0
      %v2899 = vperm.slane %v2896, 1
      %v2900 = vperm.slane %v2896, 2
      %v2901 = vperm.slane %v2896, 3
      %2902 = vrot.lane.b32.xlu0 %v2898, 32
      %v2903 = vpop.permute.xlu0 %2902
      %2904 = vrot.lane.b32.xlu0 %v2899, 32
      %v2905 = vpop.permute.xlu0 %2904
      %2906 = vrot.lane.b32.xlu0 %v2900, 32
      %v2907 = vpop.permute.xlu0 %2906
      %2908 = vrot.lane.b32.xlu0 %v2901, 32
      %v2909 = vpop.permute.xlu0 %2908
      %v2910 = vsel %vm502, %v2903, %v2905
      %v2911 = vsel %vm502, %v2905, %v2907
      %v2912 = vsel %vm502, %v2907, %v2909
      %v2918 = vmul.f32 %v2880, %v2903
      %v2919 = vmul.f32 %v2881, %v2910
      %v2920 = vmul.f32 %v2882, %v2911
      %v2921 = vmul.f32 %v2883, %v2912
      %v2922 = vmul.f32 %v2884, %v2909
      %v2923 = vmul.f32 %v2885, %v2903
      %v2924 = vmul.f32 %v2886, %v2910
      %v2925 = vmul.f32 %v2887, %v2911
      %v2926 = vmul.f32 %v2888, %v2912
      %v2927 = vmul.f32 %v2889, %v2909
      %v2928 = vmul.f32 %v2890, %v2903
      %v2929 = vmul.f32 %v2891, %v2910
      %v2930 = vmul.f32 %v2892, %v2911
      %v2931 = vmul.f32 %v2893, %v2912
      %v2932 = vmul.f32 %v2894, %v2909
      %s2933 = scalar_lea.vmem %s2, 5
      %v2934 = vld [vmem:[%s2933] ss:$8 sm:$0xf]
      %v2936 = vperm.slane %v2934, 0
      %v2937 = vperm.slane %v2934, 1
      %v2938 = vperm.slane %v2934, 2
      %v2939 = vperm.slane %v2934, 3
      %2940 = vrot.lane.b32.xlu0 %v2936, 32
      %v2941 = vpop.permute.xlu0 %2940
      %2942 = vrot.lane.b32.xlu0 %v2937, 32
      %v2943 = vpop.permute.xlu0 %2942
      %2944 = vrot.lane.b32.xlu0 %v2938, 32
      %v2945 = vpop.permute.xlu0 %2944
      %2946 = vrot.lane.b32.xlu0 %v2939, 32
      %v2947 = vpop.permute.xlu0 %2946
      %v2948 = vsel %vm502, %v2941, %v2943
      %v2949 = vsel %vm502, %v2943, %v2945
      %v2950 = vsel %vm502, %v2945, %v2947
      %v2956 = vadd.f32 %v2918, %v2941
      %v2957 = vadd.f32 %v2919, %v2948
      %v2958 = vadd.f32 %v2920, %v2949
      %v2959 = vadd.f32 %v2921, %v2950
      %v2960 = vadd.f32 %v2922, %v2947
      %v2961 = vadd.f32 %v2923, %v2941
      %v2962 = vadd.f32 %v2924, %v2948
      %v2963 = vadd.f32 %v2925, %v2949
      %v2964 = vadd.f32 %v2926, %v2950
      %v2965 = vadd.f32 %v2927, %v2947
      %v2966 = vadd.f32 %v2928, %v2941
      %v2967 = vadd.f32 %v2929, %v2948
      %v2968 = vadd.f32 %v2930, %v2949
      %v2969 = vadd.f32 %v2931, %v2950
      %v2970 = vadd.f32 %v2932, %v2947
      %v2971 = vmax.f32 %v2956, 0.0
      %v2972 = vmax.f32 %v2957, 0.0
      %v2973 = vmax.f32 %v2958, 0.0
      %v2974 = vmax.f32 %v2959, 0.0
      %v2975 = vmax.f32 %v2960, 0.0
      %v2976 = vmax.f32 %v2961, 0.0
      %v2977 = vmax.f32 %v2962, 0.0
      %v2978 = vmax.f32 %v2963, 0.0
      %v2979 = vmax.f32 %v2964, 0.0
      %v2980 = vmax.f32 %v2965, 0.0
      %v2981 = vmax.f32 %v2966, 0.0
      %v2982 = vmax.f32 %v2967, 0.0
      %v2983 = vmax.f32 %v2968, 0.0
      %v2984 = vmax.f32 %v2969, 0.0
      %v2985 = vmax.f32 %v2970, 0.0
      %v3001 = vrot.slane %v2971, 1
      %v3002 = vrot.slane %v2976, 1
      %v3003 = vsel %vm840, %v3001, %v3002
      %v3004 = vrot.slane %v2972, 1
      %v3005 = vrot.slane %v2977, 1
      %v3006 = vsel %vm840, %v3004, %v3005
      %v3007 = vrot.slane %v2973, 1
      %v3008 = vrot.slane %v2978, 1
      %v3009 = vsel %vm840, %v3007, %v3008
      %v3010 = vrot.slane %v2974, 1
      %v3011 = vrot.slane %v2979, 1
      %v3012 = vsel %vm840, %v3010, %v3011
      %v3013 = vrot.slane %v2975, 1
      %v3014 = vrot.slane %v2980, 1
      %v3015 = vsel %vm840, %v3013, %v3014
      %v3016 = vrot.slane %v2981, 1
      %v3017 = vsel %vm840, %v3002, %v3016
      %v3018 = vrot.slane %v2982, 1
      %v3019 = vsel %vm840, %v3005, %v3018
      %v3020 = vrot.slane %v2983, 1
      %v3021 = vsel %vm840, %v3008, %v3020
      %v3022 = vrot.slane %v2984, 1
      %v3023 = vsel %vm840, %v3011, %v3022
      %v3024 = vrot.slane %v2985, 1
      %v3025 = vsel %vm840, %v3014, %v3024
      %3026 = vrot.lane.b32.xlu0 %v3003, 96
      %v3027 = vpop.permute.xlu0 %3026
      %3028 = vrot.lane.b32.xlu0 %v3006, 96
      %v3029 = vpop.permute.xlu0 %3028
      %3030 = vrot.lane.b32.xlu0 %v3009, 96
      %v3031 = vpop.permute.xlu0 %3030
      %3032 = vrot.lane.b32.xlu0 %v3012, 96
      %v3033 = vpop.permute.xlu0 %3032
      %3034 = vrot.lane.b32.xlu0 %v3015, 96
      %v3035 = vpop.permute.xlu0 %3034
      %3036 = vrot.lane.b32.xlu0 %v3017, 96
      %v3037 = vpop.permute.xlu0 %3036
      %3038 = vrot.lane.b32.xlu0 %v3019, 96
      %v3039 = vpop.permute.xlu0 %3038
      %3040 = vrot.lane.b32.xlu0 %v3021, 96
      %v3041 = vpop.permute.xlu0 %3040
      %3042 = vrot.lane.b32.xlu0 %v3023, 96
      %v3043 = vpop.permute.xlu0 %3042
      %3044 = vrot.lane.b32.xlu0 %v3025, 96
      %v3045 = vpop.permute.xlu0 %3044
      %v3046 = vsel %vm609, %v3027, %v3029
      %v3047 = vsel %vm609, %v3029, %v3031
      %v3048 = vsel %vm609, %v3031, %v3033
      %v3049 = vsel %vm609, %v3033, %v3035
      %v3050 = vsel %vm609, %v3037, %v3039
      %v3051 = vsel %vm609, %v3039, %v3041
      %v3052 = vsel %vm609, %v3041, %v3043
      %v3053 = vsel %vm609, %v3043, %v3045
      %3062 = vst [vmem:[%s359] sm:$0xff] %v3046
      %3063 = vst [vmem:[%s359 + $0x8] sm:$0xff] %v3047
      %3064 = vst [vmem:[%s359 + $0x10] sm:$0xff] %v3048
      %3065 = vst [vmem:[%s359 + $0x18] sm:$0xff] %v3049
      %3066 = vst [vmem:[%s359 + $0x20] sm:$0xff] %v3050
      %3067 = vst [vmem:[%s359 + $0x28] sm:$0xff] %v3051
      %3068 = vst [vmem:[%s359 + $0x30] sm:$0xff] %v3052
      %3069 = vst [vmem:[%s359 + $0x38] sm:$0xff] %v3053
      %p3070 = scmp.lt.s32.totalorder %s21, 1
      %s3071 = scalar_select %p3070, %s21, 1
      %s3072 = smul.addr %s3071, 8
      %s3073 = smul.addr %s3072, 8
      %s3074 = scalar_lea.vmem %s10, %s3073
      // Predicated region
      $region61: #{sk_bottleneck_forward.4} parent=59 // pred_check
        %p3075 = pneg %p254
      $region62: #{sk_bottleneck_forward.4} parent=59 // pred_check_branch
        %3077 = sbr.rel (%p3075) target = $region64
      $region63: #{sk_bottleneck_forward.4} parent=59 // pred_region
        _
      $region64: #{sk_bottleneck_forward.4} parent=59 // pred_fallthru
        _
    $region60: #{sk_bottleneck_forward.4} parent=5 // pred_fallthru
      _
    %p3078 = scmp.le.s32.totalorder 2, %s16
    // Predicated region
    $region65: #{sk_bottleneck_forward.4} parent=5 // pred_check
      %p3079 = pneg %p3078
    $region66: #{sk_bottleneck_forward.4} parent=5 // pred_check_branch
      %3081 = sbr.rel (%p3079) target = $region68
    $region67: #{sk_bottleneck_forward.4} parent=5 // pred_region
      %s3082 = ssub.s32 %s16, 2
      // Predicated region
      $region69: #{sk_bottleneck_forward.4} parent=67 // pred_check
        %p3083 = pneg %p260
      $region70: #{sk_bottleneck_forward.4} parent=67 // pred_check_branch
        %3085 = sbr.rel (%p3083) target = $region72
      $region71: #{sk_bottleneck_forward.4} parent=67 // pred_region
        %p3086 = scmp.lt.s32.totalorder %s22, 1
        %s3087 = scalar_select %p3086, %s22, 1
        %s3088 = smul.addr %s3087, 8
        %s3089 = smul.addr %s3088, 8
        %s3090 = scalar_lea.vmem %s10, %s3089
      $region72: #{sk_bottleneck_forward.4} parent=67 // pred_fallthru
        _
    $region68: #{sk_bottleneck_forward.4} parent=5 // pred_fallthru
      _
  $region6: #{sk_bottleneck_forward.4} parent=0 // loop_footer
    %s20 = sadd.s32 1, %s16
  $region7: #{sk_bottleneck_forward.4} parent=0 // loop_footer_branch
    %15 = sbr.rel target = $region3
  $region8: #{sk_bottleneck_forward.4} parent=0 // loop_exit
    _

</llo_original>
